<compile_context>
chip_gen: v7x
topology: tpu7x:2x2x1
jax: 0.10.0
libtpu: 0.0.40
codegen_flags: <defaults>
</compile_context>

<pallas_src>
import numpy as np

import jax
import jax.numpy as jnp
from jax.experimental import pallas as pl
from jax.experimental.pallas import tpu as pltpu

# ----------------------------- configuration -------------------------------
NUM_VAR = 5
NUM_LATENT = 4
NUM_NEURONS = [8, 4]                  # reversed in-place in the module -> [4, 8]
NN_REV = list(reversed(NUM_NEURONS))  # [4, 8]
BATCH = 2
DIMS = [28, 14, 7, 3, 1]
D0 = DIMS[2]                          # 7 (starting spatial size)
WV = DIMS[0]                          # 28 (output spatial size == class block width)
BN_EPS = 1e-5
PK = 128                              # lane-packed activation width (padded to one lane tile)


# --------------------- structural (param-independent) matrices --------------
def _shift_mat(n, d):
    """S[i, i+d] = 1 (zero-padded shift: (S @ Z)[i] = Z[i+d])."""
    m = np.zeros((n, n), np.float32)
    for i in range(n):
        j = i + d
        if 0 <= j < n:
            m[i, j] = 1.0
    return m


def _up_mat(n):
    """U[(2n, n)]: (U @ Z)[i] = Z[i // 2]  (nearest 2x upsample)."""
    m = np.zeros((2 * n, n), np.float32)
    for i in range(2 * n):
        m[i, i // 2] = 1.0
    return m


def _bdiag(m):
    return np.kron(np.eye(BATCH, dtype=np.float32), m).astype(np.float32)


# Row operators (act on batch-stacked rows b*H + y), one per kernel row ky.
RU1 = np.stack([_bdiag(_shift_mat(D0, k - 1)) for k in range(3)])                         # (3,14,14)
RU2 = np.stack([_bdiag(_shift_mat(2 * D0, k - 1) @ _up_mat(D0)) for k in range(3)])       # (3,28,14)
RU3 = np.stack([_bdiag(_shift_mat(4 * D0, k - 1) @ _up_mat(2 * D0)) for k in range(3)])   # (3,56,28)
# Column operators (right-multipliers), one per kernel col kx.
SW1 = np.stack([_shift_mat(D0, k - 1).T for k in range(3)]).astype(np.float32)                     # (3,7,7)
SW2 = np.stack([_up_mat(D0).T @ _shift_mat(2 * D0, k - 1).T for k in range(3)]).astype(np.float32)  # (3,7,14)
SW3 = np.stack([_up_mat(2 * D0).T @ _shift_mat(4 * D0, k - 1).T for k in range(3)]).astype(np.float32)  # (3,14,28)
# "in-bounds tap" maps used to push the BN additive term through the zero-padded conv.
SO2 = np.stack([np.stack([_shift_mat(2 * D0, ky - 1) @ np.ones((2 * D0, 2 * D0), np.float32)
                          @ _shift_mat(2 * D0, kx - 1).T for kx in range(3)])
                for ky in range(3)]).astype(np.float32)                                   # (3,3,14,14)
SO3 = np.stack([np.stack([_shift_mat(4 * D0, ky - 1) @ np.ones((4 * D0, 4 * D0), np.float32)
                          @ _shift_mat(4 * D0, kx - 1).T for kx in range(3)])
                for ky in range(3)]).astype(np.float32)                                   # (3,3,28,28)

# 0/1 helpers for the packed softmax (exact in any matmul precision).
SUMT = np.tile(np.eye(WV, dtype=np.float32), (NUM_VAR, 1))     # (140, 28): sum over class blocks
BCAST = np.ascontiguousarray(SUMT.T)                           # (28, 140): broadcast to class blocks


# ------------------------------ fused Pallas kernel --------------------------
def _decoder_kernel(xrow_ref, u_ref, wrow_ref, b0p_ref,
                    ru1_ref, m1_ref, bm1_ref,
                    ru2_ref, m2_ref, bm2_ref,
                    ru3_ref, m3_ref, bm3_ref,
                    bcast_ref, sumt_ref,
                    probs_ref, z_ref):
    f32 = jnp.float32

    def dot(a, b):
        return jnp.dot(a, b, preferred_element_type=f32)

    # ---- layers[0]: Linear(num_latent -> 4*7*7) as ONE matmul, lane-packed (B*7, 128),
    #      valid columns are c*7 + x, padding columns are exactly zero. ----
    y = dot(xrow_ref[...], wrow_ref[...]) + b0p_ref[...]

    # ---- conv block (BN / 2x upsample folded into the constants):
    #        out = bias + [RU0@Z | RU1@Z | RU2@Z] @ M_block      (one accumulation dot) ----
    def conv_block(z, ru_ref, m_ref, bm_ref, relu):
        taps = [dot(ru_ref[k], z) for k in range(3)]          # 3 row-operator dots, width 128
        t = jnp.concatenate(taps, axis=1)                     # 128-aligned lane concat -> K=384
        out = bm_ref[...] + dot(t, m_ref[...])
        return jnp.maximum(out, 0.0) if relu else out

    y = conv_block(y, ru1_ref, m1_ref, bm1_ref, True)         # ConvT(4->4)+ReLU          @ 7x7
    y = conv_block(y, ru2_ref, m2_ref, bm2_ref, True)         # up+BN1+ConvT(4->8)+ReLU   @14x14
    logits = conv_block(y, ru3_ref, m3_ref, bm3_ref, False)   # up+BN2+Conv(8->5)         @28x28
    # logits: (B*28, 5*28) = (56, 140), class v occupies lanes [v*28, (v+1)*28)

    # ---- softmax over the 5 class blocks, kept lane-packed ----
    W, V = WV, NUM_VAR
    m0 = logits[:, 0:W]
    for v in range(1, V):
        m0 = jnp.maximum(m0, logits[:, v * W:(v + 1) * W])
    e = jnp.exp(logits - dot(m0, bcast_ref[...]))             # per-pixel max broadcast (exact 0/1 matmul)
    s0 = dot(e, sumt_ref[...])                                # per-pixel denominator (56, 28)
    inv = pl.reciprocal(s0, approx=True)                      # EUP slot
    inv = inv * (2.0 - s0 * inv)                              # one Newton step -> ~f32 accuracy
    probs = e * dot(inv, bcast_ref[...])
    probs_ref[...] = probs                                    # single lane-dense (56, 140) store

    # ---- inverse-CDF categorical sample (V-1 comparisons; last class is the else-branch) ----
    u = u_ref[...]                                            # (56, 28)
    cdf = probs[:, 0:W]
    idx = jnp.where(u >= cdf, 1.0, 0.0)
    for v in range(1, V - 1):
        cdf = cdf + probs[:, v * W:(v + 1) * W]
        idx = idx + jnp.where(u >= cdf, 1.0, 0.0)
    z_ref[...] = idx / 5.0 + 0.1


# --------------------------- constant folding (wrapper) ----------------------
def _fold_params(params):
    """Fold Linear repack, ConvT->Conv weight flip, BN(eval), 2x upsample and the channel
    lane-packing/padding into the constant matrices consumed by the fused kernel."""
    f32 = jnp.float32
    L, B, D = NUM_LATENT, BATCH, D0
    C0, C1, C2, V = NUM_LATENT, NN_REV[0], NN_REV[1], NUM_VAR   # 4, 4, 8, 5

    # Linear: y0[b*7+y, c*7+x] = (x @ w0.T + b0)[b, c, y, x], columns padded to 128.
    w0r = params['w0'].reshape(C0, D, D, L)                                   # [c, y, x, l]
    wrow = jnp.transpose(w0r, (1, 3, 0, 2)).reshape(D * L, C0 * D)            # rows (y,l), cols (c,x)
    wrow = jnp.pad(wrow, ((0, 0), (0, PK - C0 * D)))                          # (28, 128)
    b0r = jnp.transpose(params['b0'].reshape(C0, D, D), (1, 0, 2)).reshape(D, C0 * D)
    b0p = jnp.pad(jnp.tile(b0r, (B, 1)), ((0, 0), (0, PK - C0 * D)))          # (14, 128)

    def block_m(Wc, scale, SW, c_in, w_in, c_out, w_out, n_out):
        # M_block[k*128 + (c*w_in + a), o*w_out + b] = sum_kx Wc[o,c,k,kx]*scale[c]*SW[kx,a,b]
        m = jnp.einsum('ocyx,c,xab->ycaob', Wc, scale, jnp.asarray(SW))
        m = m.reshape(3, c_in * w_in, c_out * w_out)
        m = jnp.pad(m, ((0, 0), (0, PK - c_in * w_in), (0, n_out - c_out * w_out)))
        return m.reshape(3 * PK, n_out)

    # conv1 = ConvT(4->4) as same-padded conv (no preceding BN / upsample)
    W1 = jnp.flip(jnp.transpose(params['ct1_w'], (1, 0, 2, 3)), axis=(2, 3))  # (4,4,3,3)
    m1 = block_m(W1, jnp.ones((C0,), f32), SW1, C0, D, C1, D, PK)             # (384, 128)
    bm1 = jnp.tile(jnp.repeat(params['ct1_b'], D)[None, :], (B * D, 1))       # (14, 28)
    bm1 = jnp.pad(bm1, ((0, 0), (0, PK - C1 * D)))                            # (14, 128)

    # BN1(eval) + upsample(7->14) folded into conv2 = ConvT(4->8)
    s1 = params['bn1_g'] / jnp.sqrt(params['bn1_v'] + BN_EPS)
    t1 = params['bn1_b'] - params['bn1_m'] * s1
    W2 = jnp.flip(jnp.transpose(params['ct2_w'], (1, 0, 2, 3)), axis=(2, 3))  # (8,4,3,3)
    m2 = block_m(W2, s1, SW2, C1, D, C2, 2 * D, PK)                           # (384, 128)
    bm2n = params['ct2_b'][:, None, None] + jnp.einsum('ocyx,c,yxab->oab', W2, t1, jnp.asarray(SO2))
    bm2 = jnp.transpose(jnp.tile(bm2n, (1, B, 1)), (1, 0, 2)).reshape(2 * B * D, C2 * 2 * D)
    bm2 = jnp.pad(bm2, ((0, 0), (0, PK - C2 * 2 * D)))                        # (28, 128)

    # BN2(eval) + upsample(14->28) folded into the probs conv (8->5)
    s2 = params['bn2_g'] / jnp.sqrt(params['bn2_v'] + BN_EPS)
    t2 = params['bn2_b'] - params['bn2_m'] * s2
    Wp = params['probs_w']                                                    # (5,8,3,3)
    m3 = block_m(Wp, s2, SW3, C2, 2 * D, V, 4 * D, V * 4 * D)                 # (384, 140)
    bm3n = params['probs_b'][:, None, None] + jnp.einsum('ocyx,c,yxab->oab', Wp, t2, jnp.asarray(SO3))
    bm3 = jnp.transpose(jnp.tile(bm3n, (1, B, 1)), (1, 0, 2)).reshape(4 * B * D, V * 4 * D)  # (56,140)

    return (wrow, b0p,
            jnp.asarray(RU1), m1, bm1,
            jnp.asarray(RU2), m2, bm2,
            jnp.asarray(RU3), m3, bm3,
            jnp.asarray(BCAST), jnp.asarray(SUMT))


@jax.jit
def decoder_forward(params, x, u):
    B, H, V = BATCH, DIMS[0], NUM_VAR
    consts = _fold_params(params)
    # Row-lift x so the Linear is a single in-kernel matmul producing the packed layout:
    #   xrow[b*7+y, y'*L+l] = x[b, l] * delta(y, y')
    eye = jnp.eye(D0, dtype=jnp.float32)
    xrow = jnp.einsum('bl,yp->bypl', x.astype(jnp.float32), eye).reshape(B * D0, D0 * NUM_LATENT)

    vmem = pl.BlockSpec(memory_space=pltpu.MemorySpace.VMEM)
    # Single program (no grid): whole problem fits comfortably in VMEM; per the review a
    # batch grid (v7x megacore) only pays off for larger BATCH.
    probs_packed, z_flat = pl.pallas_call(
        _decoder_kernel,
        out_shape=(jax.ShapeDtypeStruct((B * H, V * H), jnp.float32),
                   jax.ShapeDtypeStruct((B * H, H), jnp.float32)),
        in_specs=[vmem] * 15,
        out_specs=(vmem, vmem),
    )(xrow, u.astype(jnp.float32), *consts)

    # tiny final layout permutes kept outside the kernel (pure layout plumbing)
    probs = jnp.transpose(probs_packed.reshape(B, H, V, H), (0, 3, 1, 2))   # (B, W, H, V)
    z = jnp.transpose(z_flat.reshape(B, H, H), (0, 2, 1))                   # (B, W, H)
    return z, probs


# ------------------------- plain-JAX reference (for checking) ----------------
def _reference_forward(params, x, u):
    B = x.shape[0]

    def conv3x3(xn, w, b):
        Hh, Ww = xn.shape[2], xn.shape[3]
        xp = jnp.pad(xn, ((0, 0), (0, 0), (1, 1), (1, 1)))
        acc = jnp.zeros((xn.shape[0], w.shape[0], Hh, Ww), jnp.float32)
        for ky in range(3):
            for kx in range(3):
                acc = acc + jnp.einsum('oc,bchw->bohw', w[:, :, ky, kx],
                                       xp[:, :, ky:ky + Hh, kx:kx + Ww])
        return acc + b[None, :, None, None]

    def bn(xn, g, bt, m, v):
        s = g / jnp.sqrt(v + BN_EPS)
        t = bt - m * s
        return xn * s[None, :, None, None] + t[None, :, None, None]

    def up2(xn):
        return jnp.repeat(jnp.repeat(xn, 2, axis=2), 2, axis=3)

    W1 = jnp.flip(jnp.transpose(params['ct1_w'], (1, 0, 2, 3)), axis=(2, 3))
    W2 = jnp.flip(jnp.transpose(params['ct2_w'], (1, 0, 2, 3)), axis=(2, 3))
    h = (x @ params['w0'].T + params['b0']).reshape(B, NUM_LATENT, D0, D0)
    h = jax.nn.relu(conv3x3(h, W1, params['ct1_b']))
    h = bn(up2(h), params['bn1_g'], params['bn1_b'], params['bn1_m'], params['bn1_v'])
    h = jax.nn.relu(conv3x3(h, W2, params['ct2_b']))
    h = bn(up2(h), params['bn2_g'], params['bn2_b'], params['bn2_m'], params['bn2_v'])
    logits = conv3x3(h, params['probs_w'], params['probs_b'])              # (B,5,28,28)
    p = jax.nn.softmax(logits, axis=1)
    probs = jnp.transpose(p, (0, 3, 2, 1))
    u_b = u.reshape(B, DIMS[0], DIMS[0])
    cdf = jnp.cumsum(p, axis=1)
    idx = jnp.sum((u_b[:, None] >= cdf[:, :NUM_VAR - 1]).astype(jnp.float32), axis=1)
    z = jnp.transpose(idx / 5.0 + 0.1, (0, 2, 1))
    return z, probs


# ----------------------------------- init ------------------------------------
def init_params(key):
    ks = jax.random.split(key, 20)
    n = jax.random.normal
    uni = jax.random.uniform
    return {
        'w0': 0.3 * n(ks[0], (D0 * D0 * NUM_LATENT, NUM_LATENT), jnp.float32),
        'b0': 0.05 * n(ks[1], (D0 * D0 * NUM_LATENT,), jnp.float32),
        'ct1_w': 0.2 * n(ks[2], (NUM_LATENT, NN_REV[0], 3, 3), jnp.float32),
        'ct1_b': 0.05 * n(ks[3], (NN_REV[0],), jnp.float32),
        'bn1_g': 1.0 + 0.1 * n(ks[4], (NN_REV[0],), jnp.float32),
        'bn1_b': 0.1 * n(ks[5], (NN_REV[0],), jnp.float32),
        'bn1_m': 0.05 * n(ks[6], (NN_REV[0],), jnp.float32),
        'bn1_v': uni(ks[7], (NN_REV[0],), jnp.float32, 0.5, 1.5),
        'ct2_w': 0.2 * n(ks[8], (NN_REV[0], NN_REV[1], 3, 3), jnp.float32),
        'ct2_b': 0.05 * n(ks[9], (NN_REV[1],), jnp.float32),
        'bn2_g': 1.0 + 0.1 * n(ks[10], (NN_REV[1],), jnp.float32),
        'bn2_b': 0.1 * n(ks[11], (NN_REV[1],), jnp.float32),
        'bn2_m': 0.05 * n(ks[12], (NN_REV[1],), jnp.float32),
        'bn2_v': uni(ks[13], (NN_REV[1],), jnp.float32, 0.5, 1.5),
        'probs_w': 0.2 * n(ks[14], (NUM_VAR, NN_REV[1], 3, 3), jnp.float32),
        'probs_b': 0.05 * n(ks[15], (NUM_VAR,), jnp.float32),
    }


if __name__ == "__main__":
    key = jax.random.PRNGKey(0)
    pkey, xkey, ukey = jax.random.split(key, 3)
    params = init_params(pkey)
    x = jax.random.normal(xkey, (BATCH, NUM_LATENT), jnp.float32)
    # TODO(synk): torch.distributions.Categorical RNG has no in-kernel equivalent; uniforms
    # are drawn here and consumed by the in-kernel inverse-CDF (distributional equivalence only).
    u = jax.random.uniform(ukey, (BATCH * DIMS[0], DIMS[0]), jnp.float32)

    z, probs = decoder_forward(params, x, u)
    jax.block_until_ready((z, probs))

    # cross-check against a plain-JAX reference of the same module
    z_ref, probs_ref = jax.jit(_reference_forward)(params, x, u)
    jax.block_until_ready((z_ref, probs_ref))

    assert z.shape == (BATCH, DIMS[0], DIMS[0])
    assert probs.shape == (BATCH, DIMS[0], DIMS[0], NUM_VAR)
    assert bool(jnp.all(jnp.isfinite(z))) and bool(jnp.all(jnp.isfinite(probs)))
    assert bool(jnp.allclose(probs, probs_ref, atol=3e-4, rtol=3e-4))
    allowed = jnp.array([0.1, 0.3, 0.5, 0.7, 0.9], jnp.float32)
    assert bool(jnp.all(jnp.min(jnp.abs(z[..., None] - allowed), axis=-1) < 1e-5))
    # sampling should agree with the reference except (rarely) at exact CDF boundaries
    assert float(jnp.mean((jnp.abs(z - z_ref) > 1e-6).astype(jnp.float32))) < 0.01

    print("KERNEL_OK")
</pallas_src>

<mosaic_0001>
module attributes {stable_mosaic.version = 11 : i64} {
  func.func @_decoder_kernel(%arg0: memref<14x28xf32, #tpu.memory_space<vmem>>, %arg1: memref<56x28xf32, #tpu.memory_space<vmem>>, %arg2: memref<28x128xf32, #tpu.memory_space<vmem>>, %arg3: memref<14x128xf32, #tpu.memory_space<vmem>>, %arg4: memref<3x14x14xf32, #tpu.memory_space<vmem>>, %arg5: memref<384x128xf32, #tpu.memory_space<vmem>>, %arg6: memref<14x128xf32, #tpu.memory_space<vmem>>, %arg7: memref<3x28x14xf32, #tpu.memory_space<vmem>>, %arg8: memref<384x128xf32, #tpu.memory_space<vmem>>, %arg9: memref<28x128xf32, #tpu.memory_space<vmem>>, %arg10: memref<3x56x28xf32, #tpu.memory_space<vmem>>, %arg11: memref<384x140xf32, #tpu.memory_space<vmem>>, %arg12: memref<56x140xf32, #tpu.memory_space<vmem>>, %arg13: memref<28x140xf32, #tpu.memory_space<vmem>>, %arg14: memref<140x28xf32, #tpu.memory_space<vmem>>, %arg15: memref<56x140xf32, #tpu.memory_space<vmem>>, %arg16: memref<56x28xf32, #tpu.memory_space<vmem>>) attributes {dimension_semantics = [], scalar_prefetch = 0 : i64, scratch_operands = 0 : i64, tpu.core_type = #tpu.core_type<tc>} {
    %c0 = arith.constant 0 : index
    %c0_0 = arith.constant 0 : index
    %0 = vector.load %arg0[%c0, %c0_0] : memref<14x28xf32, #tpu.memory_space<vmem>>, vector<14x28xf32>
    %c0_1 = arith.constant 0 : index
    %c0_2 = arith.constant 0 : index
    %1 = vector.load %arg2[%c0_1, %c0_2] : memref<28x128xf32, #tpu.memory_space<vmem>>, vector<28x128xf32>
    %cst = arith.constant dense<0.000000e+00> : vector<14x128xf32>
    %2 = tpu.matmul %0, %1, %cst {dimension_numbers = #tpu.dot_dimension_numbers<[1], [0], [0], [1], [0, 0, 1, 1], [], []>} : vector<14x28xf32>, vector<28x128xf32>, vector<14x128xf32> -> vector<14x128xf32>
    %c0_3 = arith.constant 0 : index
    %c0_4 = arith.constant 0 : index
    %3 = vector.load %arg3[%c0_3, %c0_4] : memref<14x128xf32, #tpu.memory_space<vmem>>, vector<14x128xf32>
    %4 = arith.addf %2, %3 : vector<14x128xf32>
    %c0_5 = arith.constant 0 : index
    %c0_6 = arith.constant 0 : index
    %c0_7 = arith.constant 0 : index
    %5 = vector.load %arg4[%c0_5, %c0_6, %c0_7] : memref<3x14x14xf32, #tpu.memory_space<vmem>>, vector<1x14x14xf32>
    %6 = vector.shape_cast %5 : vector<1x14x14xf32> to vector<14x14xf32>
    %cst_8 = arith.constant dense<0.000000e+00> : vector<14x128xf32>
    %7 = tpu.matmul %6, %4, %cst_8 {dimension_numbers = #tpu.dot_dimension_numbers<[1], [0], [0], [1], [0, 0, 1, 1], [], []>} : vector<14x14xf32>, vector<14x128xf32>, vector<14x128xf32> -> vector<14x128xf32>
    %c1 = arith.constant 1 : index
    %c0_9 = arith.constant 0 : index
    %c0_10 = arith.constant 0 : index
    %8 = vector.load %arg4[%c1, %c0_9, %c0_10] : memref<3x14x14xf32, #tpu.memory_space<vmem>>, vector<1x14x14xf32>
    %9 = vector.shape_cast %8 : vector<1x14x14xf32> to vector<14x14xf32>
    %cst_11 = arith.constant dense<0.000000e+00> : vector<14x128xf32>
    %10 = tpu.matmul %9, %4, %cst_11 {dimension_numbers = #tpu.dot_dimension_numbers<[1], [0], [0], [1], [0, 0, 1, 1], [], []>} : vector<14x14xf32>, vector<14x128xf32>, vector<14x128xf32> -> vector<14x128xf32>
    %c2 = arith.constant 2 : index
    %c0_12 = arith.constant 0 : index
    %c0_13 = arith.constant 0 : index
    %11 = vector.load %arg4[%c2, %c0_12, %c0_13] : memref<3x14x14xf32, #tpu.memory_space<vmem>>, vector<1x14x14xf32>
    %12 = vector.shape_cast %11 : vector<1x14x14xf32> to vector<14x14xf32>
    %cst_14 = arith.constant dense<0.000000e+00> : vector<14x128xf32>
    %13 = tpu.matmul %12, %4, %cst_14 {dimension_numbers = #tpu.dot_dimension_numbers<[1], [0], [0], [1], [0, 0, 1, 1], [], []>} : vector<14x14xf32>, vector<14x128xf32>, vector<14x128xf32> -> vector<14x128xf32>
    %14 = tpu.concatenate %7, %10, %13 in 1 : vector<14x128xf32>, vector<14x128xf32>, vector<14x128xf32> -> vector<14x384xf32>
    %c0_15 = arith.constant 0 : index
    %c0_16 = arith.constant 0 : index
    %15 = vector.load %arg6[%c0_15, %c0_16] : memref<14x128xf32, #tpu.memory_space<vmem>>, vector<14x128xf32>
    %c0_17 = arith.constant 0 : index
    %c0_18 = arith.constant 0 : index
    %16 = vector.load %arg5[%c0_17, %c0_18] : memref<384x128xf32, #tpu.memory_space<vmem>>, vector<384x128xf32>
    %cst_19 = arith.constant dense<0.000000e+00> : vector<14x128xf32>
    %17 = tpu.matmul %14, %16, %cst_19 {dimension_numbers = #tpu.dot_dimension_numbers<[1], [0], [0], [1], [0, 0, 1, 1], [], []>} : vector<14x384xf32>, vector<384x128xf32>, vector<14x128xf32> -> vector<14x128xf32>
    %18 = arith.addf %15, %17 : vector<14x128xf32>
    %cst_20 = arith.constant 0.000000e+00 : f32
    %19 = vector.broadcast %cst_20 : f32 to vector<14x128xf32>
    %20 = arith.maximumf %18, %19 : vector<14x128xf32>
    %c0_21 = arith.constant 0 : index
    %c0_22 = arith.constant 0 : index
    %c0_23 = arith.constant 0 : index
    %21 = vector.load %arg7[%c0_21, %c0_22, %c0_23] : memref<3x28x14xf32, #tpu.memory_space<vmem>>, vector<1x28x14xf32>
    %22 = vector.shape_cast %21 : vector<1x28x14xf32> to vector<28x14xf32>
    %cst_24 = arith.constant dense<0.000000e+00> : vector<28x128xf32>
    %23 = tpu.matmul %22, %20, %cst_24 {dimension_numbers = #tpu.dot_dimension_numbers<[1], [0], [0], [1], [0, 0, 1, 1], [], []>} : vector<28x14xf32>, vector<14x128xf32>, vector<28x128xf32> -> vector<28x128xf32>
    %c1_25 = arith.constant 1 : index
    %c0_26 = arith.constant 0 : index
    %c0_27 = arith.constant 0 : index
    %24 = vector.load %arg7[%c1_25, %c0_26, %c0_27] : memref<3x28x14xf32, #tpu.memory_space<vmem>>, vector<1x28x14xf32>
    %25 = vector.shape_cast %24 : vector<1x28x14xf32> to vector<28x14xf32>
    %cst_28 = arith.constant dense<0.000000e+00> : vector<28x128xf32>
    %26 = tpu.matmul %25, %20, %cst_28 {dimension_numbers = #tpu.dot_dimension_numbers<[1], [0], [0], [1], [0, 0, 1, 1], [], []>} : vector<28x14xf32>, vector<14x128xf32>, vector<28x128xf32> -> vector<28x128xf32>
    %c2_29 = arith.constant 2 : index
    %c0_30 = arith.constant 0 : index
    %c0_31 = arith.constant 0 : index
    %27 = vector.load %arg7[%c2_29, %c0_30, %c0_31] : memref<3x28x14xf32, #tpu.memory_space<vmem>>, vector<1x28x14xf32>
    %28 = vector.shape_cast %27 : vector<1x28x14xf32> to vector<28x14xf32>
    %cst_32 = arith.constant dense<0.000000e+00> : vector<28x128xf32>
    %29 = tpu.matmul %28, %20, %cst_32 {dimension_numbers = #tpu.dot_dimension_numbers<[1], [0], [0], [1], [0, 0, 1, 1], [], []>} : vector<28x14xf32>, vector<14x128xf32>, vector<28x128xf32> -> vector<28x128xf32>
    %30 = tpu.concatenate %23, %26, %29 in 1 : vector<28x128xf32>, vector<28x128xf32>, vector<28x128xf32> -> vector<28x384xf32>
    %c0_33 = arith.constant 0 : index
    %c0_34 = arith.constant 0 : index
    %31 = vector.load %arg9[%c0_33, %c0_34] : memref<28x128xf32, #tpu.memory_space<vmem>>, vector<28x128xf32>
    %c0_35 = arith.constant 0 : index
    %c0_36 = arith.constant 0 : index
    %32 = vector.load %arg8[%c0_35, %c0_36] : memref<384x128xf32, #tpu.memory_space<vmem>>, vector<384x128xf32>
    %cst_37 = arith.constant dense<0.000000e+00> : vector<28x128xf32>
    %33 = tpu.matmul %30, %32, %cst_37 {dimension_numbers = #tpu.dot_dimension_numbers<[1], [0], [0], [1], [0, 0, 1, 1], [], []>} : vector<28x384xf32>, vector<384x128xf32>, vector<28x128xf32> -> vector<28x128xf32>
    %34 = arith.addf %31, %33 : vector<28x128xf32>
    %cst_38 = arith.constant 0.000000e+00 : f32
    %35 = vector.broadcast %cst_38 : f32 to vector<28x128xf32>
    %36 = arith.maximumf %34, %35 : vector<28x128xf32>
    %c0_39 = arith.constant 0 : index
    %c0_40 = arith.constant 0 : index
    %c0_41 = arith.constant 0 : index
    %37 = vector.load %arg10[%c0_39, %c0_40, %c0_41] : memref<3x56x28xf32, #tpu.memory_space<vmem>>, vector<1x56x28xf32>
    %38 = vector.shape_cast %37 : vector<1x56x28xf32> to vector<56x28xf32>
    %cst_42 = arith.constant dense<0.000000e+00> : vector<56x128xf32>
    %39 = tpu.matmul %38, %36, %cst_42 {dimension_numbers = #tpu.dot_dimension_numbers<[1], [0], [0], [1], [0, 0, 1, 1], [], []>} : vector<56x28xf32>, vector<28x128xf32>, vector<56x128xf32> -> vector<56x128xf32>
    %c1_43 = arith.constant 1 : index
    %c0_44 = arith.constant 0 : index
    %c0_45 = arith.constant 0 : index
    %40 = vector.load %arg10[%c1_43, %c0_44, %c0_45] : memref<3x56x28xf32, #tpu.memory_space<vmem>>, vector<1x56x28xf32>
    %41 = vector.shape_cast %40 : vector<1x56x28xf32> to vector<56x28xf32>
    %cst_46 = arith.constant dense<0.000000e+00> : vector<56x128xf32>
    %42 = tpu.matmul %41, %36, %cst_46 {dimension_numbers = #tpu.dot_dimension_numbers<[1], [0], [0], [1], [0, 0, 1, 1], [], []>} : vector<56x28xf32>, vector<28x128xf32>, vector<56x128xf32> -> vector<56x128xf32>
    %c2_47 = arith.constant 2 : index
    %c0_48 = arith.constant 0 : index
    %c0_49 = arith.constant 0 : index
    %43 = vector.load %arg10[%c2_47, %c0_48, %c0_49] : memref<3x56x28xf32, #tpu.memory_space<vmem>>, vector<1x56x28xf32>
    %44 = vector.shape_cast %43 : vector<1x56x28xf32> to vector<56x28xf32>
    %cst_50 = arith.constant dense<0.000000e+00> : vector<56x128xf32>
    %45 = tpu.matmul %44, %36, %cst_50 {dimension_numbers = #tpu.dot_dimension_numbers<[1], [0], [0], [1], [0, 0, 1, 1], [], []>} : vector<56x28xf32>, vector<28x128xf32>, vector<56x128xf32> -> vector<56x128xf32>
    %46 = tpu.concatenate %39, %42, %45 in 1 : vector<56x128xf32>, vector<56x128xf32>, vector<56x128xf32> -> vector<56x384xf32>
    %c0_51 = arith.constant 0 : index
    %c0_52 = arith.constant 0 : index
    %47 = vector.load %arg12[%c0_51, %c0_52] : memref<56x140xf32, #tpu.memory_space<vmem>>, vector<56x140xf32>
    %c0_53 = arith.constant 0 : index
    %c0_54 = arith.constant 0 : index
    %48 = vector.load %arg11[%c0_53, %c0_54] : memref<384x140xf32, #tpu.memory_space<vmem>>, vector<384x140xf32>
    %cst_55 = arith.constant dense<0.000000e+00> : vector<56x140xf32>
    %49 = tpu.matmul %46, %48, %cst_55 {dimension_numbers = #tpu.dot_dimension_numbers<[1], [0], [0], [1], [0, 0, 1, 1], [], []>} : vector<56x384xf32>, vector<384x140xf32>, vector<56x140xf32> -> vector<56x140xf32>
    %50 = arith.addf %47, %49 : vector<56x140xf32>
    %51 = vector.extract_strided_slice %50 {offsets = [0, 0], sizes = [56, 28], strides = [1, 1]} : vector<56x140xf32> to vector<56x28xf32>
    %52 = vector.extract_strided_slice %50 {offsets = [0, 28], sizes = [56, 28], strides = [1, 1]} : vector<56x140xf32> to vector<56x28xf32>
    %53 = arith.maximumf %51, %52 : vector<56x28xf32>
    %54 = vector.extract_strided_slice %50 {offsets = [0, 56], sizes = [56, 28], strides = [1, 1]} : vector<56x140xf32> to vector<56x28xf32>
    %55 = arith.maximumf %53, %54 : vector<56x28xf32>
    %56 = vector.extract_strided_slice %50 {offsets = [0, 84], sizes = [56, 28], strides = [1, 1]} : vector<56x140xf32> to vector<56x28xf32>
    %57 = arith.maximumf %55, %56 : vector<56x28xf32>
    %58 = vector.extract_strided_slice %50 {offsets = [0, 112], sizes = [56, 28], strides = [1, 1]} : vector<56x140xf32> to vector<56x28xf32>
    %59 = arith.maximumf %57, %58 : vector<56x28xf32>
    %c0_56 = arith.constant 0 : index
    %c0_57 = arith.constant 0 : index
    %60 = vector.load %arg13[%c0_56, %c0_57] : memref<28x140xf32, #tpu.memory_space<vmem>>, vector<28x140xf32>
    %cst_58 = arith.constant dense<0.000000e+00> : vector<56x140xf32>
    %61 = tpu.matmul %59, %60, %cst_58 {dimension_numbers = #tpu.dot_dimension_numbers<[1], [0], [0], [1], [0, 0, 1, 1], [], []>} : vector<56x28xf32>, vector<28x140xf32>, vector<56x140xf32> -> vector<56x140xf32>
    %62 = arith.subf %50, %61 : vector<56x140xf32>
    %63 = math.exp %62 : vector<56x140xf32>
    %c0_59 = arith.constant 0 : index
    %c0_60 = arith.constant 0 : index
    %64 = vector.load %arg14[%c0_59, %c0_60] : memref<140x28xf32, #tpu.memory_space<vmem>>, vector<140x28xf32>
    %cst_61 = arith.constant dense<0.000000e+00> : vector<56x28xf32>
    %65 = tpu.matmul %63, %64, %cst_61 {dimension_numbers = #tpu.dot_dimension_numbers<[1], [0], [0], [1], [0, 0, 1, 1], [], []>} : vector<56x140xf32>, vector<140x28xf32>, vector<56x28xf32> -> vector<56x28xf32>
    %66 = tpu.reciprocal %65 {approx = true} : vector<56x28xf32> -> vector<56x28xf32>
    %67 = arith.mulf %65, %66 : vector<56x28xf32>
    %cst_62 = arith.constant 2.000000e+00 : f32
    %68 = vector.broadcast %cst_62 : f32 to vector<56x28xf32>
    %69 = arith.subf %68, %67 : vector<56x28xf32>
    %70 = arith.mulf %66, %69 : vector<56x28xf32>
    %c0_63 = arith.constant 0 : index
    %c0_64 = arith.constant 0 : index
    %71 = vector.load %arg13[%c0_63, %c0_64] : memref<28x140xf32, #tpu.memory_space<vmem>>, vector<28x140xf32>
    %cst_65 = arith.constant dense<0.000000e+00> : vector<56x140xf32>
    %72 = tpu.matmul %70, %71, %cst_65 {dimension_numbers = #tpu.dot_dimension_numbers<[1], [0], [0], [1], [0, 0, 1, 1], [], []>} : vector<56x28xf32>, vector<28x140xf32>, vector<56x140xf32> -> vector<56x140xf32>
    %73 = arith.mulf %63, %72 : vector<56x140xf32>
    %c0_66 = arith.constant 0 : index
    %c0_67 = arith.constant 0 : index
    %74 = vector.load %arg15[%c0_66, %c0_67] : memref<56x140xf32, #tpu.memory_space<vmem>>, vector<56x140xf32>
    tpu.vector_store %arg15[%c0_66, %c0_67], %73 {strides = array<i32>} : memref<56x140xf32, #tpu.memory_space<vmem>>, vector<56x140xf32>,
    %c0_68 = arith.constant 0 : index
    %c0_69 = arith.constant 0 : index
    %75 = vector.load %arg1[%c0_68, %c0_69] : memref<56x28xf32, #tpu.memory_space<vmem>>, vector<56x28xf32>
    %76 = vector.extract_strided_slice %73 {offsets = [0, 0], sizes = [56, 28], strides = [1, 1]} : vector<56x140xf32> to vector<56x28xf32>
    %77 = arith.cmpf oge, %75, %76 : vector<56x28xf32>
    %cst_70 = arith.constant 1.000000e+00 : f32
    %cst_71 = arith.constant 0.000000e+00 : f32
    %78 = vector.broadcast %cst_70 : f32 to vector<56x28xf32>
    %79 = vector.broadcast %cst_71 : f32 to vector<56x28xf32>
    %80 = arith.select %77, %78, %79 : vector<56x28xi1>, vector<56x28xf32>
    %81 = vector.extract_strided_slice %73 {offsets = [0, 28], sizes = [56, 28], strides = [1, 1]} : vector<56x140xf32> to vector<56x28xf32>
    %82 = arith.addf %76, %81 : vector<56x28xf32>
    %83 = arith.cmpf oge, %75, %82 : vector<56x28xf32>
    %cst_72 = arith.constant 1.000000e+00 : f32
    %cst_73 = arith.constant 0.000000e+00 : f32
    %84 = vector.broadcast %cst_72 : f32 to vector<56x28xf32>
    %85 = vector.broadcast %cst_73 : f32 to vector<56x28xf32>
    %86 = arith.select %83, %84, %85 : vector<56x28xi1>, vector<56x28xf32>
    %87 = arith.addf %80, %86 : vector<56x28xf32>
    %88 = vector.extract_strided_slice %73 {offsets = [0, 56], sizes = [56, 28], strides = [1, 1]} : vector<56x140xf32> to vector<56x28xf32>
    %89 = arith.addf %82, %88 : vector<56x28xf32>
    %90 = arith.cmpf oge, %75, %89 : vector<56x28xf32>
    %cst_74 = arith.constant 1.000000e+00 : f32
    %cst_75 = arith.constant 0.000000e+00 : f32
    %91 = vector.broadcast %cst_74 : f32 to vector<56x28xf32>
    %92 = vector.broadcast %cst_75 : f32 to vector<56x28xf32>
    %93 = arith.select %90, %91, %92 : vector<56x28xi1>, vector<56x28xf32>
    %94 = arith.addf %87, %93 : vector<56x28xf32>
    %95 = vector.extract_strided_slice %73 {offsets = [0, 84], sizes = [56, 28], strides = [1, 1]} : vector<56x140xf32> to vector<56x28xf32>
    %96 = arith.addf %89, %95 : vector<56x28xf32>
    %97 = arith.cmpf oge, %75, %96 : vector<56x28xf32>
    %cst_76 = arith.constant 1.000000e+00 : f32
    %cst_77 = arith.constant 0.000000e+00 : f32
    %98 = vector.broadcast %cst_76 : f32 to vector<56x28xf32>
    %99 = vector.broadcast %cst_77 : f32 to vector<56x28xf32>
    %100 = arith.select %97, %98, %99 : vector<56x28xi1>, vector<56x28xf32>
    %101 = arith.addf %94, %100 : vector<56x28xf32>
    %cst_78 = arith.constant 5.000000e+00 : f32
    %102 = vector.broadcast %cst_78 : f32 to vector<56x28xf32>
    %103 = arith.divf %101, %102 : vector<56x28xf32>
    %cst_79 = arith.constant 1.000000e-01 : f32
    %104 = vector.broadcast %cst_79 : f32 to vector<56x28xf32>
    %105 = arith.addf %103, %104 : vector<56x28xf32>
    %c0_80 = arith.constant 0 : index
    %c0_81 = arith.constant 0 : index
    %106 = vector.load %arg16[%c0_80, %c0_81] : memref<56x28xf32, #tpu.memory_space<vmem>>, vector<56x28xf32>
    tpu.vector_store %arg16[%c0_80, %c0_81], %105 {strides = array<i32>} : memref<56x28xf32, #tpu.memory_space<vmem>>, vector<56x28xf32>,
    return
  }
}

</mosaic_0001>

<llo_original>
// kernel: tile.30
$region0: #{tile.30}
  %s0 = inlined_call_operand.vmem [shape: f32[8,2,14,14], index: 0, kind: input, shape index: {}]
  %s1 = inlined_call_operand.vmem [shape: f32[8,28,14], index: 1, kind: output, shape index: {}]
  $region1: #{tile.30} parent=0
    #allocation0 [shape = 'u8[458752]{0}', space=vmem, size = 0x70000, scoped, tag = 'scoped mem for input reshape']
    %s3 = sshllo.u32 0, 2
    %s4 = smul.addr 2, 111
    %s5 = scalar_lea.vmem %s0, %s4
    %v6 = vld [vmem:[%s5] sm:%s3]
    %s7 = scalar_lea.vmem [#allocation0], 888
    %8 = vst [vmem:[%s7] sm:%s3] %v6
    %s9 = smul.addr 2, 110
    %s10 = scalar_lea.vmem %s0, %s9
    %v11 = vld [vmem:[%s10] sm:%s3]
    %s12 = scalar_lea.vmem [#allocation0], 880
    %13 = vst [vmem:[%s12] sm:%s3] %v11
    %s14 = smul.addr 2, 109
    %s15 = scalar_lea.vmem %s0, %s14
    %v16 = vld [vmem:[%s15] sm:%s3]
    %s17 = scalar_lea.vmem [#allocation0], 872
    %18 = vst [vmem:[%s17] sm:%s3] %v16
    %s19 = smul.addr 2, 108
    %s20 = scalar_lea.vmem %s0, %s19
    %v21 = vld [vmem:[%s20] sm:%s3]
    %s22 = scalar_lea.vmem [#allocation0], 864
    %23 = vst [vmem:[%s22] sm:%s3] %v21
    %s24 = smul.addr 2, 107
    %s25 = scalar_lea.vmem %s0, %s24
    %v26 = vld [vmem:[%s25] sm:%s3]
    %s27 = scalar_lea.vmem [#allocation0], 856
    %28 = vst [vmem:[%s27] sm:%s3] %v26
    %s29 = smul.addr 2, 106
    %s30 = scalar_lea.vmem %s0, %s29
    %v31 = vld [vmem:[%s30] sm:%s3]
    %s32 = scalar_lea.vmem [#allocation0], 848
    %33 = vst [vmem:[%s32] sm:%s3] %v31
    %s34 = smul.addr 2, 105
    %s35 = scalar_lea.vmem %s0, %s34
    %v36 = vld [vmem:[%s35] sm:%s3]
    %s37 = scalar_lea.vmem [#allocation0], 840
    %38 = vst [vmem:[%s37] sm:%s3] %v36
    %s39 = smul.addr 2, 104
    %s40 = scalar_lea.vmem %s0, %s39
    %v41 = vld [vmem:[%s40] sm:%s3]
    %s42 = scalar_lea.vmem [#allocation0], 832
    %43 = vst [vmem:[%s42] sm:%s3] %v41
    %s44 = smul.addr 2, 103
    %s45 = scalar_lea.vmem %s0, %s44
    %v46 = vld [vmem:[%s45] sm:%s3]
    %s47 = scalar_lea.vmem [#allocation0], 824
    %48 = vst [vmem:[%s47] sm:%s3] %v46
    %s49 = smul.addr 2, 102
    %s50 = scalar_lea.vmem %s0, %s49
    %v51 = vld [vmem:[%s50] sm:%s3]
    %s52 = scalar_lea.vmem [#allocation0], 816
    %53 = vst [vmem:[%s52] sm:%s3] %v51
    %s54 = smul.addr 2, 101
    %s55 = scalar_lea.vmem %s0, %s54
    %v56 = vld [vmem:[%s55] sm:%s3]
    %s57 = scalar_lea.vmem [#allocation0], 808
    %58 = vst [vmem:[%s57] sm:%s3] %v56
    %s59 = smul.addr 2, 100
    %s60 = scalar_lea.vmem %s0, %s59
    %v61 = vld [vmem:[%s60] sm:%s3]
    %s62 = scalar_lea.vmem [#allocation0], 800
    %63 = vst [vmem:[%s62] sm:%s3] %v61
    %s64 = smul.addr 2, 99
    %s65 = scalar_lea.vmem %s0, %s64
    %v66 = vld [vmem:[%s65] sm:%s3]
    %s67 = scalar_lea.vmem [#allocation0], 792
    %68 = vst [vmem:[%s67] sm:%s3] %v66
    %s69 = smul.addr 2, 98
    %s70 = scalar_lea.vmem %s0, %s69
    %v71 = vld [vmem:[%s70] sm:%s3]
    %s72 = scalar_lea.vmem [#allocation0], 784
    %73 = vst [vmem:[%s72] sm:%s3] %v71
    %s74 = smul.addr 2, 97
    %s75 = scalar_lea.vmem %s0, %s74
    %v76 = vld [vmem:[%s75] sm:%s3]
    %s77 = scalar_lea.vmem [#allocation0], 776
    %78 = vst [vmem:[%s77] sm:%s3] %v76
    %s79 = smul.addr 2, 96
    %s80 = scalar_lea.vmem %s0, %s79
    %v81 = vld [vmem:[%s80] sm:%s3]
    %s82 = scalar_lea.vmem [#allocation0], 768
    %83 = vst [vmem:[%s82] sm:%s3] %v81
    %s84 = smul.addr 2, 95
    %s85 = scalar_lea.vmem %s0, %s84
    %v86 = vld [vmem:[%s85] sm:%s3]
    %s87 = scalar_lea.vmem [#allocation0], 760
    %88 = vst [vmem:[%s87] sm:%s3] %v86
    %s89 = smul.addr 2, 94
    %s90 = scalar_lea.vmem %s0, %s89
    %v91 = vld [vmem:[%s90] sm:%s3]
    %s92 = scalar_lea.vmem [#allocation0], 752
    %93 = vst [vmem:[%s92] sm:%s3] %v91
    %s94 = smul.addr 2, 93
    %s95 = scalar_lea.vmem %s0, %s94
    %v96 = vld [vmem:[%s95] sm:%s3]
    %s97 = scalar_lea.vmem [#allocation0], 744
    %98 = vst [vmem:[%s97] sm:%s3] %v96
    %s99 = smul.addr 2, 92
    %s100 = scalar_lea.vmem %s0, %s99
    %v101 = vld [vmem:[%s100] sm:%s3]
    %s102 = scalar_lea.vmem [#allocation0], 736
    %103 = vst [vmem:[%s102] sm:%s3] %v101
    %s104 = smul.addr 2, 91
    %s105 = scalar_lea.vmem %s0, %s104
    %v106 = vld [vmem:[%s105] sm:%s3]
    %s107 = scalar_lea.vmem [#allocation0], 728
    %108 = vst [vmem:[%s107] sm:%s3] %v106
    %s109 = smul.addr 2, 90
    %s110 = scalar_lea.vmem %s0, %s109
    %v111 = vld [vmem:[%s110] sm:%s3]
    %s112 = scalar_lea.vmem [#allocation0], 720
    %113 = vst [vmem:[%s112] sm:%s3] %v111
    %s114 = smul.addr 2, 89
    %s115 = scalar_lea.vmem %s0, %s114
    %v116 = vld [vmem:[%s115] sm:%s3]
    %s117 = scalar_lea.vmem [#allocation0], 712
    %118 = vst [vmem:[%s117] sm:%s3] %v116
    %s119 = smul.addr 2, 88
    %s120 = scalar_lea.vmem %s0, %s119
    %v121 = vld [vmem:[%s120] sm:%s3]
    %s122 = scalar_lea.vmem [#allocation0], 704
    %123 = vst [vmem:[%s122] sm:%s3] %v121
    %s124 = smul.addr 2, 87
    %s125 = scalar_lea.vmem %s0, %s124
    %v126 = vld [vmem:[%s125] sm:%s3]
    %s127 = scalar_lea.vmem [#allocation0], 696
    %128 = vst [vmem:[%s127] sm:%s3] %v126
    %s129 = smul.addr 2, 86
    %s130 = scalar_lea.vmem %s0, %s129
    %v131 = vld [vmem:[%s130] sm:%s3]
    %s132 = scalar_lea.vmem [#allocation0], 688
    %133 = vst [vmem:[%s132] sm:%s3] %v131
    %s134 = smul.addr 2, 85
    %s135 = scalar_lea.vmem %s0, %s134
    %v136 = vld [vmem:[%s135] sm:%s3]
    %s137 = scalar_lea.vmem [#allocation0], 680
    %138 = vst [vmem:[%s137] sm:%s3] %v136
    %s139 = smul.addr 2, 84
    %s140 = scalar_lea.vmem %s0, %s139
    %v141 = vld [vmem:[%s140] sm:%s3]
    %s142 = scalar_lea.vmem [#allocation0], 672
    %143 = vst [vmem:[%s142] sm:%s3] %v141
    %s144 = smul.addr 2, 83
    %s145 = scalar_lea.vmem %s0, %s144
    %v146 = vld [vmem:[%s145] sm:%s3]
    %s147 = scalar_lea.vmem [#allocation0], 664
    %148 = vst [vmem:[%s147] sm:%s3] %v146
    %s149 = smul.addr 2, 82
    %s150 = scalar_lea.vmem %s0, %s149
    %v151 = vld [vmem:[%s150] sm:%s3]
    %s152 = scalar_lea.vmem [#allocation0], 656
    %153 = vst [vmem:[%s152] sm:%s3] %v151
    %s154 = smul.addr 2, 81
    %s155 = scalar_lea.vmem %s0, %s154
    %v156 = vld [vmem:[%s155] sm:%s3]
    %s157 = scalar_lea.vmem [#allocation0], 648
    %158 = vst [vmem:[%s157] sm:%s3] %v156
    %s159 = smul.addr 2, 80
    %s160 = scalar_lea.vmem %s0, %s159
    %v161 = vld [vmem:[%s160] sm:%s3]
    %s162 = scalar_lea.vmem [#allocation0], 640
    %163 = vst [vmem:[%s162] sm:%s3] %v161
    %s164 = smul.addr 2, 79
    %s165 = scalar_lea.vmem %s0, %s164
    %v166 = vld [vmem:[%s165] sm:%s3]
    %s167 = scalar_lea.vmem [#allocation0], 632
    %168 = vst [vmem:[%s167] sm:%s3] %v166
    %s169 = smul.addr 2, 78
    %s170 = scalar_lea.vmem %s0, %s169
    %v171 = vld [vmem:[%s170] sm:%s3]
    %s172 = scalar_lea.vmem [#allocation0], 624
    %173 = vst [vmem:[%s172] sm:%s3] %v171
    %s174 = smul.addr 2, 77
    %s175 = scalar_lea.vmem %s0, %s174
    %v176 = vld [vmem:[%s175] sm:%s3]
    %s177 = scalar_lea.vmem [#allocation0], 616
    %178 = vst [vmem:[%s177] sm:%s3] %v176
    %s179 = smul.addr 2, 76
    %s180 = scalar_lea.vmem %s0, %s179
    %v181 = vld [vmem:[%s180] sm:%s3]
    %s182 = scalar_lea.vmem [#allocation0], 608
    %183 = vst [vmem:[%s182] sm:%s3] %v181
    %s184 = smul.addr 2, 75
    %s185 = scalar_lea.vmem %s0, %s184
    %v186 = vld [vmem:[%s185] sm:%s3]
    %s187 = scalar_lea.vmem [#allocation0], 600
    %188 = vst [vmem:[%s187] sm:%s3] %v186
    %s189 = smul.addr 2, 74
    %s190 = scalar_lea.vmem %s0, %s189
    %v191 = vld [vmem:[%s190] sm:%s3]
    %s192 = scalar_lea.vmem [#allocation0], 592
    %193 = vst [vmem:[%s192] sm:%s3] %v191
    %s194 = smul.addr 2, 73
    %s195 = scalar_lea.vmem %s0, %s194
    %v196 = vld [vmem:[%s195] sm:%s3]
    %s197 = scalar_lea.vmem [#allocation0], 584
    %198 = vst [vmem:[%s197] sm:%s3] %v196
    %s199 = smul.addr 2, 72
    %s200 = scalar_lea.vmem %s0, %s199
    %v201 = vld [vmem:[%s200] sm:%s3]
    %s202 = scalar_lea.vmem [#allocation0], 576
    %203 = vst [vmem:[%s202] sm:%s3] %v201
    %s204 = smul.addr 2, 71
    %s205 = scalar_lea.vmem %s0, %s204
    %v206 = vld [vmem:[%s205] sm:%s3]
    %s207 = scalar_lea.vmem [#allocation0], 568
    %208 = vst [vmem:[%s207] sm:%s3] %v206
    %s209 = smul.addr 2, 70
    %s210 = scalar_lea.vmem %s0, %s209
    %v211 = vld [vmem:[%s210] sm:%s3]
    %s212 = scalar_lea.vmem [#allocation0], 560
    %213 = vst [vmem:[%s212] sm:%s3] %v211
    %s214 = smul.addr 2, 69
    %s215 = scalar_lea.vmem %s0, %s214
    %v216 = vld [vmem:[%s215] sm:%s3]
    %s217 = scalar_lea.vmem [#allocation0], 552
    %218 = vst [vmem:[%s217] sm:%s3] %v216
    %s219 = smul.addr 2, 68
    %s220 = scalar_lea.vmem %s0, %s219
    %v221 = vld [vmem:[%s220] sm:%s3]
    %s222 = scalar_lea.vmem [#allocation0], 544
    %223 = vst [vmem:[%s222] sm:%s3] %v221
    %s224 = smul.addr 2, 67
    %s225 = scalar_lea.vmem %s0, %s224
    %v226 = vld [vmem:[%s225] sm:%s3]
    %s227 = scalar_lea.vmem [#allocation0], 536
    %228 = vst [vmem:[%s227] sm:%s3] %v226
    %s229 = smul.addr 2, 66
    %s230 = scalar_lea.vmem %s0, %s229
    %v231 = vld [vmem:[%s230] sm:%s3]
    %s232 = scalar_lea.vmem [#allocation0], 528
    %233 = vst [vmem:[%s232] sm:%s3] %v231
    %s234 = smul.addr 2, 65
    %s235 = scalar_lea.vmem %s0, %s234
    %v236 = vld [vmem:[%s235] sm:%s3]
    %s237 = scalar_lea.vmem [#allocation0], 520
    %238 = vst [vmem:[%s237] sm:%s3] %v236
    %s239 = smul.addr 2, 64
    %s240 = scalar_lea.vmem %s0, %s239
    %v241 = vld [vmem:[%s240] sm:%s3]
    %s242 = scalar_lea.vmem [#allocation0], 512
    %243 = vst [vmem:[%s242] sm:%s3] %v241
    %s244 = smul.addr 2, 63
    %s245 = scalar_lea.vmem %s0, %s244
    %v246 = vld [vmem:[%s245] sm:%s3]
    %s247 = scalar_lea.vmem [#allocation0], 504
    %248 = vst [vmem:[%s247] sm:%s3] %v246
    %s249 = smul.addr 2, 62
    %s250 = scalar_lea.vmem %s0, %s249
    %v251 = vld [vmem:[%s250] sm:%s3]
    %s252 = scalar_lea.vmem [#allocation0], 496
    %253 = vst [vmem:[%s252] sm:%s3] %v251
    %s254 = smul.addr 2, 61
    %s255 = scalar_lea.vmem %s0, %s254
    %v256 = vld [vmem:[%s255] sm:%s3]
    %s257 = scalar_lea.vmem [#allocation0], 488
    %258 = vst [vmem:[%s257] sm:%s3] %v256
    %s259 = smul.addr 2, 60
    %s260 = scalar_lea.vmem %s0, %s259
    %v261 = vld [vmem:[%s260] sm:%s3]
    %s262 = scalar_lea.vmem [#allocation0], 480
    %263 = vst [vmem:[%s262] sm:%s3] %v261
    %s264 = smul.addr 2, 59
    %s265 = scalar_lea.vmem %s0, %s264
    %v266 = vld [vmem:[%s265] sm:%s3]
    %s267 = scalar_lea.vmem [#allocation0], 472
    %268 = vst [vmem:[%s267] sm:%s3] %v266
    %s269 = smul.addr 2, 58
    %s270 = scalar_lea.vmem %s0, %s269
    %v271 = vld [vmem:[%s270] sm:%s3]
    %s272 = scalar_lea.vmem [#allocation0], 464
    %273 = vst [vmem:[%s272] sm:%s3] %v271
    %s274 = smul.addr 2, 57
    %s275 = scalar_lea.vmem %s0, %s274
    %v276 = vld [vmem:[%s275] sm:%s3]
    %s277 = scalar_lea.vmem [#allocation0], 456
    %278 = vst [vmem:[%s277] sm:%s3] %v276
    %s279 = smul.addr 2, 56
    %s280 = scalar_lea.vmem %s0, %s279
    %v281 = vld [vmem:[%s280] sm:%s3]
    %s282 = scalar_lea.vmem [#allocation0], 448
    %283 = vst [vmem:[%s282] sm:%s3] %v281
    %s284 = smul.addr 2, 55
    %s285 = scalar_lea.vmem %s0, %s284
    %v286 = vld [vmem:[%s285] sm:%s3]
    %s287 = scalar_lea.vmem [#allocation0], 440
    %288 = vst [vmem:[%s287] sm:%s3] %v286
    %s289 = smul.addr 2, 54
    %s290 = scalar_lea.vmem %s0, %s289
    %v291 = vld [vmem:[%s290] sm:%s3]
    %s292 = scalar_lea.vmem [#allocation0], 432
    %293 = vst [vmem:[%s292] sm:%s3] %v291
    %s294 = smul.addr 2, 53
    %s295 = scalar_lea.vmem %s0, %s294
    %v296 = vld [vmem:[%s295] sm:%s3]
    %s297 = scalar_lea.vmem [#allocation0], 424
    %298 = vst [vmem:[%s297] sm:%s3] %v296
    %s299 = smul.addr 2, 52
    %s300 = scalar_lea.vmem %s0, %s299
    %v301 = vld [vmem:[%s300] sm:%s3]
    %s302 = scalar_lea.vmem [#allocation0], 416
    %303 = vst [vmem:[%s302] sm:%s3] %v301
    %s304 = smul.addr 2, 51
    %s305 = scalar_lea.vmem %s0, %s304
    %v306 = vld [vmem:[%s305] sm:%s3]
    %s307 = scalar_lea.vmem [#allocation0], 408
    %308 = vst [vmem:[%s307] sm:%s3] %v306
    %s309 = smul.addr 2, 50
    %s310 = scalar_lea.vmem %s0, %s309
    %v311 = vld [vmem:[%s310] sm:%s3]
    %s312 = scalar_lea.vmem [#allocation0], 400
    %313 = vst [vmem:[%s312] sm:%s3] %v311
    %s314 = smul.addr 2, 49
    %s315 = scalar_lea.vmem %s0, %s314
    %v316 = vld [vmem:[%s315] sm:%s3]
    %s317 = scalar_lea.vmem [#allocation0], 392
    %318 = vst [vmem:[%s317] sm:%s3] %v316
    %s319 = smul.addr 2, 48
    %s320 = scalar_lea.vmem %s0, %s319
    %v321 = vld [vmem:[%s320] sm:%s3]
    %s322 = scalar_lea.vmem [#allocation0], 384
    %323 = vst [vmem:[%s322] sm:%s3] %v321
    %s324 = smul.addr 2, 47
    %s325 = scalar_lea.vmem %s0, %s324
    %v326 = vld [vmem:[%s325] sm:%s3]
    %s327 = scalar_lea.vmem [#allocation0], 376
    %328 = vst [vmem:[%s327] sm:%s3] %v326
    %s329 = smul.addr 2, 46
    %s330 = scalar_lea.vmem %s0, %s329
    %v331 = vld [vmem:[%s330] sm:%s3]
    %s332 = scalar_lea.vmem [#allocation0], 368
    %333 = vst [vmem:[%s332] sm:%s3] %v331
    %s334 = smul.addr 2, 45
    %s335 = scalar_lea.vmem %s0, %s334
    %v336 = vld [vmem:[%s335] sm:%s3]
    %s337 = scalar_lea.vmem [#allocation0], 360
    %338 = vst [vmem:[%s337] sm:%s3] %v336
    %s339 = smul.addr 2, 44
    %s340 = scalar_lea.vmem %s0, %s339
    %v341 = vld [vmem:[%s340] sm:%s3]
    %s342 = scalar_lea.vmem [#allocation0], 352
    %343 = vst [vmem:[%s342] sm:%s3] %v341
    %s344 = smul.addr 2, 43
    %s345 = scalar_lea.vmem %s0, %s344
    %v346 = vld [vmem:[%s345] sm:%s3]
    %s347 = scalar_lea.vmem [#allocation0], 344
    %348 = vst [vmem:[%s347] sm:%s3] %v346
    %s349 = smul.addr 2, 42
    %s350 = scalar_lea.vmem %s0, %s349
    %v351 = vld [vmem:[%s350] sm:%s3]
    %s352 = scalar_lea.vmem [#allocation0], 336
    %353 = vst [vmem:[%s352] sm:%s3] %v351
    %s354 = smul.addr 2, 41
    %s355 = scalar_lea.vmem %s0, %s354
    %v356 = vld [vmem:[%s355] sm:%s3]
    %s357 = scalar_lea.vmem [#allocation0], 328
    %358 = vst [vmem:[%s357] sm:%s3] %v356
    %s359 = smul.addr 2, 40
    %s360 = scalar_lea.vmem %s0, %s359
    %v361 = vld [vmem:[%s360] sm:%s3]
    %s362 = scalar_lea.vmem [#allocation0], 320
    %363 = vst [vmem:[%s362] sm:%s3] %v361
    %s364 = smul.addr 2, 39
    %s365 = scalar_lea.vmem %s0, %s364
    %v366 = vld [vmem:[%s365] sm:%s3]
    %s367 = scalar_lea.vmem [#allocation0], 312
    %368 = vst [vmem:[%s367] sm:%s3] %v366
    %s369 = smul.addr 2, 38
    %s370 = scalar_lea.vmem %s0, %s369
    %v371 = vld [vmem:[%s370] sm:%s3]
    %s372 = scalar_lea.vmem [#allocation0], 304
    %373 = vst [vmem:[%s372] sm:%s3] %v371
    %s374 = smul.addr 2, 37
    %s375 = scalar_lea.vmem %s0, %s374
    %v376 = vld [vmem:[%s375] sm:%s3]
    %s377 = scalar_lea.vmem [#allocation0], 296
    %378 = vst [vmem:[%s377] sm:%s3] %v376
    %s379 = smul.addr 2, 36
    %s380 = scalar_lea.vmem %s0, %s379
    %v381 = vld [vmem:[%s380] sm:%s3]
    %s382 = scalar_lea.vmem [#allocation0], 288
    %383 = vst [vmem:[%s382] sm:%s3] %v381
    %s384 = smul.addr 2, 35
    %s385 = scalar_lea.vmem %s0, %s384
    %v386 = vld [vmem:[%s385] sm:%s3]
    %s387 = scalar_lea.vmem [#allocation0], 280
    %388 = vst [vmem:[%s387] sm:%s3] %v386
    %s389 = smul.addr 2, 34
    %s390 = scalar_lea.vmem %s0, %s389
    %v391 = vld [vmem:[%s390] sm:%s3]
    %s392 = scalar_lea.vmem [#allocation0], 272
    %393 = vst [vmem:[%s392] sm:%s3] %v391
    %s394 = smul.addr 2, 33
    %s395 = scalar_lea.vmem %s0, %s394
    %v396 = vld [vmem:[%s395] sm:%s3]
    %s397 = scalar_lea.vmem [#allocation0], 264
    %398 = vst [vmem:[%s397] sm:%s3] %v396
    %s399 = smul.addr 2, 32
    %s400 = scalar_lea.vmem %s0, %s399
    %v401 = vld [vmem:[%s400] sm:%s3]
    %s402 = scalar_lea.vmem [#allocation0], 256
    %403 = vst [vmem:[%s402] sm:%s3] %v401
    %s404 = smul.addr 2, 31
    %s405 = scalar_lea.vmem %s0, %s404
    %v406 = vld [vmem:[%s405] sm:%s3]
    %s407 = scalar_lea.vmem [#allocation0], 248
    %408 = vst [vmem:[%s407] sm:%s3] %v406
    %s409 = smul.addr 2, 30
    %s410 = scalar_lea.vmem %s0, %s409
    %v411 = vld [vmem:[%s410] sm:%s3]
    %s412 = scalar_lea.vmem [#allocation0], 240
    %413 = vst [vmem:[%s412] sm:%s3] %v411
    %s414 = smul.addr 2, 29
    %s415 = scalar_lea.vmem %s0, %s414
    %v416 = vld [vmem:[%s415] sm:%s3]
    %s417 = scalar_lea.vmem [#allocation0], 232
    %418 = vst [vmem:[%s417] sm:%s3] %v416
    %s419 = smul.addr 2, 28
    %s420 = scalar_lea.vmem %s0, %s419
    %v421 = vld [vmem:[%s420] sm:%s3]
    %s422 = scalar_lea.vmem [#allocation0], 224
    %423 = vst [vmem:[%s422] sm:%s3] %v421
    %s424 = smul.addr 2, 27
    %s425 = scalar_lea.vmem %s0, %s424
    %v426 = vld [vmem:[%s425] sm:%s3]
    %s427 = scalar_lea.vmem [#allocation0], 216
    %428 = vst [vmem:[%s427] sm:%s3] %v426
    %s429 = smul.addr 2, 26
    %s430 = scalar_lea.vmem %s0, %s429
    %v431 = vld [vmem:[%s430] sm:%s3]
    %s432 = scalar_lea.vmem [#allocation0], 208
    %433 = vst [vmem:[%s432] sm:%s3] %v431
    %s434 = smul.addr 2, 25
    %s435 = scalar_lea.vmem %s0, %s434
    %v436 = vld [vmem:[%s435] sm:%s3]
    %s437 = scalar_lea.vmem [#allocation0], 200
    %438 = vst [vmem:[%s437] sm:%s3] %v436
    %s439 = smul.addr 2, 24
    %s440 = scalar_lea.vmem %s0, %s439
    %v441 = vld [vmem:[%s440] sm:%s3]
    %s442 = scalar_lea.vmem [#allocation0], 192
    %443 = vst [vmem:[%s442] sm:%s3] %v441
    %s444 = smul.addr 2, 23
    %s445 = scalar_lea.vmem %s0, %s444
    %v446 = vld [vmem:[%s445] sm:%s3]
    %s447 = scalar_lea.vmem [#allocation0], 184
    %448 = vst [vmem:[%s447] sm:%s3] %v446
    %s449 = smul.addr 2, 22
    %s450 = scalar_lea.vmem %s0, %s449
    %v451 = vld [vmem:[%s450] sm:%s3]
    %s452 = scalar_lea.vmem [#allocation0], 176
    %453 = vst [vmem:[%s452] sm:%s3] %v451
    %s454 = smul.addr 2, 21
    %s455 = scalar_lea.vmem %s0, %s454
    %v456 = vld [vmem:[%s455] sm:%s3]
    %s457 = scalar_lea.vmem [#allocation0], 168
    %458 = vst [vmem:[%s457] sm:%s3] %v456
    %s459 = smul.addr 2, 20
    %s460 = scalar_lea.vmem %s0, %s459
    %v461 = vld [vmem:[%s460] sm:%s3]
    %s462 = scalar_lea.vmem [#allocation0], 160
    %463 = vst [vmem:[%s462] sm:%s3] %v461
    %s464 = smul.addr 2, 19
    %s465 = scalar_lea.vmem %s0, %s464
    %v466 = vld [vmem:[%s465] sm:%s3]
    %s467 = scalar_lea.vmem [#allocation0], 152
    %468 = vst [vmem:[%s467] sm:%s3] %v466
    %s469 = smul.addr 2, 18
    %s470 = scalar_lea.vmem %s0, %s469
    %v471 = vld [vmem:[%s470] sm:%s3]
    %s472 = scalar_lea.vmem [#allocation0], 144
    %473 = vst [vmem:[%s472] sm:%s3] %v471
    %s474 = smul.addr 2, 17
    %s475 = scalar_lea.vmem %s0, %s474
    %v476 = vld [vmem:[%s475] sm:%s3]
    %s477 = scalar_lea.vmem [#allocation0], 136
    %478 = vst [vmem:[%s477] sm:%s3] %v476
    %s479 = smul.addr 2, 16
    %s480 = scalar_lea.vmem %s0, %s479
    %v481 = vld [vmem:[%s480] sm:%s3]
    %s482 = scalar_lea.vmem [#allocation0], 128
    %483 = vst [vmem:[%s482] sm:%s3] %v481
    %s484 = smul.addr 2, 15
    %s485 = scalar_lea.vmem %s0, %s484
    %v486 = vld [vmem:[%s485] sm:%s3]
    %s487 = scalar_lea.vmem [#allocation0], 120
    %488 = vst [vmem:[%s487] sm:%s3] %v486
    %s489 = smul.addr 2, 14
    %s490 = scalar_lea.vmem %s0, %s489
    %v491 = vld [vmem:[%s490] sm:%s3]
    %s492 = scalar_lea.vmem [#allocation0], 112
    %493 = vst [vmem:[%s492] sm:%s3] %v491
    %s494 = smul.addr 2, 13
    %s495 = scalar_lea.vmem %s0, %s494
    %v496 = vld [vmem:[%s495] sm:%s3]
    %s497 = scalar_lea.vmem [#allocation0], 104
    %498 = vst [vmem:[%s497] sm:%s3] %v496
    %s499 = smul.addr 2, 12
    %s500 = scalar_lea.vmem %s0, %s499
    %v501 = vld [vmem:[%s500] sm:%s3]
    %s502 = scalar_lea.vmem [#allocation0], 96
    %503 = vst [vmem:[%s502] sm:%s3] %v501
    %s504 = smul.addr 2, 11
    %s505 = scalar_lea.vmem %s0, %s504
    %v506 = vld [vmem:[%s505] sm:%s3]
    %s507 = scalar_lea.vmem [#allocation0], 88
    %508 = vst [vmem:[%s507] sm:%s3] %v506
    %s509 = smul.addr 2, 10
    %s510 = scalar_lea.vmem %s0, %s509
    %v511 = vld [vmem:[%s510] sm:%s3]
    %s512 = scalar_lea.vmem [#allocation0], 80
    %513 = vst [vmem:[%s512] sm:%s3] %v511
    %s514 = smul.addr 2, 9
    %s515 = scalar_lea.vmem %s0, %s514
    %v516 = vld [vmem:[%s515] sm:%s3]
    %s517 = scalar_lea.vmem [#allocation0], 72
    %518 = vst [vmem:[%s517] sm:%s3] %v516
    %s519 = smul.addr 2, 8
    %s520 = scalar_lea.vmem %s0, %s519
    %v521 = vld [vmem:[%s520] sm:%s3]
    %s522 = scalar_lea.vmem [#allocation0], 64
    %523 = vst [vmem:[%s522] sm:%s3] %v521
    %s524 = smul.addr 2, 7
    %s525 = scalar_lea.vmem %s0, %s524
    %v526 = vld [vmem:[%s525] sm:%s3]
    %s527 = scalar_lea.vmem [#allocation0], 56
    %528 = vst [vmem:[%s527] sm:%s3] %v526
    %s529 = smul.addr 2, 6
    %s530 = scalar_lea.vmem %s0, %s529
    %v531 = vld [vmem:[%s530] sm:%s3]
    %s532 = scalar_lea.vmem [#allocation0], 48
    %533 = vst [vmem:[%s532] sm:%s3] %v531
    %s534 = smul.addr 2, 5
    %s535 = scalar_lea.vmem %s0, %s534
    %v536 = vld [vmem:[%s535] sm:%s3]
    %s537 = scalar_lea.vmem [#allocation0], 40
    %538 = vst [vmem:[%s537] sm:%s3] %v536
    %s539 = smul.addr 2, 4
    %s540 = scalar_lea.vmem %s0, %s539
    %v541 = vld [vmem:[%s540] sm:%s3]
    %s542 = scalar_lea.vmem [#allocation0], 32
    %543 = vst [vmem:[%s542] sm:%s3] %v541
    %s544 = smul.addr 2, 3
    %s545 = scalar_lea.vmem %s0, %s544
    %v546 = vld [vmem:[%s545] sm:%s3]
    %s547 = scalar_lea.vmem [#allocation0], 24
    %548 = vst [vmem:[%s547] sm:%s3] %v546
    %s549 = smul.addr 2, 2
    %s550 = scalar_lea.vmem %s0, %s549
    %v551 = vld [vmem:[%s550] sm:%s3]
    %s552 = scalar_lea.vmem [#allocation0], 16
    %553 = vst [vmem:[%s552] sm:%s3] %v551
    %s554 = scalar_lea.vmem %s0, 2
    %v555 = vld [vmem:[%s554] sm:%s3]
    %s556 = scalar_lea.vmem [#allocation0], 8
    %557 = vst [vmem:[%s556] sm:%s3] %v555
    %v558 = vld [vmem:[%s0] sm:%s3]
    %559 = vst [vmem:[#allocation0] sm:%s3] %v558
    %v560 = vld [vmem:[#allocation0] ss:$8 sm:$0xf]
    %v561 = vld [vmem:[#allocation0] ss:$8 sm:$0xf0]
    %vm562 = vcmask 1047556
    %v563 = vsel %vm562, %v561, %v560
    %vm564 = vcmask 113664
    %565 = vst.msk [vmem:[%s1] sm:$0xff] %vm564, %v563
    %s566 = scalar_lea.vmem [#allocation0], 64
    %v567 = vld [vmem:[%s566] ss:$8 sm:$0xf]
    %s568 = scalar_lea.vmem [#allocation0], 64
    %v569 = vld [vmem:[%s568] ss:$8 sm:$0xf0]
    %vm570 = vcmask 1047556
    %v571 = vsel %vm570, %v569, %v567
    %vm572 = vcmask 113664
    %s573 = scalar_lea.vmem %s1, 8
    %574 = vst.msk [vmem:[%s573] sm:$0xff] %vm572, %v571
    %s575 = scalar_lea.vmem [#allocation0], 128
    %v576 = vld [vmem:[%s575] ss:$8 sm:$0xf]
    %s577 = scalar_lea.vmem [#allocation0], 128
    %v578 = vld [vmem:[%s577] ss:$8 sm:$0xf0]
    %vm579 = vcmask 1047556
    %v580 = vsel %vm579, %v578, %v576
    %vm581 = vcmask 113664
    %s582 = scalar_lea.vmem %s1, 16
    %583 = vst.msk [vmem:[%s582] sm:$0xff] %vm581, %v580
    %s584 = scalar_lea.vmem [#allocation0], 192
    %v585 = vld [vmem:[%s584] ss:$8 sm:$0xf]
    %s586 = scalar_lea.vmem [#allocation0], 192
    %v587 = vld [vmem:[%s586] ss:$8 sm:$0xf0]
    %vm588 = vcmask 1047556
    %v589 = vsel %vm588, %v587, %v585
    %vm590 = vcmask 113664
    %s591 = scalar_lea.vmem %s1, 24
    %592 = vst.msk [vmem:[%s591] sm:$0xff] %vm590, %v589
    %s593 = scalar_lea.vmem [#allocation0], 256
    %v594 = vld [vmem:[%s593] ss:$8 sm:$0xf]
    %s595 = scalar_lea.vmem [#allocation0], 256
    %v596 = vld [vmem:[%s595] ss:$8 sm:$0xf0]
    %vm597 = vcmask 1047556
    %v598 = vsel %vm597, %v596, %v594
    %vm599 = vcmask 113664
    %s600 = scalar_lea.vmem %s1, 32
    %601 = vst.msk [vmem:[%s600] sm:$0xff] %vm599, %v598
    %s602 = scalar_lea.vmem [#allocation0], 320
    %v603 = vld [vmem:[%s602] ss:$8 sm:$0xf]
    %s604 = scalar_lea.vmem [#allocation0], 320
    %v605 = vld [vmem:[%s604] ss:$8 sm:$0xf0]
    %vm606 = vcmask 1047556
    %v607 = vsel %vm606, %v605, %v603
    %vm608 = vcmask 113664
    %s609 = scalar_lea.vmem %s1, 40
    %610 = vst.msk [vmem:[%s609] sm:$0xff] %vm608, %v607
    %s611 = scalar_lea.vmem [#allocation0], 384
    %v612 = vld [vmem:[%s611] ss:$8 sm:$0xf]
    %s613 = scalar_lea.vmem [#allocation0], 384
    %v614 = vld [vmem:[%s613] ss:$8 sm:$0xf0]
    %vm615 = vcmask 1047556
    %v616 = vsel %vm615, %v614, %v612
    %vm617 = vcmask 113664
    %s618 = scalar_lea.vmem %s1, 48
    %619 = vst.msk [vmem:[%s618] sm:$0xff] %vm617, %v616
    %s620 = scalar_lea.vmem [#allocation0], 448
    %v621 = vld [vmem:[%s620] ss:$8 sm:$0xf]
    %s622 = scalar_lea.vmem [#allocation0], 448
    %v623 = vld [vmem:[%s622] ss:$8 sm:$0xf0]
    %vm624 = vcmask 1047556
    %v625 = vsel %vm624, %v623, %v621
    %vm626 = vcmask 113664
    %s627 = scalar_lea.vmem %s1, 56
    %628 = vst.msk [vmem:[%s627] sm:$0xff] %vm626, %v625
    %s629 = scalar_lea.vmem [#allocation0], 512
    %v630 = vld [vmem:[%s629] ss:$8 sm:$0xf]
    %s631 = scalar_lea.vmem [#allocation0], 512
    %v632 = vld [vmem:[%s631] ss:$8 sm:$0xf0]
    %vm633 = vcmask 1047556
    %v634 = vsel %vm633, %v632, %v630
    %vm635 = vcmask 113664
    %s636 = scalar_lea.vmem %s1, 64
    %637 = vst.msk [vmem:[%s636] sm:$0xff] %vm635, %v634
    %s638 = scalar_lea.vmem [#allocation0], 576
    %v639 = vld [vmem:[%s638] ss:$8 sm:$0xf]
    %s640 = scalar_lea.vmem [#allocation0], 576
    %v641 = vld [vmem:[%s640] ss:$8 sm:$0xf0]
    %vm642 = vcmask 1047556
    %v643 = vsel %vm642, %v641, %v639
    %vm644 = vcmask 113664
    %s645 = scalar_lea.vmem %s1, 72
    %646 = vst.msk [vmem:[%s645] sm:$0xff] %vm644, %v643
    %s647 = scalar_lea.vmem [#allocation0], 640
    %v648 = vld [vmem:[%s647] ss:$8 sm:$0xf]
    %s649 = scalar_lea.vmem [#allocation0], 640
    %v650 = vld [vmem:[%s649] ss:$8 sm:$0xf0]
    %vm651 = vcmask 1047556
    %v652 = vsel %vm651, %v650, %v648
    %vm653 = vcmask 113664
    %s654 = scalar_lea.vmem %s1, 80
    %655 = vst.msk [vmem:[%s654] sm:$0xff] %vm653, %v652
    %s656 = scalar_lea.vmem [#allocation0], 704
    %v657 = vld [vmem:[%s656] ss:$8 sm:$0xf]
    %s658 = scalar_lea.vmem [#allocation0], 704
    %v659 = vld [vmem:[%s658] ss:$8 sm:$0xf0]
    %vm660 = vcmask 1047556
    %v661 = vsel %vm660, %v659, %v657
    %vm662 = vcmask 113664
    %s663 = scalar_lea.vmem %s1, 88
    %664 = vst.msk [vmem:[%s663] sm:$0xff] %vm662, %v661
    %s665 = scalar_lea.vmem [#allocation0], 768
    %v666 = vld [vmem:[%s665] ss:$8 sm:$0xf]
    %s667 = scalar_lea.vmem [#allocation0], 768
    %v668 = vld [vmem:[%s667] ss:$8 sm:$0xf0]
    %vm669 = vcmask 1047556
    %v670 = vsel %vm669, %v668, %v666
    %vm671 = vcmask 113664
    %s672 = scalar_lea.vmem %s1, 96
    %673 = vst.msk [vmem:[%s672] sm:$0xff] %vm671, %v670
    %s674 = scalar_lea.vmem [#allocation0], 832
    %v675 = vld [vmem:[%s674] ss:$8 sm:$0xf]
    %s676 = scalar_lea.vmem [#allocation0], 832
    %v677 = vld [vmem:[%s676] ss:$8 sm:$0xf0]
    %vm678 = vcmask 1047556
    %v679 = vsel %vm678, %v677, %v675
    %vm680 = vcmask 113664
    %s681 = scalar_lea.vmem %s1, 104
    %682 = vst.msk [vmem:[%s681] sm:$0xff] %vm680, %v679
    %s683 = scalar_lea.vmem [#allocation0], 1
    %v684 = vld [vmem:[%s683] ss:$8 sm:$0xf]
    %s685 = scalar_lea.vmem [#allocation0], 1
    %v686 = vld [vmem:[%s685] ss:$8 sm:$0xf0]
    %vm687 = vcmask 1047556
    %v688 = vsel %vm687, %v686, %v684
    %689 = vrot.lane.b32.xlu0 %v688, 14
    %v690 = vpop.permute.xlu0 %689
    %vm691 = vcmask 228464
    %692 = vst.msk [vmem:[%s1] sm:$0xff] %vm691, %v690
    %s693 = scalar_lea.vmem [#allocation0], 257
    %v694 = vld [vmem:[%s693] ss:$8 sm:$0xf]
    %s695 = scalar_lea.vmem [#allocation0], 257
    %v696 = vld [vmem:[%s695] ss:$8 sm:$0xf0]
    %vm697 = vcmask 1047556
    %v698 = vsel %vm697, %v696, %v694
    %699 = vrot.lane.b32.xlu0 %v698, 14
    %v700 = vpop.permute.xlu0 %699
    %vm701 = vcmask 228464
    %s702 = scalar_lea.vmem %s1, 32
    %703 = vst.msk [vmem:[%s702] sm:$0xff] %vm701, %v700
    %s704 = scalar_lea.vmem [#allocation0], 513
    %v705 = vld [vmem:[%s704] ss:$8 sm:$0xf]
    %s706 = scalar_lea.vmem [#allocation0], 513
    %v707 = vld [vmem:[%s706] ss:$8 sm:$0xf0]
    %vm708 = vcmask 1047556
    %v709 = vsel %vm708, %v707, %v705
    %710 = vrot.lane.b32.xlu0 %v709, 14
    %v711 = vpop.permute.xlu0 %710
    %vm712 = vcmask 228464
    %s713 = scalar_lea.vmem %s1, 64
    %714 = vst.msk [vmem:[%s713] sm:$0xff] %vm712, %v711
    %s715 = scalar_lea.vmem [#allocation0], 769
    %v716 = vld [vmem:[%s715] ss:$8 sm:$0xf]
    %s717 = scalar_lea.vmem [#allocation0], 769
    %v718 = vld [vmem:[%s717] ss:$8 sm:$0xf0]
    %vm719 = vcmask 1047556
    %v720 = vsel %vm719, %v718, %v716
    %721 = vrot.lane.b32.xlu0 %v720, 14
    %v722 = vpop.permute.xlu0 %721
    %vm723 = vcmask 228464
    %s724 = scalar_lea.vmem %s1, 96
    %725 = vst.msk [vmem:[%s724] sm:$0xff] %vm723, %v722
    %s726 = scalar_lea.vmem [#allocation0], 65
    %v727 = vld [vmem:[%s726] ss:$8 sm:$0xf]
    %s728 = scalar_lea.vmem [#allocation0], 65
    %v729 = vld [vmem:[%s728] ss:$8 sm:$0xf0]
    %vm730 = vcmask 1047556
    %v731 = vsel %vm730, %v729, %v727
    %732 = vrot.lane.b32.xlu0 %v731, 14
    %v733 = vpop.permute.xlu0 %732
    %vm734 = vcmask 228464
    %s735 = scalar_lea.vmem %s1, 8
    %736 = vst.msk [vmem:[%s735] sm:$0xff] %vm734, %v733
    %s737 = scalar_lea.vmem [#allocation0], 321
    %v738 = vld [vmem:[%s737] ss:$8 sm:$0xf]
    %s739 = scalar_lea.vmem [#allocation0], 321
    %v740 = vld [vmem:[%s739] ss:$8 sm:$0xf0]
    %vm741 = vcmask 1047556
    %v742 = vsel %vm741, %v740, %v738
    %743 = vrot.lane.b32.xlu0 %v742, 14
    %v744 = vpop.permute.xlu0 %743
    %vm745 = vcmask 228464
    %s746 = scalar_lea.vmem %s1, 40
    %747 = vst.msk [vmem:[%s746] sm:$0xff] %vm745, %v744
    %s748 = scalar_lea.vmem [#allocation0], 577
    %v749 = vld [vmem:[%s748] ss:$8 sm:$0xf]
    %s750 = scalar_lea.vmem [#allocation0], 577
    %v751 = vld [vmem:[%s750] ss:$8 sm:$0xf0]
    %vm752 = vcmask 1047556
    %v753 = vsel %vm752, %v751, %v749
    %754 = vrot.lane.b32.xlu0 %v753, 14
    %v755 = vpop.permute.xlu0 %754
    %vm756 = vcmask 228464
    %s757 = scalar_lea.vmem %s1, 72
    %758 = vst.msk [vmem:[%s757] sm:$0xff] %vm756, %v755
    %s759 = scalar_lea.vmem [#allocation0], 833
    %v760 = vld [vmem:[%s759] ss:$8 sm:$0xf]
    %s761 = scalar_lea.vmem [#allocation0], 833
    %v762 = vld [vmem:[%s761] ss:$8 sm:$0xf0]
    %vm763 = vcmask 1047556
    %v764 = vsel %vm763, %v762, %v760
    %765 = vrot.lane.b32.xlu0 %v764, 14
    %v766 = vpop.permute.xlu0 %765
    %vm767 = vcmask 228464
    %s768 = scalar_lea.vmem %s1, 104
    %769 = vst.msk [vmem:[%s768] sm:$0xff] %vm767, %v766
    %s770 = scalar_lea.vmem [#allocation0], 129
    %v771 = vld [vmem:[%s770] ss:$8 sm:$0xf]
    %s772 = scalar_lea.vmem [#allocation0], 129
    %v773 = vld [vmem:[%s772] ss:$8 sm:$0xf0]
    %vm774 = vcmask 1047556
    %v775 = vsel %vm774, %v773, %v771
    %776 = vrot.lane.b32.xlu0 %v775, 14
    %v777 = vpop.permute.xlu0 %776
    %vm778 = vcmask 228464
    %s779 = scalar_lea.vmem %s1, 16
    %780 = vst.msk [vmem:[%s779] sm:$0xff] %vm778, %v777
    %s781 = scalar_lea.vmem [#allocation0], 385
    %v782 = vld [vmem:[%s781] ss:$8 sm:$0xf]
    %s783 = scalar_lea.vmem [#allocation0], 385
    %v784 = vld [vmem:[%s783] ss:$8 sm:$0xf0]
    %vm785 = vcmask 1047556
    %v786 = vsel %vm785, %v784, %v782
    %787 = vrot.lane.b32.xlu0 %v786, 14
    %v788 = vpop.permute.xlu0 %787
    %vm789 = vcmask 228464
    %s790 = scalar_lea.vmem %s1, 48
    %791 = vst.msk [vmem:[%s790] sm:$0xff] %vm789, %v788
    %s792 = scalar_lea.vmem [#allocation0], 641
    %v793 = vld [vmem:[%s792] ss:$8 sm:$0xf]
    %s794 = scalar_lea.vmem [#allocation0], 641
    %v795 = vld [vmem:[%s794] ss:$8 sm:$0xf0]
    %vm796 = vcmask 1047556
    %v797 = vsel %vm796, %v795, %v793
    %798 = vrot.lane.b32.xlu0 %v797, 14
    %v799 = vpop.permute.xlu0 %798
    %vm800 = vcmask 228464
    %s801 = scalar_lea.vmem %s1, 80
    %802 = vst.msk [vmem:[%s801] sm:$0xff] %vm800, %v799
    %s803 = scalar_lea.vmem [#allocation0], 193
    %v804 = vld [vmem:[%s803] ss:$8 sm:$0xf]
    %s805 = scalar_lea.vmem [#allocation0], 193
    %v806 = vld [vmem:[%s805] ss:$8 sm:$0xf0]
    %vm807 = vcmask 1047556
    %v808 = vsel %vm807, %v806, %v804
    %809 = vrot.lane.b32.xlu0 %v808, 14
    %v810 = vpop.permute.xlu0 %809
    %vm811 = vcmask 228464
    %s812 = scalar_lea.vmem %s1, 24
    %813 = vst.msk [vmem:[%s812] sm:$0xff] %vm811, %v810
    %s814 = scalar_lea.vmem [#allocation0], 449
    %v815 = vld [vmem:[%s814] ss:$8 sm:$0xf]
    %s816 = scalar_lea.vmem [#allocation0], 449
    %v817 = vld [vmem:[%s816] ss:$8 sm:$0xf0]
    %vm818 = vcmask 1047556
    %v819 = vsel %vm818, %v817, %v815
    %820 = vrot.lane.b32.xlu0 %v819, 14
    %v821 = vpop.permute.xlu0 %820
    %vm822 = vcmask 228464
    %s823 = scalar_lea.vmem %s1, 56
    %824 = vst.msk [vmem:[%s823] sm:$0xff] %vm822, %v821
    %s825 = scalar_lea.vmem [#allocation0], 705
    %v826 = vld [vmem:[%s825] ss:$8 sm:$0xf]
    %s827 = scalar_lea.vmem [#allocation0], 705
    %v828 = vld [vmem:[%s827] ss:$8 sm:$0xf0]
    %vm829 = vcmask 1047556
    %v830 = vsel %vm829, %v828, %v826
    %831 = vrot.lane.b32.xlu0 %v830, 14
    %v832 = vpop.permute.xlu0 %831
    %vm833 = vcmask 228464
    %s834 = scalar_lea.vmem %s1, 88
    %835 = vst.msk [vmem:[%s834] sm:$0xff] %vm833, %v832

// kernel: tile.35
$region0: #{tile.35}
  %s0 = inlined_call_operand.vmem [shape: f32[5,2,28,28], index: 0, kind: input, shape index: {}]
  %s1 = inlined_call_operand.vmem [shape: f32[5,56,28], index: 1, kind: output, shape index: {}]
  $region1: #{tile.35} parent=0
    #allocation0 [shape = 'u8[573440]{0}', space=vmem, size = 0x8c000, scoped, tag = 'scoped mem for input reshape']
    %s3 = sshllo.u32 0, 2
    %s4 = smul.addr 2, 139
    %s5 = scalar_lea.vmem %s0, %s4
    %v6 = vld [vmem:[%s5] sm:%s3]
    %s7 = scalar_lea.vmem [#allocation0], 1112
    %8 = vst [vmem:[%s7] sm:%s3] %v6
    %s9 = smul.addr 2, 138
    %s10 = scalar_lea.vmem %s0, %s9
    %v11 = vld [vmem:[%s10] sm:%s3]
    %s12 = scalar_lea.vmem [#allocation0], 1104
    %13 = vst [vmem:[%s12] sm:%s3] %v11
    %s14 = smul.addr 2, 137
    %s15 = scalar_lea.vmem %s0, %s14
    %v16 = vld [vmem:[%s15] sm:%s3]
    %s17 = scalar_lea.vmem [#allocation0], 1096
    %18 = vst [vmem:[%s17] sm:%s3] %v16
    %s19 = smul.addr 2, 136
    %s20 = scalar_lea.vmem %s0, %s19
    %v21 = vld [vmem:[%s20] sm:%s3]
    %s22 = scalar_lea.vmem [#allocation0], 1088
    %23 = vst [vmem:[%s22] sm:%s3] %v21
    %s24 = smul.addr 2, 135
    %s25 = scalar_lea.vmem %s0, %s24
    %v26 = vld [vmem:[%s25] sm:%s3]
    %s27 = scalar_lea.vmem [#allocation0], 1080
    %28 = vst [vmem:[%s27] sm:%s3] %v26
    %s29 = smul.addr 2, 134
    %s30 = scalar_lea.vmem %s0, %s29
    %v31 = vld [vmem:[%s30] sm:%s3]
    %s32 = scalar_lea.vmem [#allocation0], 1072
    %33 = vst [vmem:[%s32] sm:%s3] %v31
    %s34 = smul.addr 2, 133
    %s35 = scalar_lea.vmem %s0, %s34
    %v36 = vld [vmem:[%s35] sm:%s3]
    %s37 = scalar_lea.vmem [#allocation0], 1064
    %38 = vst [vmem:[%s37] sm:%s3] %v36
    %s39 = smul.addr 2, 132
    %s40 = scalar_lea.vmem %s0, %s39
    %v41 = vld [vmem:[%s40] sm:%s3]
    %s42 = scalar_lea.vmem [#allocation0], 1056
    %43 = vst [vmem:[%s42] sm:%s3] %v41
    %s44 = smul.addr 2, 131
    %s45 = scalar_lea.vmem %s0, %s44
    %v46 = vld [vmem:[%s45] sm:%s3]
    %s47 = scalar_lea.vmem [#allocation0], 1048
    %48 = vst [vmem:[%s47] sm:%s3] %v46
    %s49 = smul.addr 2, 130
    %s50 = scalar_lea.vmem %s0, %s49
    %v51 = vld [vmem:[%s50] sm:%s3]
    %s52 = scalar_lea.vmem [#allocation0], 1040
    %53 = vst [vmem:[%s52] sm:%s3] %v51
    %s54 = smul.addr 2, 129
    %s55 = scalar_lea.vmem %s0, %s54
    %v56 = vld [vmem:[%s55] sm:%s3]
    %s57 = scalar_lea.vmem [#allocation0], 1032
    %58 = vst [vmem:[%s57] sm:%s3] %v56
    %s59 = smul.addr 2, 128
    %s60 = scalar_lea.vmem %s0, %s59
    %v61 = vld [vmem:[%s60] sm:%s3]
    %s62 = scalar_lea.vmem [#allocation0], 1024
    %63 = vst [vmem:[%s62] sm:%s3] %v61
    %s64 = smul.addr 2, 127
    %s65 = scalar_lea.vmem %s0, %s64
    %v66 = vld [vmem:[%s65] sm:%s3]
    %s67 = scalar_lea.vmem [#allocation0], 1016
    %68 = vst [vmem:[%s67] sm:%s3] %v66
    %s69 = smul.addr 2, 126
    %s70 = scalar_lea.vmem %s0, %s69
    %v71 = vld [vmem:[%s70] sm:%s3]
    %s72 = scalar_lea.vmem [#allocation0], 1008
    %73 = vst [vmem:[%s72] sm:%s3] %v71
    %s74 = smul.addr 2, 125
    %s75 = scalar_lea.vmem %s0, %s74
    %v76 = vld [vmem:[%s75] sm:%s3]
    %s77 = scalar_lea.vmem [#allocation0], 1000
    %78 = vst [vmem:[%s77] sm:%s3] %v76
    %s79 = smul.addr 2, 124
    %s80 = scalar_lea.vmem %s0, %s79
    %v81 = vld [vmem:[%s80] sm:%s3]
    %s82 = scalar_lea.vmem [#allocation0], 992
    %83 = vst [vmem:[%s82] sm:%s3] %v81
    %s84 = smul.addr 2, 123
    %s85 = scalar_lea.vmem %s0, %s84
    %v86 = vld [vmem:[%s85] sm:%s3]
    %s87 = scalar_lea.vmem [#allocation0], 984
    %88 = vst [vmem:[%s87] sm:%s3] %v86
    %s89 = smul.addr 2, 122
    %s90 = scalar_lea.vmem %s0, %s89
    %v91 = vld [vmem:[%s90] sm:%s3]
    %s92 = scalar_lea.vmem [#allocation0], 976
    %93 = vst [vmem:[%s92] sm:%s3] %v91
    %s94 = smul.addr 2, 121
    %s95 = scalar_lea.vmem %s0, %s94
    %v96 = vld [vmem:[%s95] sm:%s3]
    %s97 = scalar_lea.vmem [#allocation0], 968
    %98 = vst [vmem:[%s97] sm:%s3] %v96
    %s99 = smul.addr 2, 120
    %s100 = scalar_lea.vmem %s0, %s99
    %v101 = vld [vmem:[%s100] sm:%s3]
    %s102 = scalar_lea.vmem [#allocation0], 960
    %103 = vst [vmem:[%s102] sm:%s3] %v101
    %s104 = smul.addr 2, 119
    %s105 = scalar_lea.vmem %s0, %s104
    %v106 = vld [vmem:[%s105] sm:%s3]
    %s107 = scalar_lea.vmem [#allocation0], 952
    %108 = vst [vmem:[%s107] sm:%s3] %v106
    %s109 = smul.addr 2, 118
    %s110 = scalar_lea.vmem %s0, %s109
    %v111 = vld [vmem:[%s110] sm:%s3]
    %s112 = scalar_lea.vmem [#allocation0], 944
    %113 = vst [vmem:[%s112] sm:%s3] %v111
    %s114 = smul.addr 2, 117
    %s115 = scalar_lea.vmem %s0, %s114
    %v116 = vld [vmem:[%s115] sm:%s3]
    %s117 = scalar_lea.vmem [#allocation0], 936
    %118 = vst [vmem:[%s117] sm:%s3] %v116
    %s119 = smul.addr 2, 116
    %s120 = scalar_lea.vmem %s0, %s119
    %v121 = vld [vmem:[%s120] sm:%s3]
    %s122 = scalar_lea.vmem [#allocation0], 928
    %123 = vst [vmem:[%s122] sm:%s3] %v121
    %s124 = smul.addr 2, 115
    %s125 = scalar_lea.vmem %s0, %s124
    %v126 = vld [vmem:[%s125] sm:%s3]
    %s127 = scalar_lea.vmem [#allocation0], 920
    %128 = vst [vmem:[%s127] sm:%s3] %v126
    %s129 = smul.addr 2, 114
    %s130 = scalar_lea.vmem %s0, %s129
    %v131 = vld [vmem:[%s130] sm:%s3]
    %s132 = scalar_lea.vmem [#allocation0], 912
    %133 = vst [vmem:[%s132] sm:%s3] %v131
    %s134 = smul.addr 2, 113
    %s135 = scalar_lea.vmem %s0, %s134
    %v136 = vld [vmem:[%s135] sm:%s3]
    %s137 = scalar_lea.vmem [#allocation0], 904
    %138 = vst [vmem:[%s137] sm:%s3] %v136
    %s139 = smul.addr 2, 112
    %s140 = scalar_lea.vmem %s0, %s139
    %v141 = vld [vmem:[%s140] sm:%s3]
    %s142 = scalar_lea.vmem [#allocation0], 896
    %143 = vst [vmem:[%s142] sm:%s3] %v141
    %s144 = smul.addr 2, 111
    %s145 = scalar_lea.vmem %s0, %s144
    %v146 = vld [vmem:[%s145] sm:%s3]
    %s147 = scalar_lea.vmem [#allocation0], 888
    %148 = vst [vmem:[%s147] sm:%s3] %v146
    %s149 = smul.addr 2, 110
    %s150 = scalar_lea.vmem %s0, %s149
    %v151 = vld [vmem:[%s150] sm:%s3]
    %s152 = scalar_lea.vmem [#allocation0], 880
    %153 = vst [vmem:[%s152] sm:%s3] %v151
    %s154 = smul.addr 2, 109
    %s155 = scalar_lea.vmem %s0, %s154
    %v156 = vld [vmem:[%s155] sm:%s3]
    %s157 = scalar_lea.vmem [#allocation0], 872
    %158 = vst [vmem:[%s157] sm:%s3] %v156
    %s159 = smul.addr 2, 108
    %s160 = scalar_lea.vmem %s0, %s159
    %v161 = vld [vmem:[%s160] sm:%s3]
    %s162 = scalar_lea.vmem [#allocation0], 864
    %163 = vst [vmem:[%s162] sm:%s3] %v161
    %s164 = smul.addr 2, 107
    %s165 = scalar_lea.vmem %s0, %s164
    %v166 = vld [vmem:[%s165] sm:%s3]
    %s167 = scalar_lea.vmem [#allocation0], 856
    %168 = vst [vmem:[%s167] sm:%s3] %v166
    %s169 = smul.addr 2, 106
    %s170 = scalar_lea.vmem %s0, %s169
    %v171 = vld [vmem:[%s170] sm:%s3]
    %s172 = scalar_lea.vmem [#allocation0], 848
    %173 = vst [vmem:[%s172] sm:%s3] %v171
    %s174 = smul.addr 2, 105
    %s175 = scalar_lea.vmem %s0, %s174
    %v176 = vld [vmem:[%s175] sm:%s3]
    %s177 = scalar_lea.vmem [#allocation0], 840
    %178 = vst [vmem:[%s177] sm:%s3] %v176
    %s179 = smul.addr 2, 104
    %s180 = scalar_lea.vmem %s0, %s179
    %v181 = vld [vmem:[%s180] sm:%s3]
    %s182 = scalar_lea.vmem [#allocation0], 832
    %183 = vst [vmem:[%s182] sm:%s3] %v181
    %s184 = smul.addr 2, 103
    %s185 = scalar_lea.vmem %s0, %s184
    %v186 = vld [vmem:[%s185] sm:%s3]
    %s187 = scalar_lea.vmem [#allocation0], 824
    %188 = vst [vmem:[%s187] sm:%s3] %v186
    %s189 = smul.addr 2, 102
    %s190 = scalar_lea.vmem %s0, %s189
    %v191 = vld [vmem:[%s190] sm:%s3]
    %s192 = scalar_lea.vmem [#allocation0], 816
    %193 = vst [vmem:[%s192] sm:%s3] %v191
    %s194 = smul.addr 2, 101
    %s195 = scalar_lea.vmem %s0, %s194
    %v196 = vld [vmem:[%s195] sm:%s3]
    %s197 = scalar_lea.vmem [#allocation0], 808
    %198 = vst [vmem:[%s197] sm:%s3] %v196
    %s199 = smul.addr 2, 100
    %s200 = scalar_lea.vmem %s0, %s199
    %v201 = vld [vmem:[%s200] sm:%s3]
    %s202 = scalar_lea.vmem [#allocation0], 800
    %203 = vst [vmem:[%s202] sm:%s3] %v201
    %s204 = smul.addr 2, 99
    %s205 = scalar_lea.vmem %s0, %s204
    %v206 = vld [vmem:[%s205] sm:%s3]
    %s207 = scalar_lea.vmem [#allocation0], 792
    %208 = vst [vmem:[%s207] sm:%s3] %v206
    %s209 = smul.addr 2, 98
    %s210 = scalar_lea.vmem %s0, %s209
    %v211 = vld [vmem:[%s210] sm:%s3]
    %s212 = scalar_lea.vmem [#allocation0], 784
    %213 = vst [vmem:[%s212] sm:%s3] %v211
    %s214 = smul.addr 2, 97
    %s215 = scalar_lea.vmem %s0, %s214
    %v216 = vld [vmem:[%s215] sm:%s3]
    %s217 = scalar_lea.vmem [#allocation0], 776
    %218 = vst [vmem:[%s217] sm:%s3] %v216
    %s219 = smul.addr 2, 96
    %s220 = scalar_lea.vmem %s0, %s219
    %v221 = vld [vmem:[%s220] sm:%s3]
    %s222 = scalar_lea.vmem [#allocation0], 768
    %223 = vst [vmem:[%s222] sm:%s3] %v221
    %s224 = smul.addr 2, 95
    %s225 = scalar_lea.vmem %s0, %s224
    %v226 = vld [vmem:[%s225] sm:%s3]
    %s227 = scalar_lea.vmem [#allocation0], 760
    %228 = vst [vmem:[%s227] sm:%s3] %v226
    %s229 = smul.addr 2, 94
    %s230 = scalar_lea.vmem %s0, %s229
    %v231 = vld [vmem:[%s230] sm:%s3]
    %s232 = scalar_lea.vmem [#allocation0], 752
    %233 = vst [vmem:[%s232] sm:%s3] %v231
    %s234 = smul.addr 2, 93
    %s235 = scalar_lea.vmem %s0, %s234
    %v236 = vld [vmem:[%s235] sm:%s3]
    %s237 = scalar_lea.vmem [#allocation0], 744
    %238 = vst [vmem:[%s237] sm:%s3] %v236
    %s239 = smul.addr 2, 92
    %s240 = scalar_lea.vmem %s0, %s239
    %v241 = vld [vmem:[%s240] sm:%s3]
    %s242 = scalar_lea.vmem [#allocation0], 736
    %243 = vst [vmem:[%s242] sm:%s3] %v241
    %s244 = smul.addr 2, 91
    %s245 = scalar_lea.vmem %s0, %s244
    %v246 = vld [vmem:[%s245] sm:%s3]
    %s247 = scalar_lea.vmem [#allocation0], 728
    %248 = vst [vmem:[%s247] sm:%s3] %v246
    %s249 = smul.addr 2, 90
    %s250 = scalar_lea.vmem %s0, %s249
    %v251 = vld [vmem:[%s250] sm:%s3]
    %s252 = scalar_lea.vmem [#allocation0], 720
    %253 = vst [vmem:[%s252] sm:%s3] %v251
    %s254 = smul.addr 2, 89
    %s255 = scalar_lea.vmem %s0, %s254
    %v256 = vld [vmem:[%s255] sm:%s3]
    %s257 = scalar_lea.vmem [#allocation0], 712
    %258 = vst [vmem:[%s257] sm:%s3] %v256
    %s259 = smul.addr 2, 88
    %s260 = scalar_lea.vmem %s0, %s259
    %v261 = vld [vmem:[%s260] sm:%s3]
    %s262 = scalar_lea.vmem [#allocation0], 704
    %263 = vst [vmem:[%s262] sm:%s3] %v261
    %s264 = smul.addr 2, 87
    %s265 = scalar_lea.vmem %s0, %s264
    %v266 = vld [vmem:[%s265] sm:%s3]
    %s267 = scalar_lea.vmem [#allocation0], 696
    %268 = vst [vmem:[%s267] sm:%s3] %v266
    %s269 = smul.addr 2, 86
    %s270 = scalar_lea.vmem %s0, %s269
    %v271 = vld [vmem:[%s270] sm:%s3]
    %s272 = scalar_lea.vmem [#allocation0], 688
    %273 = vst [vmem:[%s272] sm:%s3] %v271
    %s274 = smul.addr 2, 85
    %s275 = scalar_lea.vmem %s0, %s274
    %v276 = vld [vmem:[%s275] sm:%s3]
    %s277 = scalar_lea.vmem [#allocation0], 680
    %278 = vst [vmem:[%s277] sm:%s3] %v276
    %s279 = smul.addr 2, 84
    %s280 = scalar_lea.vmem %s0, %s279
    %v281 = vld [vmem:[%s280] sm:%s3]
    %s282 = scalar_lea.vmem [#allocation0], 672
    %283 = vst [vmem:[%s282] sm:%s3] %v281
    %s284 = smul.addr 2, 83
    %s285 = scalar_lea.vmem %s0, %s284
    %v286 = vld [vmem:[%s285] sm:%s3]
    %s287 = scalar_lea.vmem [#allocation0], 664
    %288 = vst [vmem:[%s287] sm:%s3] %v286
    %s289 = smul.addr 2, 82
    %s290 = scalar_lea.vmem %s0, %s289
    %v291 = vld [vmem:[%s290] sm:%s3]
    %s292 = scalar_lea.vmem [#allocation0], 656
    %293 = vst [vmem:[%s292] sm:%s3] %v291
    %s294 = smul.addr 2, 81
    %s295 = scalar_lea.vmem %s0, %s294
    %v296 = vld [vmem:[%s295] sm:%s3]
    %s297 = scalar_lea.vmem [#allocation0], 648
    %298 = vst [vmem:[%s297] sm:%s3] %v296
    %s299 = smul.addr 2, 80
    %s300 = scalar_lea.vmem %s0, %s299
    %v301 = vld [vmem:[%s300] sm:%s3]
    %s302 = scalar_lea.vmem [#allocation0], 640
    %303 = vst [vmem:[%s302] sm:%s3] %v301
    %s304 = smul.addr 2, 79
    %s305 = scalar_lea.vmem %s0, %s304
    %v306 = vld [vmem:[%s305] sm:%s3]
    %s307 = scalar_lea.vmem [#allocation0], 632
    %308 = vst [vmem:[%s307] sm:%s3] %v306
    %s309 = smul.addr 2, 78
    %s310 = scalar_lea.vmem %s0, %s309
    %v311 = vld [vmem:[%s310] sm:%s3]
    %s312 = scalar_lea.vmem [#allocation0], 624
    %313 = vst [vmem:[%s312] sm:%s3] %v311
    %s314 = smul.addr 2, 77
    %s315 = scalar_lea.vmem %s0, %s314
    %v316 = vld [vmem:[%s315] sm:%s3]
    %s317 = scalar_lea.vmem [#allocation0], 616
    %318 = vst [vmem:[%s317] sm:%s3] %v316
    %s319 = smul.addr 2, 76
    %s320 = scalar_lea.vmem %s0, %s319
    %v321 = vld [vmem:[%s320] sm:%s3]
    %s322 = scalar_lea.vmem [#allocation0], 608
    %323 = vst [vmem:[%s322] sm:%s3] %v321
    %s324 = smul.addr 2, 75
    %s325 = scalar_lea.vmem %s0, %s324
    %v326 = vld [vmem:[%s325] sm:%s3]
    %s327 = scalar_lea.vmem [#allocation0], 600
    %328 = vst [vmem:[%s327] sm:%s3] %v326
    %s329 = smul.addr 2, 74
    %s330 = scalar_lea.vmem %s0, %s329
    %v331 = vld [vmem:[%s330] sm:%s3]
    %s332 = scalar_lea.vmem [#allocation0], 592
    %333 = vst [vmem:[%s332] sm:%s3] %v331
    %s334 = smul.addr 2, 73
    %s335 = scalar_lea.vmem %s0, %s334
    %v336 = vld [vmem:[%s335] sm:%s3]
    %s337 = scalar_lea.vmem [#allocation0], 584
    %338 = vst [vmem:[%s337] sm:%s3] %v336
    %s339 = smul.addr 2, 72
    %s340 = scalar_lea.vmem %s0, %s339
    %v341 = vld [vmem:[%s340] sm:%s3]
    %s342 = scalar_lea.vmem [#allocation0], 576
    %343 = vst [vmem:[%s342] sm:%s3] %v341
    %s344 = smul.addr 2, 71
    %s345 = scalar_lea.vmem %s0, %s344
    %v346 = vld [vmem:[%s345] sm:%s3]
    %s347 = scalar_lea.vmem [#allocation0], 568
    %348 = vst [vmem:[%s347] sm:%s3] %v346
    %s349 = smul.addr 2, 70
    %s350 = scalar_lea.vmem %s0, %s349
    %v351 = vld [vmem:[%s350] sm:%s3]
    %s352 = scalar_lea.vmem [#allocation0], 560
    %353 = vst [vmem:[%s352] sm:%s3] %v351
    %s354 = smul.addr 2, 69
    %s355 = scalar_lea.vmem %s0, %s354
    %v356 = vld [vmem:[%s355] sm:%s3]
    %s357 = scalar_lea.vmem [#allocation0], 552
    %358 = vst [vmem:[%s357] sm:%s3] %v356
    %s359 = smul.addr 2, 68
    %s360 = scalar_lea.vmem %s0, %s359
    %v361 = vld [vmem:[%s360] sm:%s3]
    %s362 = scalar_lea.vmem [#allocation0], 544
    %363 = vst [vmem:[%s362] sm:%s3] %v361
    %s364 = smul.addr 2, 67
    %s365 = scalar_lea.vmem %s0, %s364
    %v366 = vld [vmem:[%s365] sm:%s3]
    %s367 = scalar_lea.vmem [#allocation0], 536
    %368 = vst [vmem:[%s367] sm:%s3] %v366
    %s369 = smul.addr 2, 66
    %s370 = scalar_lea.vmem %s0, %s369
    %v371 = vld [vmem:[%s370] sm:%s3]
    %s372 = scalar_lea.vmem [#allocation0], 528
    %373 = vst [vmem:[%s372] sm:%s3] %v371
    %s374 = smul.addr 2, 65
    %s375 = scalar_lea.vmem %s0, %s374
    %v376 = vld [vmem:[%s375] sm:%s3]
    %s377 = scalar_lea.vmem [#allocation0], 520
    %378 = vst [vmem:[%s377] sm:%s3] %v376
    %s379 = smul.addr 2, 64
    %s380 = scalar_lea.vmem %s0, %s379
    %v381 = vld [vmem:[%s380] sm:%s3]
    %s382 = scalar_lea.vmem [#allocation0], 512
    %383 = vst [vmem:[%s382] sm:%s3] %v381
    %s384 = smul.addr 2, 63
    %s385 = scalar_lea.vmem %s0, %s384
    %v386 = vld [vmem:[%s385] sm:%s3]
    %s387 = scalar_lea.vmem [#allocation0], 504
    %388 = vst [vmem:[%s387] sm:%s3] %v386
    %s389 = smul.addr 2, 62
    %s390 = scalar_lea.vmem %s0, %s389
    %v391 = vld [vmem:[%s390] sm:%s3]
    %s392 = scalar_lea.vmem [#allocation0], 496
    %393 = vst [vmem:[%s392] sm:%s3] %v391
    %s394 = smul.addr 2, 61
    %s395 = scalar_lea.vmem %s0, %s394
    %v396 = vld [vmem:[%s395] sm:%s3]
    %s397 = scalar_lea.vmem [#allocation0], 488
    %398 = vst [vmem:[%s397] sm:%s3] %v396
    %s399 = smul.addr 2, 60
    %s400 = scalar_lea.vmem %s0, %s399
    %v401 = vld [vmem:[%s400] sm:%s3]
    %s402 = scalar_lea.vmem [#allocation0], 480
    %403 = vst [vmem:[%s402] sm:%s3] %v401
    %s404 = smul.addr 2, 59
    %s405 = scalar_lea.vmem %s0, %s404
    %v406 = vld [vmem:[%s405] sm:%s3]
    %s407 = scalar_lea.vmem [#allocation0], 472
    %408 = vst [vmem:[%s407] sm:%s3] %v406
    %s409 = smul.addr 2, 58
    %s410 = scalar_lea.vmem %s0, %s409
    %v411 = vld [vmem:[%s410] sm:%s3]
    %s412 = scalar_lea.vmem [#allocation0], 464
    %413 = vst [vmem:[%s412] sm:%s3] %v411
    %s414 = smul.addr 2, 57
    %s415 = scalar_lea.vmem %s0, %s414
    %v416 = vld [vmem:[%s415] sm:%s3]
    %s417 = scalar_lea.vmem [#allocation0], 456
    %418 = vst [vmem:[%s417] sm:%s3] %v416
    %s419 = smul.addr 2, 56
    %s420 = scalar_lea.vmem %s0, %s419
    %v421 = vld [vmem:[%s420] sm:%s3]
    %s422 = scalar_lea.vmem [#allocation0], 448
    %423 = vst [vmem:[%s422] sm:%s3] %v421
    %s424 = smul.addr 2, 55
    %s425 = scalar_lea.vmem %s0, %s424
    %v426 = vld [vmem:[%s425] sm:%s3]
    %s427 = scalar_lea.vmem [#allocation0], 440
    %428 = vst [vmem:[%s427] sm:%s3] %v426
    %s429 = smul.addr 2, 54
    %s430 = scalar_lea.vmem %s0, %s429
    %v431 = vld [vmem:[%s430] sm:%s3]
    %s432 = scalar_lea.vmem [#allocation0], 432
    %433 = vst [vmem:[%s432] sm:%s3] %v431
    %s434 = smul.addr 2, 53
    %s435 = scalar_lea.vmem %s0, %s434
    %v436 = vld [vmem:[%s435] sm:%s3]
    %s437 = scalar_lea.vmem [#allocation0], 424
    %438 = vst [vmem:[%s437] sm:%s3] %v436
    %s439 = smul.addr 2, 52
    %s440 = scalar_lea.vmem %s0, %s439
    %v441 = vld [vmem:[%s440] sm:%s3]
    %s442 = scalar_lea.vmem [#allocation0], 416
    %443 = vst [vmem:[%s442] sm:%s3] %v441
    %s444 = smul.addr 2, 51
    %s445 = scalar_lea.vmem %s0, %s444
    %v446 = vld [vmem:[%s445] sm:%s3]
    %s447 = scalar_lea.vmem [#allocation0], 408
    %448 = vst [vmem:[%s447] sm:%s3] %v446
    %s449 = smul.addr 2, 50
    %s450 = scalar_lea.vmem %s0, %s449
    %v451 = vld [vmem:[%s450] sm:%s3]
    %s452 = scalar_lea.vmem [#allocation0], 400
    %453 = vst [vmem:[%s452] sm:%s3] %v451
    %s454 = smul.addr 2, 49
    %s455 = scalar_lea.vmem %s0, %s454
    %v456 = vld [vmem:[%s455] sm:%s3]
    %s457 = scalar_lea.vmem [#allocation0], 392
    %458 = vst [vmem:[%s457] sm:%s3] %v456
    %s459 = smul.addr 2, 48
    %s460 = scalar_lea.vmem %s0, %s459
    %v461 = vld [vmem:[%s460] sm:%s3]
    %s462 = scalar_lea.vmem [#allocation0], 384
    %463 = vst [vmem:[%s462] sm:%s3] %v461
    %s464 = smul.addr 2, 47
    %s465 = scalar_lea.vmem %s0, %s464
    %v466 = vld [vmem:[%s465] sm:%s3]
    %s467 = scalar_lea.vmem [#allocation0], 376
    %468 = vst [vmem:[%s467] sm:%s3] %v466
    %s469 = smul.addr 2, 46
    %s470 = scalar_lea.vmem %s0, %s469
    %v471 = vld [vmem:[%s470] sm:%s3]
    %s472 = scalar_lea.vmem [#allocation0], 368
    %473 = vst [vmem:[%s472] sm:%s3] %v471
    %s474 = smul.addr 2, 45
    %s475 = scalar_lea.vmem %s0, %s474
    %v476 = vld [vmem:[%s475] sm:%s3]
    %s477 = scalar_lea.vmem [#allocation0], 360
    %478 = vst [vmem:[%s477] sm:%s3] %v476
    %s479 = smul.addr 2, 44
    %s480 = scalar_lea.vmem %s0, %s479
    %v481 = vld [vmem:[%s480] sm:%s3]
    %s482 = scalar_lea.vmem [#allocation0], 352
    %483 = vst [vmem:[%s482] sm:%s3] %v481
    %s484 = smul.addr 2, 43
    %s485 = scalar_lea.vmem %s0, %s484
    %v486 = vld [vmem:[%s485] sm:%s3]
    %s487 = scalar_lea.vmem [#allocation0], 344
    %488 = vst [vmem:[%s487] sm:%s3] %v486
    %s489 = smul.addr 2, 42
    %s490 = scalar_lea.vmem %s0, %s489
    %v491 = vld [vmem:[%s490] sm:%s3]
    %s492 = scalar_lea.vmem [#allocation0], 336
    %493 = vst [vmem:[%s492] sm:%s3] %v491
    %s494 = smul.addr 2, 41
    %s495 = scalar_lea.vmem %s0, %s494
    %v496 = vld [vmem:[%s495] sm:%s3]
    %s497 = scalar_lea.vmem [#allocation0], 328
    %498 = vst [vmem:[%s497] sm:%s3] %v496
    %s499 = smul.addr 2, 40
    %s500 = scalar_lea.vmem %s0, %s499
    %v501 = vld [vmem:[%s500] sm:%s3]
    %s502 = scalar_lea.vmem [#allocation0], 320
    %503 = vst [vmem:[%s502] sm:%s3] %v501
    %s504 = smul.addr 2, 39
    %s505 = scalar_lea.vmem %s0, %s504
    %v506 = vld [vmem:[%s505] sm:%s3]
    %s507 = scalar_lea.vmem [#allocation0], 312
    %508 = vst [vmem:[%s507] sm:%s3] %v506
    %s509 = smul.addr 2, 38
    %s510 = scalar_lea.vmem %s0, %s509
    %v511 = vld [vmem:[%s510] sm:%s3]
    %s512 = scalar_lea.vmem [#allocation0], 304
    %513 = vst [vmem:[%s512] sm:%s3] %v511
    %s514 = smul.addr 2, 37
    %s515 = scalar_lea.vmem %s0, %s514
    %v516 = vld [vmem:[%s515] sm:%s3]
    %s517 = scalar_lea.vmem [#allocation0], 296
    %518 = vst [vmem:[%s517] sm:%s3] %v516
    %s519 = smul.addr 2, 36
    %s520 = scalar_lea.vmem %s0, %s519
    %v521 = vld [vmem:[%s520] sm:%s3]
    %s522 = scalar_lea.vmem [#allocation0], 288
    %523 = vst [vmem:[%s522] sm:%s3] %v521
    %s524 = smul.addr 2, 35
    %s525 = scalar_lea.vmem %s0, %s524
    %v526 = vld [vmem:[%s525] sm:%s3]
    %s527 = scalar_lea.vmem [#allocation0], 280
    %528 = vst [vmem:[%s527] sm:%s3] %v526
    %s529 = smul.addr 2, 34
    %s530 = scalar_lea.vmem %s0, %s529
    %v531 = vld [vmem:[%s530] sm:%s3]
    %s532 = scalar_lea.vmem [#allocation0], 272
    %533 = vst [vmem:[%s532] sm:%s3] %v531
    %s534 = smul.addr 2, 33
    %s535 = scalar_lea.vmem %s0, %s534
    %v536 = vld [vmem:[%s535] sm:%s3]
    %s537 = scalar_lea.vmem [#allocation0], 264
    %538 = vst [vmem:[%s537] sm:%s3] %v536
    %s539 = smul.addr 2, 32
    %s540 = scalar_lea.vmem %s0, %s539
    %v541 = vld [vmem:[%s540] sm:%s3]
    %s542 = scalar_lea.vmem [#allocation0], 256
    %543 = vst [vmem:[%s542] sm:%s3] %v541
    %s544 = smul.addr 2, 31
    %s545 = scalar_lea.vmem %s0, %s544
    %v546 = vld [vmem:[%s545] sm:%s3]
    %s547 = scalar_lea.vmem [#allocation0], 248
    %548 = vst [vmem:[%s547] sm:%s3] %v546
    %s549 = smul.addr 2, 30
    %s550 = scalar_lea.vmem %s0, %s549
    %v551 = vld [vmem:[%s550] sm:%s3]
    %s552 = scalar_lea.vmem [#allocation0], 240
    %553 = vst [vmem:[%s552] sm:%s3] %v551
    %s554 = smul.addr 2, 29
    %s555 = scalar_lea.vmem %s0, %s554
    %v556 = vld [vmem:[%s555] sm:%s3]
    %s557 = scalar_lea.vmem [#allocation0], 232
    %558 = vst [vmem:[%s557] sm:%s3] %v556
    %s559 = smul.addr 2, 28
    %s560 = scalar_lea.vmem %s0, %s559
    %v561 = vld [vmem:[%s560] sm:%s3]
    %s562 = scalar_lea.vmem [#allocation0], 224
    %563 = vst [vmem:[%s562] sm:%s3] %v561
    %s564 = smul.addr 2, 27
    %s565 = scalar_lea.vmem %s0, %s564
    %v566 = vld [vmem:[%s565] sm:%s3]
    %s567 = scalar_lea.vmem [#allocation0], 216
    %568 = vst [vmem:[%s567] sm:%s3] %v566
    %s569 = smul.addr 2, 26
    %s570 = scalar_lea.vmem %s0, %s569
    %v571 = vld [vmem:[%s570] sm:%s3]
    %s572 = scalar_lea.vmem [#allocation0], 208
    %573 = vst [vmem:[%s572] sm:%s3] %v571
    %s574 = smul.addr 2, 25
    %s575 = scalar_lea.vmem %s0, %s574
    %v576 = vld [vmem:[%s575] sm:%s3]
    %s577 = scalar_lea.vmem [#allocation0], 200
    %578 = vst [vmem:[%s577] sm:%s3] %v576
    %s579 = smul.addr 2, 24
    %s580 = scalar_lea.vmem %s0, %s579
    %v581 = vld [vmem:[%s580] sm:%s3]
    %s582 = scalar_lea.vmem [#allocation0], 192
    %583 = vst [vmem:[%s582] sm:%s3] %v581
    %s584 = smul.addr 2, 23
    %s585 = scalar_lea.vmem %s0, %s584
    %v586 = vld [vmem:[%s585] sm:%s3]
    %s587 = scalar_lea.vmem [#allocation0], 184
    %588 = vst [vmem:[%s587] sm:%s3] %v586
    %s589 = smul.addr 2, 22
    %s590 = scalar_lea.vmem %s0, %s589
    %v591 = vld [vmem:[%s590] sm:%s3]
    %s592 = scalar_lea.vmem [#allocation0], 176
    %593 = vst [vmem:[%s592] sm:%s3] %v591
    %s594 = smul.addr 2, 21
    %s595 = scalar_lea.vmem %s0, %s594
    %v596 = vld [vmem:[%s595] sm:%s3]
    %s597 = scalar_lea.vmem [#allocation0], 168
    %598 = vst [vmem:[%s597] sm:%s3] %v596
    %s599 = smul.addr 2, 20
    %s600 = scalar_lea.vmem %s0, %s599
    %v601 = vld [vmem:[%s600] sm:%s3]
    %s602 = scalar_lea.vmem [#allocation0], 160
    %603 = vst [vmem:[%s602] sm:%s3] %v601
    %s604 = smul.addr 2, 19
    %s605 = scalar_lea.vmem %s0, %s604
    %v606 = vld [vmem:[%s605] sm:%s3]
    %s607 = scalar_lea.vmem [#allocation0], 152
    %608 = vst [vmem:[%s607] sm:%s3] %v606
    %s609 = smul.addr 2, 18
    %s610 = scalar_lea.vmem %s0, %s609
    %v611 = vld [vmem:[%s610] sm:%s3]
    %s612 = scalar_lea.vmem [#allocation0], 144
    %613 = vst [vmem:[%s612] sm:%s3] %v611
    %s614 = smul.addr 2, 17
    %s615 = scalar_lea.vmem %s0, %s614
    %v616 = vld [vmem:[%s615] sm:%s3]
    %s617 = scalar_lea.vmem [#allocation0], 136
    %618 = vst [vmem:[%s617] sm:%s3] %v616
    %s619 = smul.addr 2, 16
    %s620 = scalar_lea.vmem %s0, %s619
    %v621 = vld [vmem:[%s620] sm:%s3]
    %s622 = scalar_lea.vmem [#allocation0], 128
    %623 = vst [vmem:[%s622] sm:%s3] %v621
    %s624 = smul.addr 2, 15
    %s625 = scalar_lea.vmem %s0, %s624
    %v626 = vld [vmem:[%s625] sm:%s3]
    %s627 = scalar_lea.vmem [#allocation0], 120
    %628 = vst [vmem:[%s627] sm:%s3] %v626
    %s629 = smul.addr 2, 14
    %s630 = scalar_lea.vmem %s0, %s629
    %v631 = vld [vmem:[%s630] sm:%s3]
    %s632 = scalar_lea.vmem [#allocation0], 112
    %633 = vst [vmem:[%s632] sm:%s3] %v631
    %s634 = smul.addr 2, 13
    %s635 = scalar_lea.vmem %s0, %s634
    %v636 = vld [vmem:[%s635] sm:%s3]
    %s637 = scalar_lea.vmem [#allocation0], 104
    %638 = vst [vmem:[%s637] sm:%s3] %v636
    %s639 = smul.addr 2, 12
    %s640 = scalar_lea.vmem %s0, %s639
    %v641 = vld [vmem:[%s640] sm:%s3]
    %s642 = scalar_lea.vmem [#allocation0], 96
    %643 = vst [vmem:[%s642] sm:%s3] %v641
    %s644 = smul.addr 2, 11
    %s645 = scalar_lea.vmem %s0, %s644
    %v646 = vld [vmem:[%s645] sm:%s3]
    %s647 = scalar_lea.vmem [#allocation0], 88
    %648 = vst [vmem:[%s647] sm:%s3] %v646
    %s649 = smul.addr 2, 10
    %s650 = scalar_lea.vmem %s0, %s649
    %v651 = vld [vmem:[%s650] sm:%s3]
    %s652 = scalar_lea.vmem [#allocation0], 80
    %653 = vst [vmem:[%s652] sm:%s3] %v651
    %s654 = smul.addr 2, 9
    %s655 = scalar_lea.vmem %s0, %s654
    %v656 = vld [vmem:[%s655] sm:%s3]
    %s657 = scalar_lea.vmem [#allocation0], 72
    %658 = vst [vmem:[%s657] sm:%s3] %v656
    %s659 = smul.addr 2, 8
    %s660 = scalar_lea.vmem %s0, %s659
    %v661 = vld [vmem:[%s660] sm:%s3]
    %s662 = scalar_lea.vmem [#allocation0], 64
    %663 = vst [vmem:[%s662] sm:%s3] %v661
    %s664 = smul.addr 2, 7
    %s665 = scalar_lea.vmem %s0, %s664
    %v666 = vld [vmem:[%s665] sm:%s3]
    %s667 = scalar_lea.vmem [#allocation0], 56
    %668 = vst [vmem:[%s667] sm:%s3] %v666
    %s669 = smul.addr 2, 6
    %s670 = scalar_lea.vmem %s0, %s669
    %v671 = vld [vmem:[%s670] sm:%s3]
    %s672 = scalar_lea.vmem [#allocation0], 48
    %673 = vst [vmem:[%s672] sm:%s3] %v671
    %s674 = smul.addr 2, 5
    %s675 = scalar_lea.vmem %s0, %s674
    %v676 = vld [vmem:[%s675] sm:%s3]
    %s677 = scalar_lea.vmem [#allocation0], 40
    %678 = vst [vmem:[%s677] sm:%s3] %v676
    %s679 = smul.addr 2, 4
    %s680 = scalar_lea.vmem %s0, %s679
    %v681 = vld [vmem:[%s680] sm:%s3]
    %s682 = scalar_lea.vmem [#allocation0], 32
    %683 = vst [vmem:[%s682] sm:%s3] %v681
    %s684 = smul.addr 2, 3
    %s685 = scalar_lea.vmem %s0, %s684
    %v686 = vld [vmem:[%s685] sm:%s3]
    %s687 = scalar_lea.vmem [#allocation0], 24
    %688 = vst [vmem:[%s687] sm:%s3] %v686
    %s689 = smul.addr 2, 2
    %s690 = scalar_lea.vmem %s0, %s689
    %v691 = vld [vmem:[%s690] sm:%s3]
    %s692 = scalar_lea.vmem [#allocation0], 16
    %693 = vst [vmem:[%s692] sm:%s3] %v691
    %s694 = scalar_lea.vmem %s0, 2
    %v695 = vld [vmem:[%s694] sm:%s3]
    %s696 = scalar_lea.vmem [#allocation0], 8
    %697 = vst [vmem:[%s696] sm:%s3] %v695
    %v698 = vld [vmem:[%s0] sm:%s3]
    %699 = vst [vmem:[#allocation0] sm:%s3] %v698
    %v700 = vld [vmem:[#allocation0] ss:$8 sm:$0xf]
    %v701 = vld [vmem:[#allocation0] ss:$8 sm:$0xf0]
    %vm702 = vcmask 1047556
    %v703 = vsel %vm702, %v701, %v700
    %vm704 = vcmask 228352
    %705 = vst.msk [vmem:[%s1] sm:$0xff] %vm704, %v703
    %s706 = scalar_lea.vmem [#allocation0], 64
    %v707 = vld [vmem:[%s706] ss:$8 sm:$0xf]
    %s708 = scalar_lea.vmem [#allocation0], 64
    %v709 = vld [vmem:[%s708] ss:$8 sm:$0xf0]
    %vm710 = vcmask 1047556
    %v711 = vsel %vm710, %v709, %v707
    %vm712 = vcmask 228352
    %s713 = scalar_lea.vmem %s1, 8
    %714 = vst.msk [vmem:[%s713] sm:$0xff] %vm712, %v711
    %s715 = scalar_lea.vmem [#allocation0], 128
    %v716 = vld [vmem:[%s715] ss:$8 sm:$0xf]
    %s717 = scalar_lea.vmem [#allocation0], 128
    %v718 = vld [vmem:[%s717] ss:$8 sm:$0xf0]
    %vm719 = vcmask 1047556
    %v720 = vsel %vm719, %v718, %v716
    %vm721 = vcmask 228352
    %s722 = scalar_lea.vmem %s1, 16
    %723 = vst.msk [vmem:[%s722] sm:$0xff] %vm721, %v720
    %s724 = scalar_lea.vmem [#allocation0], 192
    %v725 = vld [vmem:[%s724] ss:$8 sm:$0xf]
    %s726 = scalar_lea.vmem [#allocation0], 192
    %v727 = vld [vmem:[%s726] ss:$8 sm:$0xf0]
    %vm728 = vcmask 1047556
    %v729 = vsel %vm728, %v727, %v725
    %vm730 = vcmask 228352
    %s731 = scalar_lea.vmem %s1, 24
    %732 = vst.msk [vmem:[%s731] sm:$0xf] %vm730, %v729
    %s733 = scalar_lea.vmem %s1, 28
    %734 = vst.msk [vmem:[%s733] sm:$0xf0] %vm730, %v729
    %s735 = scalar_lea.vmem [#allocation0], 256
    %v736 = vld [vmem:[%s735] ss:$8 sm:$0xf]
    %s737 = scalar_lea.vmem [#allocation0], 256
    %v738 = vld [vmem:[%s737] ss:$8 sm:$0xf0]
    %vm739 = vcmask 1047556
    %v740 = vsel %vm739, %v738, %v736
    %vm741 = vcmask 228352
    %s742 = scalar_lea.vmem %s1, 36
    %743 = vst.msk [vmem:[%s742] sm:$0xff] %vm741, %v740
    %s744 = scalar_lea.vmem [#allocation0], 320
    %v745 = vld [vmem:[%s744] ss:$8 sm:$0xf]
    %s746 = scalar_lea.vmem [#allocation0], 320
    %v747 = vld [vmem:[%s746] ss:$8 sm:$0xf0]
    %vm748 = vcmask 1047556
    %v749 = vsel %vm748, %v747, %v745
    %vm750 = vcmask 228352
    %s751 = scalar_lea.vmem %s1, 44
    %752 = vst.msk [vmem:[%s751] sm:$0xff] %vm750, %v749
    %s753 = scalar_lea.vmem [#allocation0], 384
    %v754 = vld [vmem:[%s753] ss:$8 sm:$0xf]
    %s755 = scalar_lea.vmem [#allocation0], 384
    %v756 = vld [vmem:[%s755] ss:$8 sm:$0xf0]
    %vm757 = vcmask 1047556
    %v758 = vsel %vm757, %v756, %v754
    %vm759 = vcmask 228352
    %s760 = scalar_lea.vmem %s1, 52
    %761 = vst.msk [vmem:[%s760] sm:$0xff] %vm759, %v758
    %s762 = scalar_lea.vmem [#allocation0], 448
    %v763 = vld [vmem:[%s762] ss:$8 sm:$0xf]
    %s764 = scalar_lea.vmem [#allocation0], 448
    %v765 = vld [vmem:[%s764] ss:$8 sm:$0xf0]
    %vm766 = vcmask 1047556
    %v767 = vsel %vm766, %v765, %v763
    %vm768 = vcmask 228352
    %s769 = scalar_lea.vmem %s1, 64
    %770 = vst.msk [vmem:[%s769] sm:$0xff] %vm768, %v767
    %s771 = scalar_lea.vmem [#allocation0], 512
    %v772 = vld [vmem:[%s771] ss:$8 sm:$0xf]
    %s773 = scalar_lea.vmem [#allocation0], 512
    %v774 = vld [vmem:[%s773] ss:$8 sm:$0xf0]
    %vm775 = vcmask 1047556
    %v776 = vsel %vm775, %v774, %v772
    %vm777 = vcmask 228352
    %s778 = scalar_lea.vmem %s1, 72
    %779 = vst.msk [vmem:[%s778] sm:$0xff] %vm777, %v776
    %s780 = scalar_lea.vmem [#allocation0], 576
    %v781 = vld [vmem:[%s780] ss:$8 sm:$0xf]
    %s782 = scalar_lea.vmem [#allocation0], 576
    %v783 = vld [vmem:[%s782] ss:$8 sm:$0xf0]
    %vm784 = vcmask 1047556
    %v785 = vsel %vm784, %v783, %v781
    %vm786 = vcmask 228352
    %s787 = scalar_lea.vmem %s1, 80
    %788 = vst.msk [vmem:[%s787] sm:$0xff] %vm786, %v785
    %s789 = scalar_lea.vmem [#allocation0], 640
    %v790 = vld [vmem:[%s789] ss:$8 sm:$0xf]
    %s791 = scalar_lea.vmem [#allocation0], 640
    %v792 = vld [vmem:[%s791] ss:$8 sm:$0xf0]
    %vm793 = vcmask 1047556
    %v794 = vsel %vm793, %v792, %v790
    %vm795 = vcmask 228352
    %s796 = scalar_lea.vmem %s1, 88
    %797 = vst.msk [vmem:[%s796] sm:$0xf] %vm795, %v794
    %s798 = scalar_lea.vmem %s1, 92
    %799 = vst.msk [vmem:[%s798] sm:$0xf0] %vm795, %v794
    %s800 = scalar_lea.vmem [#allocation0], 704
    %v801 = vld [vmem:[%s800] ss:$8 sm:$0xf]
    %s802 = scalar_lea.vmem [#allocation0], 704
    %v803 = vld [vmem:[%s802] ss:$8 sm:$0xf0]
    %vm804 = vcmask 1047556
    %v805 = vsel %vm804, %v803, %v801
    %vm806 = vcmask 228352
    %s807 = scalar_lea.vmem %s1, 100
    %808 = vst.msk [vmem:[%s807] sm:$0xff] %vm806, %v805
    %s809 = scalar_lea.vmem [#allocation0], 768
    %v810 = vld [vmem:[%s809] ss:$8 sm:$0xf]
    %s811 = scalar_lea.vmem [#allocation0], 768
    %v812 = vld [vmem:[%s811] ss:$8 sm:$0xf0]
    %vm813 = vcmask 1047556
    %v814 = vsel %vm813, %v812, %v810
    %vm815 = vcmask 228352
    %s816 = scalar_lea.vmem %s1, 108
    %817 = vst.msk [vmem:[%s816] sm:$0xff] %vm815, %v814
    %s818 = scalar_lea.vmem [#allocation0], 832
    %v819 = vld [vmem:[%s818] ss:$8 sm:$0xf]
    %s820 = scalar_lea.vmem [#allocation0], 832
    %v821 = vld [vmem:[%s820] ss:$8 sm:$0xf0]
    %vm822 = vcmask 1047556
    %v823 = vsel %vm822, %v821, %v819
    %vm824 = vcmask 228352
    %s825 = scalar_lea.vmem %s1, 116
    %826 = vst.msk [vmem:[%s825] sm:$0xff] %vm824, %v823
    %s827 = scalar_lea.vmem [#allocation0], 896
    %v828 = vld [vmem:[%s827] ss:$8 sm:$0xf]
    %s829 = scalar_lea.vmem [#allocation0], 896
    %v830 = vld [vmem:[%s829] ss:$8 sm:$0xf0]
    %vm831 = vcmask 1047556
    %v832 = vsel %vm831, %v830, %v828
    %vm833 = vcmask 228352
    %s834 = scalar_lea.vmem %s1, 128
    %835 = vst.msk [vmem:[%s834] sm:$0xff] %vm833, %v832
    %s836 = scalar_lea.vmem [#allocation0], 960
    %v837 = vld [vmem:[%s836] ss:$8 sm:$0xf]
    %s838 = scalar_lea.vmem [#allocation0], 960
    %v839 = vld [vmem:[%s838] ss:$8 sm:$0xf0]
    %vm840 = vcmask 1047556
    %v841 = vsel %vm840, %v839, %v837
    %vm842 = vcmask 228352
    %s843 = scalar_lea.vmem %s1, 136
    %844 = vst.msk [vmem:[%s843] sm:$0xff] %vm842, %v841
    %s845 = scalar_lea.vmem [#allocation0], 1024
    %v846 = vld [vmem:[%s845] ss:$8 sm:$0xf]
    %s847 = scalar_lea.vmem [#allocation0], 1024
    %v848 = vld [vmem:[%s847] ss:$8 sm:$0xf0]
    %vm849 = vcmask 1047556
    %v850 = vsel %vm849, %v848, %v846
    %vm851 = vcmask 228352
    %s852 = scalar_lea.vmem %s1, 144
    %853 = vst.msk [vmem:[%s852] sm:$0xff] %vm851, %v850
    %s854 = scalar_lea.vmem [#allocation0], 1088
    %v855 = vld [vmem:[%s854] ss:$8 sm:$0xf]
    %vm856 = vcmask 228352
    %s857 = scalar_lea.vmem %s1, 152
    %858 = vst.msk [vmem:[%s857] sm:$0xf] %vm856, %v855
    %s859 = scalar_lea.vmem [#allocation0], 1
    %v860 = vld [vmem:[%s859] ss:$8 sm:$0xf]
    %s861 = scalar_lea.vmem [#allocation0], 1
    %v862 = vld [vmem:[%s861] ss:$8 sm:$0xf0]
    %vm863 = vcmask 1047556
    %v864 = vsel %vm863, %v862, %v860
    %865 = vrot.lane.b32.xlu0 %v864, 28
    %v866 = vpop.permute.xlu0 %865
    %vm867 = vcmask 457952
    %868 = vst.msk [vmem:[%s1] sm:$0xff] %vm867, %v866
    %s869 = scalar_lea.vmem [#allocation0], 225
    %v870 = vld [vmem:[%s869] ss:$8 sm:$0xf]
    %s871 = scalar_lea.vmem [#allocation0], 225
    %v872 = vld [vmem:[%s871] ss:$8 sm:$0xf0]
    %vm873 = vcmask 1047556
    %v874 = vsel %vm873, %v872, %v870
    %875 = vrot.lane.b32.xlu0 %v874, 28
    %v876 = vpop.permute.xlu0 %875
    %vm877 = vcmask 457952
    %s878 = scalar_lea.vmem %s1, 32
    %879 = vst.msk [vmem:[%s878] sm:$0xff] %vm877, %v876
    %s880 = scalar_lea.vmem [#allocation0], 449
    %v881 = vld [vmem:[%s880] ss:$8 sm:$0xf]
    %s882 = scalar_lea.vmem [#allocation0], 449
    %v883 = vld [vmem:[%s882] ss:$8 sm:$0xf0]
    %vm884 = vcmask 1047556
    %v885 = vsel %vm884, %v883, %v881
    %886 = vrot.lane.b32.xlu0 %v885, 28
    %v887 = vpop.permute.xlu0 %886
    %vm888 = vcmask 457952
    %s889 = scalar_lea.vmem %s1, 64
    %890 = vst.msk [vmem:[%s889] sm:$0xff] %vm888, %v887
    %s891 = scalar_lea.vmem [#allocation0], 673
    %v892 = vld [vmem:[%s891] ss:$8 sm:$0xf]
    %s893 = scalar_lea.vmem [#allocation0], 673
    %v894 = vld [vmem:[%s893] ss:$8 sm:$0xf0]
    %vm895 = vcmask 1047556
    %v896 = vsel %vm895, %v894, %v892
    %897 = vrot.lane.b32.xlu0 %v896, 28
    %v898 = vpop.permute.xlu0 %897
    %vm899 = vcmask 457952
    %s900 = scalar_lea.vmem %s1, 96
    %901 = vst.msk [vmem:[%s900] sm:$0xff] %vm899, %v898
    %s902 = scalar_lea.vmem [#allocation0], 897
    %v903 = vld [vmem:[%s902] ss:$8 sm:$0xf]
    %s904 = scalar_lea.vmem [#allocation0], 897
    %v905 = vld [vmem:[%s904] ss:$8 sm:$0xf0]
    %vm906 = vcmask 1047556
    %v907 = vsel %vm906, %v905, %v903
    %908 = vrot.lane.b32.xlu0 %v907, 28
    %v909 = vpop.permute.xlu0 %908
    %vm910 = vcmask 457952
    %s911 = scalar_lea.vmem %s1, 128
    %912 = vst.msk [vmem:[%s911] sm:$0xff] %vm910, %v909
    %s913 = scalar_lea.vmem [#allocation0], 65
    %v914 = vld [vmem:[%s913] ss:$8 sm:$0xf]
    %s915 = scalar_lea.vmem [#allocation0], 65
    %v916 = vld [vmem:[%s915] ss:$8 sm:$0xf0]
    %vm917 = vcmask 1047556
    %v918 = vsel %vm917, %v916, %v914
    %919 = vrot.lane.b32.xlu0 %v918, 28
    %v920 = vpop.permute.xlu0 %919
    %vm921 = vcmask 457952
    %s922 = scalar_lea.vmem %s1, 8
    %923 = vst.msk [vmem:[%s922] sm:$0xff] %vm921, %v920
    %s924 = scalar_lea.vmem [#allocation0], 289
    %v925 = vld [vmem:[%s924] ss:$8 sm:$0xf]
    %s926 = scalar_lea.vmem [#allocation0], 289
    %v927 = vld [vmem:[%s926] ss:$8 sm:$0xf0]
    %vm928 = vcmask 1047556
    %v929 = vsel %vm928, %v927, %v925
    %930 = vrot.lane.b32.xlu0 %v929, 28
    %v931 = vpop.permute.xlu0 %930
    %vm932 = vcmask 457952
    %s933 = scalar_lea.vmem %s1, 40
    %934 = vst.msk [vmem:[%s933] sm:$0xff] %vm932, %v931
    %s935 = scalar_lea.vmem [#allocation0], 513
    %v936 = vld [vmem:[%s935] ss:$8 sm:$0xf]
    %s937 = scalar_lea.vmem [#allocation0], 513
    %v938 = vld [vmem:[%s937] ss:$8 sm:$0xf0]
    %vm939 = vcmask 1047556
    %v940 = vsel %vm939, %v938, %v936
    %941 = vrot.lane.b32.xlu0 %v940, 28
    %v942 = vpop.permute.xlu0 %941
    %vm943 = vcmask 457952
    %s944 = scalar_lea.vmem %s1, 72
    %945 = vst.msk [vmem:[%s944] sm:$0xff] %vm943, %v942
    %s946 = scalar_lea.vmem [#allocation0], 737
    %v947 = vld [vmem:[%s946] ss:$8 sm:$0xf]
    %s948 = scalar_lea.vmem [#allocation0], 737
    %v949 = vld [vmem:[%s948] ss:$8 sm:$0xf0]
    %vm950 = vcmask 1047556
    %v951 = vsel %vm950, %v949, %v947
    %952 = vrot.lane.b32.xlu0 %v951, 28
    %v953 = vpop.permute.xlu0 %952
    %vm954 = vcmask 457952
    %s955 = scalar_lea.vmem %s1, 104
    %956 = vst.msk [vmem:[%s955] sm:$0xff] %vm954, %v953
    %s957 = scalar_lea.vmem [#allocation0], 961
    %v958 = vld [vmem:[%s957] ss:$8 sm:$0xf]
    %s959 = scalar_lea.vmem [#allocation0], 961
    %v960 = vld [vmem:[%s959] ss:$8 sm:$0xf0]
    %vm961 = vcmask 1047556
    %v962 = vsel %vm961, %v960, %v958
    %963 = vrot.lane.b32.xlu0 %v962, 28
    %v964 = vpop.permute.xlu0 %963
    %vm965 = vcmask 457952
    %s966 = scalar_lea.vmem %s1, 136
    %967 = vst.msk [vmem:[%s966] sm:$0xff] %vm965, %v964
    %s968 = scalar_lea.vmem [#allocation0], 129
    %v969 = vld [vmem:[%s968] ss:$8 sm:$0xf]
    %s970 = scalar_lea.vmem [#allocation0], 129
    %v971 = vld [vmem:[%s970] ss:$8 sm:$0xf0]
    %vm972 = vcmask 1047556
    %v973 = vsel %vm972, %v971, %v969
    %974 = vrot.lane.b32.xlu0 %v973, 28
    %v975 = vpop.permute.xlu0 %974
    %vm976 = vcmask 457952
    %s977 = scalar_lea.vmem %s1, 16
    %978 = vst.msk [vmem:[%s977] sm:$0xff] %vm976, %v975
    %s979 = scalar_lea.vmem [#allocation0], 353
    %v980 = vld [vmem:[%s979] ss:$8 sm:$0xf]
    %s981 = scalar_lea.vmem [#allocation0], 353
    %v982 = vld [vmem:[%s981] ss:$8 sm:$0xf0]
    %vm983 = vcmask 1047556
    %v984 = vsel %vm983, %v982, %v980
    %985 = vrot.lane.b32.xlu0 %v984, 28
    %v986 = vpop.permute.xlu0 %985
    %vm987 = vcmask 457952
    %s988 = scalar_lea.vmem %s1, 48
    %989 = vst.msk [vmem:[%s988] sm:$0xff] %vm987, %v986
    %s990 = scalar_lea.vmem [#allocation0], 577
    %v991 = vld [vmem:[%s990] ss:$8 sm:$0xf]
    %s992 = scalar_lea.vmem [#allocation0], 577
    %v993 = vld [vmem:[%s992] ss:$8 sm:$0xf0]
    %vm994 = vcmask 1047556
    %v995 = vsel %vm994, %v993, %v991
    %996 = vrot.lane.b32.xlu0 %v995, 28
    %v997 = vpop.permute.xlu0 %996
    %vm998 = vcmask 457952
    %s999 = scalar_lea.vmem %s1, 80
    %1000 = vst.msk [vmem:[%s999] sm:$0xff] %vm998, %v997
    %s1001 = scalar_lea.vmem [#allocation0], 801
    %v1002 = vld [vmem:[%s1001] ss:$8 sm:$0xf]
    %s1003 = scalar_lea.vmem [#allocation0], 801
    %v1004 = vld [vmem:[%s1003] ss:$8 sm:$0xf0]
    %vm1005 = vcmask 1047556
    %v1006 = vsel %vm1005, %v1004, %v1002
    %1007 = vrot.lane.b32.xlu0 %v1006, 28
    %v1008 = vpop.permute.xlu0 %1007
    %vm1009 = vcmask 457952
    %s1010 = scalar_lea.vmem %s1, 112
    %1011 = vst.msk [vmem:[%s1010] sm:$0xff] %vm1009, %v1008
    %s1012 = scalar_lea.vmem [#allocation0], 1025
    %v1013 = vld [vmem:[%s1012] ss:$8 sm:$0xf]
    %s1014 = scalar_lea.vmem [#allocation0], 1025
    %v1015 = vld [vmem:[%s1014] ss:$8 sm:$0xf0]
    %vm1016 = vcmask 1047556
    %v1017 = vsel %vm1016, %v1015, %v1013
    %1018 = vrot.lane.b32.xlu0 %v1017, 28
    %v1019 = vpop.permute.xlu0 %1018
    %vm1020 = vcmask 457952
    %s1021 = scalar_lea.vmem %s1, 144
    %1022 = vst.msk [vmem:[%s1021] sm:$0xff] %vm1020, %v1019
    %s1023 = scalar_lea.vmem [#allocation0], 193
    %v1024 = vld [vmem:[%s1023] ss:$8 sm:$0xf]
    %s1025 = scalar_lea.vmem [#allocation0], 385
    %v1026 = vld [vmem:[%s1025] ss:$8 sm:$0xf0]
    %vm1027 = vcmask 1047556
    %v1028 = vsel %vm1027, %v1026, %v1024
    %1029 = vrot.lane.b32.xlu0 %v1028, 28
    %v1030 = vpop.permute.xlu0 %1029
    %vm1031 = vcmask 457952
    %s1032 = scalar_lea.vmem %s1, 24
    %1033 = vst.msk [vmem:[%s1032] sm:$0xf] %vm1031, %v1030
    %s1034 = scalar_lea.vmem %s1, 52
    %1035 = vst.msk [vmem:[%s1034] sm:$0xf0] %vm1031, %v1030
    %s1036 = scalar_lea.vmem [#allocation0], 641
    %v1037 = vld [vmem:[%s1036] ss:$8 sm:$0xf]
    %s1038 = scalar_lea.vmem [#allocation0], 833
    %v1039 = vld [vmem:[%s1038] ss:$8 sm:$0xf0]
    %vm1040 = vcmask 1047556
    %v1041 = vsel %vm1040, %v1039, %v1037
    %1042 = vrot.lane.b32.xlu0 %v1041, 28
    %v1043 = vpop.permute.xlu0 %1042
    %vm1044 = vcmask 457952
    %s1045 = scalar_lea.vmem %s1, 88
    %1046 = vst.msk [vmem:[%s1045] sm:$0xf] %vm1044, %v1043
    %s1047 = scalar_lea.vmem %s1, 116
    %1048 = vst.msk [vmem:[%s1047] sm:$0xf0] %vm1044, %v1043
    %s1049 = scalar_lea.vmem [#allocation0], 1089
    %v1050 = vld [vmem:[%s1049] ss:$8 sm:$0xf]
    %1051 = vrot.lane.b32.xlu0 %v1050, 28
    %v1052 = vpop.permute.xlu0 %1051
    %vm1053 = vcmask 457952
    %s1054 = scalar_lea.vmem %s1, 152
    %1055 = vst.msk [vmem:[%s1054] sm:$0xf] %vm1053, %v1052

// kernel: tile.21
$region0: #{tile.21}
  %s0 = inlined_call_operand.vmem [shape: f32[2,7,28], index: 0, kind: input, shape index: {}]
  %s1 = inlined_call_operand.vmem [shape: f32[14,28], index: 1, kind: output, shape index: {}]
  %v2 = vld [vmem:[%s0] sm:$0x7f]
  %vm3 = vcmask 228352
  %4 = vst.msk [vmem:[%s1] sm:$0x7f] %vm3, %v2
  %s5 = scalar_lea.vmem %s0, 8
  %v6 = vld [vmem:[%s5] sm:$0x7f]
  %vm7 = vcmask 228352
  %s8 = scalar_lea.vmem %s1, 7
  %9 = vst.msk [vmem:[%s8] sm:$0x7f] %vm7, %v6

// kernel: decoder_forward.1
$region0: #{decoder_forward.1}
  #allocation0 [shape = 'u32[]', space=smem, size = 0x4, offset = 0x4, fixed_abs, tag = 'smem constant byte address 0x4 - core index']
  #allocation1 [shape = 'u32[144,128]{1,0:T(1,128)}', space=vmem, size = 0x12000, scoped, tag = 'internal scratch']
  %s0 = inlined_call_operand.vmem [shape: f32[14,28], index: 0, kind: input, shape index: {}]
  %s1 = inlined_call_operand.vmem [shape: f32[56,28], index: 1, kind: input, shape index: {}]
  %s2 = inlined_call_operand.vmem [shape: f32[28,128], index: 2, kind: input, shape index: {}]
  %s3 = inlined_call_operand.vmem [shape: f32[14,128], index: 3, kind: input, shape index: {}]
  %s4 = inlined_call_operand.vmem [shape: f32[3,14,14], index: 4, kind: input, shape index: {}]
  %s5 = inlined_call_operand.vmem [shape: f32[384,128], index: 5, kind: input, shape index: {}]
  %s6 = inlined_call_operand.vmem [shape: f32[14,128], index: 6, kind: input, shape index: {}]
  %s7 = inlined_call_operand.vmem [shape: f32[3,28,14], index: 7, kind: input, shape index: {}]
  %s8 = inlined_call_operand.vmem [shape: f32[384,128], index: 8, kind: input, shape index: {}]
  %s9 = inlined_call_operand.vmem [shape: f32[28,128], index: 9, kind: input, shape index: {}]
  %s10 = inlined_call_operand.vmem [shape: f32[3,56,28], index: 10, kind: input, shape index: {}]
  %s11 = inlined_call_operand.vmem [shape: f32[384,140], index: 11, kind: input, shape index: {}]
  %s12 = inlined_call_operand.vmem [shape: f32[56,140], index: 12, kind: input, shape index: {}]
  %s13 = inlined_call_operand.vmem [shape: f32[28,140], index: 13, kind: input, shape index: {}]
  %s14 = inlined_call_operand.vmem [shape: f32[140,28], index: 14, kind: input, shape index: {}]
  %s15 = inlined_call_operand.vmem [shape: f32[56,140], index: 15, kind: output, shape index: {0}]
  %s16 = inlined_call_operand.vmem [shape: f32[56,28], index: 16, kind: output, shape index: {1}]
  %17 = xla_tuple %s15, %s16
  %s18 = sld [smem:[#allocation0]]
  $region78: #{decoder_forward.1} parent=0
    _
  %s20 = ssub.s32 1, %s18
  %s21 = scalar_select 0, %s20, %s18
  // Predicated region
  $region2: #{decoder_forward.1} parent=0 // pred_check
    _
  $region3: #{decoder_forward.1} parent=0 // pred_check_branch
    %23 = sbr.rel (0) target = $region5
  $region4: #{decoder_forward.1} parent=0 // pred_region
    _
  $region5: #{decoder_forward.1} parent=0 // pred_fallthru
    _
  // Predicated region
  $region6: #{decoder_forward.1} parent=0 // pred_check
    _
  $region7: #{decoder_forward.1} parent=0 // pred_check_branch
    %25 = sbr.rel (0) target = $region9
  $region8: #{decoder_forward.1} parent=0 // pred_region
    _
  $region9: #{decoder_forward.1} parent=0 // pred_fallthru
    _
  // Predicated region
  $region10: #{decoder_forward.1} parent=0 // pred_check
    _
  $region11: #{decoder_forward.1} parent=0 // pred_check_branch
    %27 = sbr.rel (0) target = $region13
  $region12: #{decoder_forward.1} parent=0 // pred_region
    _
  $region13: #{decoder_forward.1} parent=0 // pred_fallthru
    _
  // Predicated region
  $region14: #{decoder_forward.1} parent=0 // pred_check
    _
  $region15: #{decoder_forward.1} parent=0 // pred_check_branch
    %29 = sbr.rel (0) target = $region17
  $region16: #{decoder_forward.1} parent=0 // pred_region
    _
  $region17: #{decoder_forward.1} parent=0 // pred_fallthru
    _
  // Predicated region
  $region18: #{decoder_forward.1} parent=0 // pred_check
    _
  $region19: #{decoder_forward.1} parent=0 // pred_check_branch
    %31 = sbr.rel (0) target = $region21
  $region20: #{decoder_forward.1} parent=0 // pred_region
    _
  $region21: #{decoder_forward.1} parent=0 // pred_fallthru
    _
  // Predicated region
  $region22: #{decoder_forward.1} parent=0 // pred_check
    _
  $region23: #{decoder_forward.1} parent=0 // pred_check_branch
    %33 = sbr.rel (0) target = $region25
  $region24: #{decoder_forward.1} parent=0 // pred_region
    _
  $region25: #{decoder_forward.1} parent=0 // pred_fallthru
    _
  // Predicated region
  $region26: #{decoder_forward.1} parent=0 // pred_check
    _
  $region27: #{decoder_forward.1} parent=0 // pred_check_branch
    %35 = sbr.rel (0) target = $region29
  $region28: #{decoder_forward.1} parent=0 // pred_region
    _
  $region29: #{decoder_forward.1} parent=0 // pred_fallthru
    _
  // Predicated region
  $region30: #{decoder_forward.1} parent=0 // pred_check
    _
  $region31: #{decoder_forward.1} parent=0 // pred_check_branch
    %37 = sbr.rel (0) target = $region33
  $region32: #{decoder_forward.1} parent=0 // pred_region
    _
  $region33: #{decoder_forward.1} parent=0 // pred_fallthru
    _
  // Predicated region
  $region34: #{decoder_forward.1} parent=0 // pred_check
    _
  $region35: #{decoder_forward.1} parent=0 // pred_check_branch
    %39 = sbr.rel (0) target = $region37
  $region36: #{decoder_forward.1} parent=0 // pred_region
    _
  $region37: #{decoder_forward.1} parent=0 // pred_fallthru
    _
  // Predicated region
  $region38: #{decoder_forward.1} parent=0 // pred_check
    _
  $region39: #{decoder_forward.1} parent=0 // pred_check_branch
    %41 = sbr.rel (0) target = $region41
  $region40: #{decoder_forward.1} parent=0 // pred_region
    _
  $region41: #{decoder_forward.1} parent=0 // pred_fallthru
    _
  // Predicated region
  $region42: #{decoder_forward.1} parent=0 // pred_check
    _
  $region43: #{decoder_forward.1} parent=0 // pred_check_branch
    %43 = sbr.rel (0) target = $region45
  $region44: #{decoder_forward.1} parent=0 // pred_region
    _
  $region45: #{decoder_forward.1} parent=0 // pred_fallthru
    _
  // Predicated region
  $region46: #{decoder_forward.1} parent=0 // pred_check
    _
  $region47: #{decoder_forward.1} parent=0 // pred_check_branch
    %45 = sbr.rel (0) target = $region49
  $region48: #{decoder_forward.1} parent=0 // pred_region
    _
  $region49: #{decoder_forward.1} parent=0 // pred_fallthru
    _
  // Predicated region
  $region50: #{decoder_forward.1} parent=0 // pred_check
    _
  $region51: #{decoder_forward.1} parent=0 // pred_check_branch
    %47 = sbr.rel (0) target = $region53
  $region52: #{decoder_forward.1} parent=0 // pred_region
    _
  $region53: #{decoder_forward.1} parent=0 // pred_fallthru
    _
  // Predicated region
  $region54: #{decoder_forward.1} parent=0 // pred_check
    _
  $region55: #{decoder_forward.1} parent=0 // pred_check_branch
    %49 = sbr.rel (0) target = $region57
  $region56: #{decoder_forward.1} parent=0 // pred_region
    _
  $region57: #{decoder_forward.1} parent=0 // pred_fallthru
    _
  // Predicated region
  $region58: #{decoder_forward.1} parent=0 // pred_check
    _
  $region59: #{decoder_forward.1} parent=0 // pred_check_branch
    %51 = sbr.rel (0) target = $region61
  $region60: #{decoder_forward.1} parent=0 // pred_region
    _
  $region61: #{decoder_forward.1} parent=0 // pred_fallthru
    _
  %v52 = vld [vmem:[%s0] sm:$0xff]
  %v53 = vld [vmem:[%s0 + $0x8] sm:$0x3f]
  %v54 = vld [vmem:[%s2] sm:$0xff]
  %v55 = vld [vmem:[%s2 + $0x8] sm:$0xff]
  %v56 = vld [vmem:[%s2 + $0x10] sm:$0xff]
  %v57 = vld [vmem:[%s2 + $0x18] sm:$0xf]
  %v58 = vld [vmem:[%s3] sm:$0xff]
  %v59 = vld [vmem:[%s3 + $0x8] sm:$0x3f]
  %vm60 = vcmask 228352
  %v62 = vsel %vm60, %v52, 0
  %v65 = vsel %vm60, %v53, 0
  %vm67 = vcmask 1043456
  %v69 = vsel %vm67, %v57, 0
  %71 = vmatprep.subr.mxu0 0.0
  %72 = vmatpush1.msra.mxu0 %v54
  %73 = vmatprep.subr.mxu0 0.0
  %74 = vmatpush1.msra.mxu0 %v55
  %75 = vmatprep.subr.mxu0 0.0
  %76 = vmatpush1.msra.mxu0 %v56
  %77 = vmatprep.subr.mxu0 0.0
  %78 = vmatpush1.msra.mxu0 %v69
  %79 = vmatprep.subr.mxu0 0.0
  %80 = vmatpush1.msra.mxu0 0.0
  %81 = vmatprep.subr.mxu0 0.0
  %82 = vmatpush1.msra.mxu0 0.0
  %83 = vmatprep.subr.mxu0 0.0
  %84 = vmatpush1.msra.mxu0 0.0
  %85 = vmatprep.subr.mxu0 0.0
  %86 = vmatpush1.msra.mxu0 0.0
  %87 = vmatprep.subr.mxu0 0.0
  %88 = vmatpush1.msra.mxu0 0.0
  %89 = vmatprep.subr.mxu0 0.0
  %90 = vmatpush1.msra.mxu0 0.0
  %91 = vmatprep.subr.mxu0 0.0
  %92 = vmatpush1.msra.mxu0 0.0
  %93 = vmatprep.subr.mxu0 0.0
  %94 = vmatpush1.msra.mxu0 0.0
  %95 = vmatprep.subr.mxu0 0.0
  %96 = vmatpush1.msra.mxu0 0.0
  %97 = vmatprep.subr.mxu0 0.0
  %98 = vmatpush1.msra.mxu0 0.0
  %99 = vmatprep.subr.mxu0 0.0
  %100 = vmatpush1.msra.mxu0 0.0
  %101 = vmatprep.subr.mxu0 0.0
  %102 = vmatpush1.msra.mxu0 0.0
  %103 = vmatprep.subr.mxu0 0.0
  %104 = vmatpush1.msra.mxu0 0.0
  %105 = vmatprep.subr.mxu0 0.0
  %106 = vmatpush1.msra.mxu0 0.0
  %107 = vmatprep.subr.mxu0 0.0
  %108 = vmatpush1.msra.mxu0 0.0
  %109 = vmatprep.subr.mxu0 0.0
  %110 = vmatpush1.msra.mxu0 0.0
  %111 = vmatprep.subr.mxu0 0.0
  %112 = vmatpush1.msra.mxu0 0.0
  %113 = vmatprep.subr.mxu0 0.0
  %114 = vmatpush1.msra.mxu0 0.0
  %115 = vmatprep.subr.mxu0 0.0
  %116 = vmatpush1.msra.mxu0 0.0
  %117 = vmatprep.subr.mxu0 0.0
  %118 = vmatpush1.msra.mxu0 0.0
  %119 = vmatprep.subr.mxu0 0.0
  %120 = vmatpush1.msra.mxu0 0.0
  %121 = vmatprep.subr.mxu0 0.0
  %122 = vmatpush1.msra.mxu0 0.0
  %123 = vmatprep.subr.mxu0 0.0
  %124 = vmatpush1.msra.mxu0 0.0
  %125 = vmatprep.subr.mxu0 0.0
  %126 = vmatpush1.msra.mxu0 0.0
  %127 = vmatprep.subr.mxu0 0.0
  %128 = vmatpush1.msra.mxu0 0.0
  %129 = vmatprep.subr.mxu0 0.0
  %130 = vmatpush1.msra.mxu0 0.0
  %131 = vmatprep.subr.mxu0 0.0
  %132 = vmatpush1.msra.mxu0 0.0
  %133 = vmatprep.subr.mxu0 0.0
  %134 = vmatpush1.msra.mxu0 0.0
  %135 = vmatprep.mubr.f32.mxu0 0.0
  %136 = vmatmul.mubr.f32.gmra.mrb[0].mxu0 %v62
  %v137 = vpop.f32.mrb[0].mxu0
  %v138 = vadd.f32 %v58, %v137
  %v139 = vpop.f32.mrb[0].mxu0
  %140 = vmatprep.mubr.f32.mxu0 0.0
  %141 = vmatmul.mubr.f32.gmra.mrb[0].mxu0 %v65
  %v142 = vpop.f32.mrb[0].mxu0
  %v143 = vadd.f32 %v59, %v142
  %v144 = vpop.f32.mrb[0].mxu0
  %145 = vdwg.mxu0
  %v146 = vld [vmem:[%s4] sm:$0xff]
  %v147 = vld [vmem:[%s4 + $0x8] sm:$0x3f]
  %vm148 = vcmask 113664
  %v150 = vsel %vm148, %v146, 0
  %v153 = vsel %vm148, %v147, 0
  %vm155 = vcmask 1045504
  %v157 = vsel %vm155, %v143, 0
  %159 = vmatprep.subr.mxu0 0.0
  %160 = vmatpush1.msra.mxu0 %v138
  %161 = vmatprep.subr.mxu0 0.0
  %162 = vmatpush1.msra.mxu0 %v157
  %163 = vmatprep.subr.mxu0 0.0
  %164 = vmatpush1.msra.mxu0 0.0
  %165 = vmatprep.subr.mxu0 0.0
  %166 = vmatpush1.msra.mxu0 0.0
  %167 = vmatprep.subr.mxu0 0.0
  %168 = vmatpush1.msra.mxu0 0.0
  %169 = vmatprep.subr.mxu0 0.0
  %170 = vmatpush1.msra.mxu0 0.0
  %171 = vmatprep.subr.mxu0 0.0
  %172 = vmatpush1.msra.mxu0 0.0
  %173 = vmatprep.subr.mxu0 0.0
  %174 = vmatpush1.msra.mxu0 0.0
  %175 = vmatprep.subr.mxu0 0.0
  %176 = vmatpush1.msra.mxu0 0.0
  %177 = vmatprep.subr.mxu0 0.0
  %178 = vmatpush1.msra.mxu0 0.0
  %179 = vmatprep.subr.mxu0 0.0
  %180 = vmatpush1.msra.mxu0 0.0
  %181 = vmatprep.subr.mxu0 0.0
  %182 = vmatpush1.msra.mxu0 0.0
  %183 = vmatprep.subr.mxu0 0.0
  %184 = vmatpush1.msra.mxu0 0.0
  %185 = vmatprep.subr.mxu0 0.0
  %186 = vmatpush1.msra.mxu0 0.0
  %187 = vmatprep.subr.mxu0 0.0
  %188 = vmatpush1.msra.mxu0 0.0
  %189 = vmatprep.subr.mxu0 0.0
  %190 = vmatpush1.msra.mxu0 0.0
  %191 = vmatprep.subr.mxu0 0.0
  %192 = vmatpush1.msra.mxu0 0.0
  %193 = vmatprep.subr.mxu0 0.0
  %194 = vmatpush1.msra.mxu0 0.0
  %195 = vmatprep.subr.mxu0 0.0
  %196 = vmatpush1.msra.mxu0 0.0
  %197 = vmatprep.subr.mxu0 0.0
  %198 = vmatpush1.msra.mxu0 0.0
  %199 = vmatprep.subr.mxu0 0.0
  %200 = vmatpush1.msra.mxu0 0.0
  %201 = vmatprep.subr.mxu0 0.0
  %202 = vmatpush1.msra.mxu0 0.0
  %203 = vmatprep.subr.mxu0 0.0
  %204 = vmatpush1.msra.mxu0 0.0
  %205 = vmatprep.subr.mxu0 0.0
  %206 = vmatpush1.msra.mxu0 0.0
  %207 = vmatprep.subr.mxu0 0.0
  %208 = vmatpush1.msra.mxu0 0.0
  %209 = vmatprep.subr.mxu0 0.0
  %210 = vmatpush1.msra.mxu0 0.0
  %211 = vmatprep.subr.mxu0 0.0
  %212 = vmatpush1.msra.mxu0 0.0
  %213 = vmatprep.subr.mxu0 0.0
  %214 = vmatpush1.msra.mxu0 0.0
  %215 = vmatprep.subr.mxu0 0.0
  %216 = vmatpush1.msra.mxu0 0.0
  %217 = vmatprep.subr.mxu0 0.0
  %218 = vmatpush1.msra.mxu0 0.0
  %219 = vmatprep.subr.mxu0 0.0
  %220 = vmatpush1.msra.mxu0 0.0
  %221 = vmatprep.subr.mxu0 0.0
  %222 = vmatpush1.msra.mxu0 0.0
  %223 = vmatprep.mubr.f32.mxu0 0.0
  %224 = vmatmul.mubr.f32.gmra.mrb[0].mxu0 %v150
  %v225 = vpop.f32.mrb[0].mxu0
  %v226 = vadd.f32 0.0, %v225
  %v227 = vpop.f32.mrb[0].mxu0
  %228 = vmatprep.mubr.f32.mxu0 0.0
  %229 = vmatmul.mubr.f32.gmra.mrb[0].mxu0 %v153
  %v230 = vpop.f32.mrb[0].mxu0
  %v231 = vadd.f32 0.0, %v230
  %v232 = vpop.f32.mrb[0].mxu0
  %233 = vdwg.mxu0
  %s234 = scalar_lea.vmem %s4, 16
  %v235 = vld [vmem:[%s234] sm:$0xff]
  %v236 = vld [vmem:[%s234 + $0x8] sm:$0x3f]
  %v238 = vsel %vm148, %v235, 0
  %v241 = vsel %vm148, %v236, 0
  %243 = vmatprep.subr.mxu0 0.0
  %244 = vmatpush1.msra.mxu0 %v138
  %245 = vmatprep.subr.mxu0 0.0
  %246 = vmatpush1.msra.mxu0 %v157
  %247 = vmatprep.subr.mxu0 0.0
  %248 = vmatpush1.msra.mxu0 0.0
  %249 = vmatprep.subr.mxu0 0.0
  %250 = vmatpush1.msra.mxu0 0.0
  %251 = vmatprep.subr.mxu0 0.0
  %252 = vmatpush1.msra.mxu0 0.0
  %253 = vmatprep.subr.mxu0 0.0
  %254 = vmatpush1.msra.mxu0 0.0
  %255 = vmatprep.subr.mxu0 0.0
  %256 = vmatpush1.msra.mxu0 0.0
  %257 = vmatprep.subr.mxu0 0.0
  %258 = vmatpush1.msra.mxu0 0.0
  %259 = vmatprep.subr.mxu0 0.0
  %260 = vmatpush1.msra.mxu0 0.0
  %261 = vmatprep.subr.mxu0 0.0
  %262 = vmatpush1.msra.mxu0 0.0
  %263 = vmatprep.subr.mxu0 0.0
  %264 = vmatpush1.msra.mxu0 0.0
  %265 = vmatprep.subr.mxu0 0.0
  %266 = vmatpush1.msra.mxu0 0.0
  %267 = vmatprep.subr.mxu0 0.0
  %268 = vmatpush1.msra.mxu0 0.0
  %269 = vmatprep.subr.mxu0 0.0
  %270 = vmatpush1.msra.mxu0 0.0
  %271 = vmatprep.subr.mxu0 0.0
  %272 = vmatpush1.msra.mxu0 0.0
  %273 = vmatprep.subr.mxu0 0.0
  %274 = vmatpush1.msra.mxu0 0.0
  %275 = vmatprep.subr.mxu0 0.0
  %276 = vmatpush1.msra.mxu0 0.0
  %277 = vmatprep.subr.mxu0 0.0
  %278 = vmatpush1.msra.mxu0 0.0
  %279 = vmatprep.subr.mxu0 0.0
  %280 = vmatpush1.msra.mxu0 0.0
  %281 = vmatprep.subr.mxu0 0.0
  %282 = vmatpush1.msra.mxu0 0.0
  %283 = vmatprep.subr.mxu0 0.0
  %284 = vmatpush1.msra.mxu0 0.0
  %285 = vmatprep.subr.mxu0 0.0
  %286 = vmatpush1.msra.mxu0 0.0
  %287 = vmatprep.subr.mxu0 0.0
  %288 = vmatpush1.msra.mxu0 0.0
  %289 = vmatprep.subr.mxu0 0.0
  %290 = vmatpush1.msra.mxu0 0.0
  %291 = vmatprep.subr.mxu0 0.0
  %292 = vmatpush1.msra.mxu0 0.0
  %293 = vmatprep.subr.mxu0 0.0
  %294 = vmatpush1.msra.mxu0 0.0
  %295 = vmatprep.subr.mxu0 0.0
  %296 = vmatpush1.msra.mxu0 0.0
  %297 = vmatprep.subr.mxu0 0.0
  %298 = vmatpush1.msra.mxu0 0.0
  %299 = vmatprep.subr.mxu0 0.0
  %300 = vmatpush1.msra.mxu0 0.0
  %301 = vmatprep.subr.mxu0 0.0
  %302 = vmatpush1.msra.mxu0 0.0
  %303 = vmatprep.subr.mxu0 0.0
  %304 = vmatpush1.msra.mxu0 0.0
  %305 = vmatprep.subr.mxu0 0.0
  %306 = vmatpush1.msra.mxu0 0.0
  %307 = vmatprep.mubr.f32.mxu0 0.0
  %308 = vmatmul.mubr.f32.gmra.mrb[0].mxu0 %v238
  %v309 = vpop.f32.mrb[0].mxu0
  %v310 = vadd.f32 0.0, %v309
  %v311 = vpop.f32.mrb[0].mxu0
  %312 = vmatprep.mubr.f32.mxu0 0.0
  %313 = vmatmul.mubr.f32.gmra.mrb[0].mxu0 %v241
  %v314 = vpop.f32.mrb[0].mxu0
  %v315 = vadd.f32 0.0, %v314
  %v316 = vpop.f32.mrb[0].mxu0
  %317 = vdwg.mxu0
  %s318 = scalar_lea.vmem %s4, 32
  %v319 = vld [vmem:[%s318] sm:$0xff]
  %v320 = vld [vmem:[%s318 + $0x8] sm:$0x3f]
  %v322 = vsel %vm148, %v319, 0
  %v325 = vsel %vm148, %v320, 0
  %327 = vmatprep.subr.mxu0 0.0
  %328 = vmatpush1.msra.mxu0 %v138
  %329 = vmatprep.subr.mxu0 0.0
  %330 = vmatpush1.msra.mxu0 %v157
  %331 = vmatprep.subr.mxu0 0.0
  %332 = vmatpush1.msra.mxu0 0.0
  %333 = vmatprep.subr.mxu0 0.0
  %334 = vmatpush1.msra.mxu0 0.0
  %335 = vmatprep.subr.mxu0 0.0
  %336 = vmatpush1.msra.mxu0 0.0
  %337 = vmatprep.subr.mxu0 0.0
  %338 = vmatpush1.msra.mxu0 0.0
  %339 = vmatprep.subr.mxu0 0.0
  %340 = vmatpush1.msra.mxu0 0.0
  %341 = vmatprep.subr.mxu0 0.0
  %342 = vmatpush1.msra.mxu0 0.0
  %343 = vmatprep.subr.mxu0 0.0
  %344 = vmatpush1.msra.mxu0 0.0
  %345 = vmatprep.subr.mxu0 0.0
  %346 = vmatpush1.msra.mxu0 0.0
  %347 = vmatprep.subr.mxu0 0.0
  %348 = vmatpush1.msra.mxu0 0.0
  %349 = vmatprep.subr.mxu0 0.0
  %350 = vmatpush1.msra.mxu0 0.0
  %351 = vmatprep.subr.mxu0 0.0
  %352 = vmatpush1.msra.mxu0 0.0
  %353 = vmatprep.subr.mxu0 0.0
  %354 = vmatpush1.msra.mxu0 0.0
  %355 = vmatprep.subr.mxu0 0.0
  %356 = vmatpush1.msra.mxu0 0.0
  %357 = vmatprep.subr.mxu0 0.0
  %358 = vmatpush1.msra.mxu0 0.0
  %359 = vmatprep.subr.mxu0 0.0
  %360 = vmatpush1.msra.mxu0 0.0
  %361 = vmatprep.subr.mxu0 0.0
  %362 = vmatpush1.msra.mxu0 0.0
  %363 = vmatprep.subr.mxu0 0.0
  %364 = vmatpush1.msra.mxu0 0.0
  %365 = vmatprep.subr.mxu0 0.0
  %366 = vmatpush1.msra.mxu0 0.0
  %367 = vmatprep.subr.mxu0 0.0
  %368 = vmatpush1.msra.mxu0 0.0
  %369 = vmatprep.subr.mxu0 0.0
  %370 = vmatpush1.msra.mxu0 0.0
  %371 = vmatprep.subr.mxu0 0.0
  %372 = vmatpush1.msra.mxu0 0.0
  %373 = vmatprep.subr.mxu0 0.0
  %374 = vmatpush1.msra.mxu0 0.0
  %375 = vmatprep.subr.mxu0 0.0
  %376 = vmatpush1.msra.mxu0 0.0
  %377 = vmatprep.subr.mxu0 0.0
  %378 = vmatpush1.msra.mxu0 0.0
  %379 = vmatprep.subr.mxu0 0.0
  %380 = vmatpush1.msra.mxu0 0.0
  %381 = vmatprep.subr.mxu0 0.0
  %382 = vmatpush1.msra.mxu0 0.0
  %383 = vmatprep.subr.mxu0 0.0
  %384 = vmatpush1.msra.mxu0 0.0
  %385 = vmatprep.subr.mxu0 0.0
  %386 = vmatpush1.msra.mxu0 0.0
  %387 = vmatprep.subr.mxu0 0.0
  %388 = vmatpush1.msra.mxu0 0.0
  %389 = vmatprep.subr.mxu0 0.0
  %390 = vmatpush1.msra.mxu0 0.0
  %391 = vmatprep.mubr.f32.mxu0 0.0
  %392 = vmatmul.mubr.f32.gmra.mrb[0].mxu0 %v322
  %v393 = vpop.f32.mrb[0].mxu0
  %v394 = vadd.f32 0.0, %v393
  %v395 = vpop.f32.mrb[0].mxu0
  %396 = vmatprep.mubr.f32.mxu0 0.0
  %397 = vmatmul.mubr.f32.gmra.mrb[0].mxu0 %v325
  %v398 = vpop.f32.mrb[0].mxu0
  %v399 = vadd.f32 0.0, %v398
  %v400 = vpop.f32.mrb[0].mxu0
  %401 = vdwg.mxu0
  %v402 = vld [vmem:[%s6] sm:$0xff]
  %v403 = vld [vmem:[%s6 + $0x8] sm:$0x3f]
  %v404 = vld [vmem:[%s5] sm:$0xff]
  %v405 = vld [vmem:[%s5 + $0x8] sm:$0xff]
  %v406 = vld [vmem:[%s5 + $0x10] sm:$0xff]
  %v407 = vld [vmem:[%s5 + $0x18] sm:$0xff]
  %v408 = vld [vmem:[%s5 + $0x20] sm:$0xff]
  %v409 = vld [vmem:[%s5 + $0x28] sm:$0xff]
  %v410 = vld [vmem:[%s5 + $0x30] sm:$0xff]
  %v411 = vld [vmem:[%s5 + $0x38] sm:$0xff]
  %v412 = vld [vmem:[%s5 + $0x40] sm:$0xff]
  %v413 = vld [vmem:[%s5 + $0x48] sm:$0xff]
  %v414 = vld [vmem:[%s5 + $0x50] sm:$0xff]
  %v415 = vld [vmem:[%s5 + $0x58] sm:$0xff]
  %v416 = vld [vmem:[%s5 + $0x60] sm:$0xff]
  %v417 = vld [vmem:[%s5 + $0x68] sm:$0xff]
  %v418 = vld [vmem:[%s5 + $0x70] sm:$0xff]
  %v419 = vld [vmem:[%s5 + $0x78] sm:$0xff]
  %v420 = vld [vmem:[%s5 + $0x80] sm:$0xff]
  %v421 = vld [vmem:[%s5 + $0x88] sm:$0xff]
  %v422 = vld [vmem:[%s5 + $0x90] sm:$0xff]
  %v423 = vld [vmem:[%s5 + $0x98] sm:$0xff]
  %v424 = vld [vmem:[%s5 + $0xa0] sm:$0xff]
  %v425 = vld [vmem:[%s5 + $0xa8] sm:$0xff]
  %v426 = vld [vmem:[%s5 + $0xb0] sm:$0xff]
  %v427 = vld [vmem:[%s5 + $0xb8] sm:$0xff]
  %v428 = vld [vmem:[%s5 + $0xc0] sm:$0xff]
  %v429 = vld [vmem:[%s5 + $0xc8] sm:$0xff]
  %v430 = vld [vmem:[%s5 + $0xd0] sm:$0xff]
  %v431 = vld [vmem:[%s5 + $0xd8] sm:$0xff]
  %v432 = vld [vmem:[%s5 + $0xe0] sm:$0xff]
  %v433 = vld [vmem:[%s5 + $0xe8] sm:$0xff]
  %v434 = vld [vmem:[%s5 + $0xf0] sm:$0xff]
  %v435 = vld [vmem:[%s5 + $0xf8] sm:$0xff]
  %v436 = vld [vmem:[%s5 + $0x100] sm:$0xff]
  %v437 = vld [vmem:[%s5 + $0x108] sm:$0xff]
  %v438 = vld [vmem:[%s5 + $0x110] sm:$0xff]
  %v439 = vld [vmem:[%s5 + $0x118] sm:$0xff]
  %v440 = vld [vmem:[%s5 + $0x120] sm:$0xff]
  %v441 = vld [vmem:[%s5 + $0x128] sm:$0xff]
  %v442 = vld [vmem:[%s5 + $0x130] sm:$0xff]
  %v443 = vld [vmem:[%s5 + $0x138] sm:$0xff]
  %v444 = vld [vmem:[%s5 + $0x140] sm:$0xff]
  %v445 = vld [vmem:[%s5 + $0x148] sm:$0xff]
  %v446 = vld [vmem:[%s5 + $0x150] sm:$0xff]
  %v447 = vld [vmem:[%s5 + $0x158] sm:$0xff]
  %v448 = vld [vmem:[%s5 + $0x160] sm:$0xff]
  %v449 = vld [vmem:[%s5 + $0x168] sm:$0xff]
  %v450 = vld [vmem:[%s5 + $0x170] sm:$0xff]
  %v451 = vld [vmem:[%s5 + $0x178] sm:$0xff]
  %452 = vmatprep.subr.mxu0 0.0
  %453 = vmatpush1.msra.mxu0 %v404
  %454 = vmatprep.subr.mxu0 0.0
  %455 = vmatpush1.msra.mxu0 %v405
  %456 = vmatprep.subr.mxu0 0.0
  %457 = vmatpush1.msra.mxu0 %v406
  %458 = vmatprep.subr.mxu0 0.0
  %459 = vmatpush1.msra.mxu0 %v407
  %460 = vmatprep.subr.mxu0 0.0
  %461 = vmatpush1.msra.mxu0 %v408
  %462 = vmatprep.subr.mxu0 0.0
  %463 = vmatpush1.msra.mxu0 %v409
  %464 = vmatprep.subr.mxu0 0.0
  %465 = vmatpush1.msra.mxu0 %v410
  %466 = vmatprep.subr.mxu0 0.0
  %467 = vmatpush1.msra.mxu0 %v411
  %468 = vmatprep.subr.mxu0 0.0
  %469 = vmatpush1.msra.mxu0 %v412
  %470 = vmatprep.subr.mxu0 0.0
  %471 = vmatpush1.msra.mxu0 %v413
  %472 = vmatprep.subr.mxu0 0.0
  %473 = vmatpush1.msra.mxu0 %v414
  %474 = vmatprep.subr.mxu0 0.0
  %475 = vmatpush1.msra.mxu0 %v415
  %476 = vmatprep.subr.mxu0 0.0
  %477 = vmatpush1.msra.mxu0 %v416
  %478 = vmatprep.subr.mxu0 0.0
  %479 = vmatpush1.msra.mxu0 %v417
  %480 = vmatprep.subr.mxu0 0.0
  %481 = vmatpush1.msra.mxu0 %v418
  %482 = vmatprep.subr.mxu0 0.0
  %483 = vmatpush1.msra.mxu0 %v419
  %484 = vmatprep.subr.mxu0 0.0
  %485 = vmatpush1.msra.mxu0 %v420
  %486 = vmatprep.subr.mxu0 0.0
  %487 = vmatpush1.msra.mxu0 %v421
  %488 = vmatprep.subr.mxu0 0.0
  %489 = vmatpush1.msra.mxu0 %v422
  %490 = vmatprep.subr.mxu0 0.0
  %491 = vmatpush1.msra.mxu0 %v423
  %492 = vmatprep.subr.mxu0 0.0
  %493 = vmatpush1.msra.mxu0 %v424
  %494 = vmatprep.subr.mxu0 0.0
  %495 = vmatpush1.msra.mxu0 %v425
  %496 = vmatprep.subr.mxu0 0.0
  %497 = vmatpush1.msra.mxu0 %v426
  %498 = vmatprep.subr.mxu0 0.0
  %499 = vmatpush1.msra.mxu0 %v427
  %500 = vmatprep.subr.mxu0 0.0
  %501 = vmatpush1.msra.mxu0 %v428
  %502 = vmatprep.subr.mxu0 0.0
  %503 = vmatpush1.msra.mxu0 %v429
  %504 = vmatprep.subr.mxu0 0.0
  %505 = vmatpush1.msra.mxu0 %v430
  %506 = vmatprep.subr.mxu0 0.0
  %507 = vmatpush1.msra.mxu0 %v431
  %508 = vmatprep.subr.mxu0 0.0
  %509 = vmatpush1.msra.mxu0 %v432
  %510 = vmatprep.subr.mxu0 0.0
  %511 = vmatpush1.msra.mxu0 %v433
  %512 = vmatprep.subr.mxu0 0.0
  %513 = vmatpush1.msra.mxu0 %v434
  %514 = vmatprep.subr.mxu0 0.0
  %515 = vmatpush1.msra.mxu0 %v435
  %516 = vmatprep.mubr.f32.mxu0 %v310
  %517 = vmatmul.mubr.f32.gmra.mrb[0].mxu0 %v226
  %v518 = vpop.f32.mrb[0].mxu0
  %v519 = vadd.f32 0.0, %v518
  %v520 = vpop.f32.mrb[0].mxu0
  %521 = vmatprep.mubr.f32.mxu0 %v315
  %522 = vmatmul.mubr.f32.gmra.mrb[0].mxu0 %v231
  %v523 = vpop.f32.mrb[0].mxu0
  %v524 = vadd.f32 0.0, %v523
  %v525 = vpop.f32.mrb[0].mxu0
  %526 = vdwg.mxu0
  %527 = vmatprep.subr.mxu0 0.0
  %528 = vmatpush1.msra.mxu0 %v436
  %529 = vmatprep.subr.mxu0 0.0
  %530 = vmatpush1.msra.mxu0 %v437
  %531 = vmatprep.subr.mxu0 0.0
  %532 = vmatpush1.msra.mxu0 %v438
  %533 = vmatprep.subr.mxu0 0.0
  %534 = vmatpush1.msra.mxu0 %v439
  %535 = vmatprep.subr.mxu0 0.0
  %536 = vmatpush1.msra.mxu0 %v440
  %537 = vmatprep.subr.mxu0 0.0
  %538 = vmatpush1.msra.mxu0 %v441
  %539 = vmatprep.subr.mxu0 0.0
  %540 = vmatpush1.msra.mxu0 %v442
  %541 = vmatprep.subr.mxu0 0.0
  %542 = vmatpush1.msra.mxu0 %v443
  %543 = vmatprep.subr.mxu0 0.0
  %544 = vmatpush1.msra.mxu0 %v444
  %545 = vmatprep.subr.mxu0 0.0
  %546 = vmatpush1.msra.mxu0 %v445
  %547 = vmatprep.subr.mxu0 0.0
  %548 = vmatpush1.msra.mxu0 %v446
  %549 = vmatprep.subr.mxu0 0.0
  %550 = vmatpush1.msra.mxu0 %v447
  %551 = vmatprep.subr.mxu0 0.0
  %552 = vmatpush1.msra.mxu0 %v448
  %553 = vmatprep.subr.mxu0 0.0
  %554 = vmatpush1.msra.mxu0 %v449
  %555 = vmatprep.subr.mxu0 0.0
  %556 = vmatpush1.msra.mxu0 %v450
  %557 = vmatprep.subr.mxu0 0.0
  %558 = vmatpush1.msra.mxu0 %v451
  %559 = vmatprep.subr.mxu0 0.0
  %560 = vmatpush1.msra.mxu0 0.0
  %561 = vmatprep.subr.mxu0 0.0
  %562 = vmatpush1.msra.mxu0 0.0
  %563 = vmatprep.subr.mxu0 0.0
  %564 = vmatpush1.msra.mxu0 0.0
  %565 = vmatprep.subr.mxu0 0.0
  %566 = vmatpush1.msra.mxu0 0.0
  %567 = vmatprep.subr.mxu0 0.0
  %568 = vmatpush1.msra.mxu0 0.0
  %569 = vmatprep.subr.mxu0 0.0
  %570 = vmatpush1.msra.mxu0 0.0
  %571 = vmatprep.subr.mxu0 0.0
  %572 = vmatpush1.msra.mxu0 0.0
  %573 = vmatprep.subr.mxu0 0.0
  %574 = vmatpush1.msra.mxu0 0.0
  %575 = vmatprep.subr.mxu0 0.0
  %576 = vmatpush1.msra.mxu0 0.0
  %577 = vmatprep.subr.mxu0 0.0
  %578 = vmatpush1.msra.mxu0 0.0
  %579 = vmatprep.subr.mxu0 0.0
  %580 = vmatpush1.msra.mxu0 0.0
  %581 = vmatprep.subr.mxu0 0.0
  %582 = vmatpush1.msra.mxu0 0.0
  %583 = vmatprep.subr.mxu0 0.0
  %584 = vmatpush1.msra.mxu0 0.0
  %585 = vmatprep.subr.mxu0 0.0
  %586 = vmatpush1.msra.mxu0 0.0
  %587 = vmatprep.subr.mxu0 0.0
  %588 = vmatpush1.msra.mxu0 0.0
  %589 = vmatprep.subr.mxu0 0.0
  %590 = vmatpush1.msra.mxu0 0.0
  %591 = vmatprep.mubr.f32.mxu0 0.0
  %592 = vmatmul.mubr.f32.gmra.mrb[0].mxu0 %v394
  %v593 = vpop.f32.mrb[0].mxu0
  %v594 = vadd.f32 %v519, %v593
  %v595 = vpop.f32.mrb[0].mxu0
  %596 = vmatprep.mubr.f32.mxu0 0.0
  %597 = vmatmul.mubr.f32.gmra.mrb[0].mxu0 %v399
  %v598 = vpop.f32.mrb[0].mxu0
  %v599 = vadd.f32 %v524, %v598
  %v600 = vpop.f32.mrb[0].mxu0
  %601 = vdwg.mxu0
  %v602 = vadd.f32 %v402, %v594
  %v603 = vadd.f32 %v403, %v599
  %v604 = vmax.f32 %v602, 0.0
  %v605 = vmax.f32 %v603, 0.0
  %v606 = vld [vmem:[%s7] sm:$0xff]
  %v607 = vld [vmem:[%s7 + $0x8] sm:$0xff]
  %v608 = vld [vmem:[%s7 + $0x10] sm:$0xff]
  %v609 = vld [vmem:[%s7 + $0x18] sm:$0xf]
  %v611 = vsel %vm148, %v606, 0
  %v614 = vsel %vm148, %v607, 0
  %v617 = vsel %vm148, %v608, 0
  %v620 = vsel %vm148, %v609, 0
  %v623 = vsel %vm155, %v605, 0
  %625 = vmatprep.subr.mxu0 0.0
  %626 = vmatpush1.msra.mxu0 %v604
  %627 = vmatprep.subr.mxu0 0.0
  %628 = vmatpush1.msra.mxu0 %v623
  %629 = vmatprep.subr.mxu0 0.0
  %630 = vmatpush1.msra.mxu0 0.0
  %631 = vmatprep.subr.mxu0 0.0
  %632 = vmatpush1.msra.mxu0 0.0
  %633 = vmatprep.subr.mxu0 0.0
  %634 = vmatpush1.msra.mxu0 0.0
  %635 = vmatprep.subr.mxu0 0.0
  %636 = vmatpush1.msra.mxu0 0.0
  %637 = vmatprep.subr.mxu0 0.0
  %638 = vmatpush1.msra.mxu0 0.0
  %639 = vmatprep.subr.mxu0 0.0
  %640 = vmatpush1.msra.mxu0 0.0
  %641 = vmatprep.subr.mxu0 0.0
  %642 = vmatpush1.msra.mxu0 0.0
  %643 = vmatprep.subr.mxu0 0.0
  %644 = vmatpush1.msra.mxu0 0.0
  %645 = vmatprep.subr.mxu0 0.0
  %646 = vmatpush1.msra.mxu0 0.0
  %647 = vmatprep.subr.mxu0 0.0
  %648 = vmatpush1.msra.mxu0 0.0
  %649 = vmatprep.subr.mxu0 0.0
  %650 = vmatpush1.msra.mxu0 0.0
  %651 = vmatprep.subr.mxu0 0.0
  %652 = vmatpush1.msra.mxu0 0.0
  %653 = vmatprep.subr.mxu0 0.0
  %654 = vmatpush1.msra.mxu0 0.0
  %655 = vmatprep.subr.mxu0 0.0
  %656 = vmatpush1.msra.mxu0 0.0
  %657 = vmatprep.subr.mxu0 0.0
  %658 = vmatpush1.msra.mxu0 0.0
  %659 = vmatprep.subr.mxu0 0.0
  %660 = vmatpush1.msra.mxu0 0.0
  %661 = vmatprep.subr.mxu0 0.0
  %662 = vmatpush1.msra.mxu0 0.0
  %663 = vmatprep.subr.mxu0 0.0
  %664 = vmatpush1.msra.mxu0 0.0
  %665 = vmatprep.subr.mxu0 0.0
  %666 = vmatpush1.msra.mxu0 0.0
  %667 = vmatprep.subr.mxu0 0.0
  %668 = vmatpush1.msra.mxu0 0.0
  %669 = vmatprep.subr.mxu0 0.0
  %670 = vmatpush1.msra.mxu0 0.0
  %671 = vmatprep.subr.mxu0 0.0
  %672 = vmatpush1.msra.mxu0 0.0
  %673 = vmatprep.subr.mxu0 0.0
  %674 = vmatpush1.msra.mxu0 0.0
  %675 = vmatprep.subr.mxu0 0.0
  %676 = vmatpush1.msra.mxu0 0.0
  %677 = vmatprep.subr.mxu0 0.0
  %678 = vmatpush1.msra.mxu0 0.0
  %679 = vmatprep.subr.mxu0 0.0
  %680 = vmatpush1.msra.mxu0 0.0
  %681 = vmatprep.subr.mxu0 0.0
  %682 = vmatpush1.msra.mxu0 0.0
  %683 = vmatprep.subr.mxu0 0.0
  %684 = vmatpush1.msra.mxu0 0.0
  %685 = vmatprep.subr.mxu0 0.0
  %686 = vmatpush1.msra.mxu0 0.0
  %687 = vmatprep.subr.mxu0 0.0
  %688 = vmatpush1.msra.mxu0 0.0
  %689 = vmatprep.mubr.f32.mxu0 0.0
  %690 = vmatmul.mubr.f32.gmra.mrb[0].mxu0 %v611
  %v691 = vpop.f32.mrb[0].mxu0
  %v692 = vadd.f32 0.0, %v691
  %v693 = vpop.f32.mrb[0].mxu0
  %694 = vmatprep.mubr.f32.mxu0 0.0
  %695 = vmatmul.mubr.f32.gmra.mrb[0].mxu0 %v614
  %v696 = vpop.f32.mrb[0].mxu0
  %v697 = vadd.f32 0.0, %v696
  %v698 = vpop.f32.mrb[0].mxu0
  %699 = vmatprep.mubr.f32.mxu0 0.0
  %700 = vmatmul.mubr.f32.gmra.mrb[0].mxu0 %v617
  %v701 = vpop.f32.mrb[0].mxu0
  %v702 = vadd.f32 0.0, %v701
  %v703 = vpop.f32.mrb[0].mxu0
  %704 = vmatprep.mubr.f32.mxu0 0.0
  %705 = vmatmul.mubr.f32.gmra.mrb[0].mxu0 %v620
  %v706 = vpop.f32.mrb[0].mxu0
  %v707 = vadd.f32 0.0, %v706
  %v708 = vpop.f32.mrb[0].mxu0
  %709 = vdwg.mxu0
  %s710 = scalar_lea.vmem %s7, 32
  %v711 = vld [vmem:[%s710] sm:$0xff]
  %v712 = vld [vmem:[%s710 + $0x8] sm:$0xff]
  %v713 = vld [vmem:[%s710 + $0x10] sm:$0xff]
  %v714 = vld [vmem:[%s710 + $0x18] sm:$0xf]
  %v716 = vsel %vm148, %v711, 0
  %v719 = vsel %vm148, %v712, 0
  %v722 = vsel %vm148, %v713, 0
  %v725 = vsel %vm148, %v714, 0
  %727 = vmatprep.subr.mxu0 0.0
  %728 = vmatpush1.msra.mxu0 %v604
  %729 = vmatprep.subr.mxu0 0.0
  %730 = vmatpush1.msra.mxu0 %v623
  %731 = vmatprep.subr.mxu0 0.0
  %732 = vmatpush1.msra.mxu0 0.0
  %733 = vmatprep.subr.mxu0 0.0
  %734 = vmatpush1.msra.mxu0 0.0
  %735 = vmatprep.subr.mxu0 0.0
  %736 = vmatpush1.msra.mxu0 0.0
  %737 = vmatprep.subr.mxu0 0.0
  %738 = vmatpush1.msra.mxu0 0.0
  %739 = vmatprep.subr.mxu0 0.0
  %740 = vmatpush1.msra.mxu0 0.0
  %741 = vmatprep.subr.mxu0 0.0
  %742 = vmatpush1.msra.mxu0 0.0
  %743 = vmatprep.subr.mxu0 0.0
  %744 = vmatpush1.msra.mxu0 0.0
  %745 = vmatprep.subr.mxu0 0.0
  %746 = vmatpush1.msra.mxu0 0.0
  %747 = vmatprep.subr.mxu0 0.0
  %748 = vmatpush1.msra.mxu0 0.0
  %749 = vmatprep.subr.mxu0 0.0
  %750 = vmatpush1.msra.mxu0 0.0
  %751 = vmatprep.subr.mxu0 0.0
  %752 = vmatpush1.msra.mxu0 0.0
  %753 = vmatprep.subr.mxu0 0.0
  %754 = vmatpush1.msra.mxu0 0.0
  %755 = vmatprep.subr.mxu0 0.0
  %756 = vmatpush1.msra.mxu0 0.0
  %757 = vmatprep.subr.mxu0 0.0
  %758 = vmatpush1.msra.mxu0 0.0
  %759 = vmatprep.subr.mxu0 0.0
  %760 = vmatpush1.msra.mxu0 0.0
  %761 = vmatprep.subr.mxu0 0.0
  %762 = vmatpush1.msra.mxu0 0.0
  %763 = vmatprep.subr.mxu0 0.0
  %764 = vmatpush1.msra.mxu0 0.0
  %765 = vmatprep.subr.mxu0 0.0
  %766 = vmatpush1.msra.mxu0 0.0
  %767 = vmatprep.subr.mxu0 0.0
  %768 = vmatpush1.msra.mxu0 0.0
  %769 = vmatprep.subr.mxu0 0.0
  %770 = vmatpush1.msra.mxu0 0.0
  %771 = vmatprep.subr.mxu0 0.0
  %772 = vmatpush1.msra.mxu0 0.0
  %773 = vmatprep.subr.mxu0 0.0
  %774 = vmatpush1.msra.mxu0 0.0
  %775 = vmatprep.subr.mxu0 0.0
  %776 = vmatpush1.msra.mxu0 0.0
  %777 = vmatprep.subr.mxu0 0.0
  %778 = vmatpush1.msra.mxu0 0.0
  %779 = vmatprep.subr.mxu0 0.0
  %780 = vmatpush1.msra.mxu0 0.0
  %781 = vmatprep.subr.mxu0 0.0
  %782 = vmatpush1.msra.mxu0 0.0
  %783 = vmatprep.subr.mxu0 0.0
  %784 = vmatpush1.msra.mxu0 0.0
  %785 = vmatprep.subr.mxu0 0.0
  %786 = vmatpush1.msra.mxu0 0.0
  %787 = vmatprep.subr.mxu0 0.0
  %788 = vmatpush1.msra.mxu0 0.0
  %789 = vmatprep.subr.mxu0 0.0
  %790 = vmatpush1.msra.mxu0 0.0
  %791 = vmatprep.mubr.f32.mxu0 0.0
  %792 = vmatmul.mubr.f32.gmra.mrb[0].mxu0 %v716
  %v793 = vpop.f32.mrb[0].mxu0
  %v794 = vadd.f32 0.0, %v793
  %v795 = vpop.f32.mrb[0].mxu0
  %796 = vmatprep.mubr.f32.mxu0 0.0
  %797 = vmatmul.mubr.f32.gmra.mrb[0].mxu0 %v719
  %v798 = vpop.f32.mrb[0].mxu0
  %v799 = vadd.f32 0.0, %v798
  %v800 = vpop.f32.mrb[0].mxu0
  %801 = vmatprep.mubr.f32.mxu0 0.0
  %802 = vmatmul.mubr.f32.gmra.mrb[0].mxu0 %v722
  %v803 = vpop.f32.mrb[0].mxu0
  %v804 = vadd.f32 0.0, %v803
  %v805 = vpop.f32.mrb[0].mxu0
  %806 = vmatprep.mubr.f32.mxu0 0.0
  %807 = vmatmul.mubr.f32.gmra.mrb[0].mxu0 %v725
  %v808 = vpop.f32.mrb[0].mxu0
  %v809 = vadd.f32 0.0, %v808
  %v810 = vpop.f32.mrb[0].mxu0
  %811 = vdwg.mxu0
  %s812 = scalar_lea.vmem %s7, 64
  %v813 = vld [vmem:[%s812] sm:$0xff]
  %v814 = vld [vmem:[%s812 + $0x8] sm:$0xff]
  %v815 = vld [vmem:[%s812 + $0x10] sm:$0xff]
  %v816 = vld [vmem:[%s812 + $0x18] sm:$0xf]
  %v818 = vsel %vm148, %v813, 0
  %v821 = vsel %vm148, %v814, 0
  %v824 = vsel %vm148, %v815, 0
  %v827 = vsel %vm148, %v816, 0
  %829 = vmatprep.subr.mxu0 0.0
  %830 = vmatpush1.msra.mxu0 %v604
  %831 = vmatprep.subr.mxu0 0.0
  %832 = vmatpush1.msra.mxu0 %v623
  %833 = vmatprep.subr.mxu0 0.0
  %834 = vmatpush1.msra.mxu0 0.0
  %835 = vmatprep.subr.mxu0 0.0
  %836 = vmatpush1.msra.mxu0 0.0
  %837 = vmatprep.subr.mxu0 0.0
  %838 = vmatpush1.msra.mxu0 0.0
  %839 = vmatprep.subr.mxu0 0.0
  %840 = vmatpush1.msra.mxu0 0.0
  %841 = vmatprep.subr.mxu0 0.0
  %842 = vmatpush1.msra.mxu0 0.0
  %843 = vmatprep.subr.mxu0 0.0
  %844 = vmatpush1.msra.mxu0 0.0
  %845 = vmatprep.subr.mxu0 0.0
  %846 = vmatpush1.msra.mxu0 0.0
  %847 = vmatprep.subr.mxu0 0.0
  %848 = vmatpush1.msra.mxu0 0.0
  %849 = vmatprep.subr.mxu0 0.0
  %850 = vmatpush1.msra.mxu0 0.0
  %851 = vmatprep.subr.mxu0 0.0
  %852 = vmatpush1.msra.mxu0 0.0
  %853 = vmatprep.subr.mxu0 0.0
  %854 = vmatpush1.msra.mxu0 0.0
  %855 = vmatprep.subr.mxu0 0.0
  %856 = vmatpush1.msra.mxu0 0.0
  %857 = vmatprep.subr.mxu0 0.0
  %858 = vmatpush1.msra.mxu0 0.0
  %859 = vmatprep.subr.mxu0 0.0
  %860 = vmatpush1.msra.mxu0 0.0
  %861 = vmatprep.subr.mxu0 0.0
  %862 = vmatpush1.msra.mxu0 0.0
  %863 = vmatprep.subr.mxu0 0.0
  %864 = vmatpush1.msra.mxu0 0.0
  %865 = vmatprep.subr.mxu0 0.0
  %866 = vmatpush1.msra.mxu0 0.0
  %867 = vmatprep.subr.mxu0 0.0
  %868 = vmatpush1.msra.mxu0 0.0
  %869 = vmatprep.subr.mxu0 0.0
  %870 = vmatpush1.msra.mxu0 0.0
  %871 = vmatprep.subr.mxu0 0.0
  %872 = vmatpush1.msra.mxu0 0.0
  %873 = vmatprep.subr.mxu0 0.0
  %874 = vmatpush1.msra.mxu0 0.0
  %875 = vmatprep.subr.mxu0 0.0
  %876 = vmatpush1.msra.mxu0 0.0
  %877 = vmatprep.subr.mxu0 0.0
  %878 = vmatpush1.msra.mxu0 0.0
  %879 = vmatprep.subr.mxu0 0.0
  %880 = vmatpush1.msra.mxu0 0.0
  %881 = vmatprep.subr.mxu0 0.0
  %882 = vmatpush1.msra.mxu0 0.0
  %883 = vmatprep.subr.mxu0 0.0
  %884 = vmatpush1.msra.mxu0 0.0
  %885 = vmatprep.subr.mxu0 0.0
  %886 = vmatpush1.msra.mxu0 0.0
  %887 = vmatprep.subr.mxu0 0.0
  %888 = vmatpush1.msra.mxu0 0.0
  %889 = vmatprep.subr.mxu0 0.0
  %890 = vmatpush1.msra.mxu0 0.0
  %891 = vmatprep.subr.mxu0 0.0
  %892 = vmatpush1.msra.mxu0 0.0
  %893 = vmatprep.mubr.f32.mxu0 0.0
  %894 = vmatmul.mubr.f32.gmra.mrb[0].mxu0 %v818
  %v895 = vpop.f32.mrb[0].mxu0
  %v896 = vadd.f32 0.0, %v895
  %v897 = vpop.f32.mrb[0].mxu0
  %898 = vmatprep.mubr.f32.mxu0 0.0
  %899 = vmatmul.mubr.f32.gmra.mrb[0].mxu0 %v821
  %v900 = vpop.f32.mrb[0].mxu0
  %v901 = vadd.f32 0.0, %v900
  %v902 = vpop.f32.mrb[0].mxu0
  %903 = vmatprep.mubr.f32.mxu0 0.0
  %904 = vmatmul.mubr.f32.gmra.mrb[0].mxu0 %v824
  %v905 = vpop.f32.mrb[0].mxu0
  %v906 = vadd.f32 0.0, %v905
  %v907 = vpop.f32.mrb[0].mxu0
  %908 = vmatprep.mubr.f32.mxu0 0.0
  %909 = vmatmul.mubr.f32.gmra.mrb[0].mxu0 %v827
  %v910 = vpop.f32.mrb[0].mxu0
  %v911 = vadd.f32 0.0, %v910
  %v912 = vpop.f32.mrb[0].mxu0
  %913 = vdwg.mxu0
  %v914 = vld [vmem:[%s9] sm:$0xff]
  %v915 = vld [vmem:[%s9 + $0x8] sm:$0xff]
  %v916 = vld [vmem:[%s9 + $0x10] sm:$0xff]
  %v917 = vld [vmem:[%s9 + $0x18] sm:$0xf]
  %v918 = vld [vmem:[%s8] sm:$0xff]
  %v919 = vld [vmem:[%s8 + $0x8] sm:$0xff]
  %v920 = vld [vmem:[%s8 + $0x10] sm:$0xff]
  %v921 = vld [vmem:[%s8 + $0x18] sm:$0xff]
  %v922 = vld [vmem:[%s8 + $0x20] sm:$0xff]
  %v923 = vld [vmem:[%s8 + $0x28] sm:$0xff]
  %v924 = vld [vmem:[%s8 + $0x30] sm:$0xff]
  %v925 = vld [vmem:[%s8 + $0x38] sm:$0xff]
  %v926 = vld [vmem:[%s8 + $0x40] sm:$0xff]
  %v927 = vld [vmem:[%s8 + $0x48] sm:$0xff]
  %v928 = vld [vmem:[%s8 + $0x50] sm:$0xff]
  %v929 = vld [vmem:[%s8 + $0x58] sm:$0xff]
  %v930 = vld [vmem:[%s8 + $0x60] sm:$0xff]
  %v931 = vld [vmem:[%s8 + $0x68] sm:$0xff]
  %v932 = vld [vmem:[%s8 + $0x70] sm:$0xff]
  %v933 = vld [vmem:[%s8 + $0x78] sm:$0xff]
  %v934 = vld [vmem:[%s8 + $0x80] sm:$0xff]
  %v935 = vld [vmem:[%s8 + $0x88] sm:$0xff]
  %v936 = vld [vmem:[%s8 + $0x90] sm:$0xff]
  %v937 = vld [vmem:[%s8 + $0x98] sm:$0xff]
  %v938 = vld [vmem:[%s8 + $0xa0] sm:$0xff]
  %v939 = vld [vmem:[%s8 + $0xa8] sm:$0xff]
  %v940 = vld [vmem:[%s8 + $0xb0] sm:$0xff]
  %v941 = vld [vmem:[%s8 + $0xb8] sm:$0xff]
  %v942 = vld [vmem:[%s8 + $0xc0] sm:$0xff]
  %v943 = vld [vmem:[%s8 + $0xc8] sm:$0xff]
  %v944 = vld [vmem:[%s8 + $0xd0] sm:$0xff]
  %v945 = vld [vmem:[%s8 + $0xd8] sm:$0xff]
  %v946 = vld [vmem:[%s8 + $0xe0] sm:$0xff]
  %v947 = vld [vmem:[%s8 + $0xe8] sm:$0xff]
  %v948 = vld [vmem:[%s8 + $0xf0] sm:$0xff]
  %v949 = vld [vmem:[%s8 + $0xf8] sm:$0xff]
  %v950 = vld [vmem:[%s8 + $0x100] sm:$0xff]
  %v951 = vld [vmem:[%s8 + $0x108] sm:$0xff]
  %v952 = vld [vmem:[%s8 + $0x110] sm:$0xff]
  %v953 = vld [vmem:[%s8 + $0x118] sm:$0xff]
  %v954 = vld [vmem:[%s8 + $0x120] sm:$0xff]
  %v955 = vld [vmem:[%s8 + $0x128] sm:$0xff]
  %v956 = vld [vmem:[%s8 + $0x130] sm:$0xff]
  %v957 = vld [vmem:[%s8 + $0x138] sm:$0xff]
  %v958 = vld [vmem:[%s8 + $0x140] sm:$0xff]
  %v959 = vld [vmem:[%s8 + $0x148] sm:$0xff]
  %v960 = vld [vmem:[%s8 + $0x150] sm:$0xff]
  %v961 = vld [vmem:[%s8 + $0x158] sm:$0xff]
  %v962 = vld [vmem:[%s8 + $0x160] sm:$0xff]
  %v963 = vld [vmem:[%s8 + $0x168] sm:$0xff]
  %v964 = vld [vmem:[%s8 + $0x170] sm:$0xff]
  %v965 = vld [vmem:[%s8 + $0x178] sm:$0xff]
  %966 = vmatprep.subr.mxu0 0.0
  %967 = vmatpush1.msra.mxu0 %v918
  %968 = vmatprep.subr.mxu0 0.0
  %969 = vmatpush1.msra.mxu0 %v919
  %970 = vmatprep.subr.mxu0 0.0
  %971 = vmatpush1.msra.mxu0 %v920
  %972 = vmatprep.subr.mxu0 0.0
  %973 = vmatpush1.msra.mxu0 %v921
  %974 = vmatprep.subr.mxu0 0.0
  %975 = vmatpush1.msra.mxu0 %v922
  %976 = vmatprep.subr.mxu0 0.0
  %977 = vmatpush1.msra.mxu0 %v923
  %978 = vmatprep.subr.mxu0 0.0
  %979 = vmatpush1.msra.mxu0 %v924
  %980 = vmatprep.subr.mxu0 0.0
  %981 = vmatpush1.msra.mxu0 %v925
  %982 = vmatprep.subr.mxu0 0.0
  %983 = vmatpush1.msra.mxu0 %v926
  %984 = vmatprep.subr.mxu0 0.0
  %985 = vmatpush1.msra.mxu0 %v927
  %986 = vmatprep.subr.mxu0 0.0
  %987 = vmatpush1.msra.mxu0 %v928
  %988 = vmatprep.subr.mxu0 0.0
  %989 = vmatpush1.msra.mxu0 %v929
  %990 = vmatprep.subr.mxu0 0.0
  %991 = vmatpush1.msra.mxu0 %v930
  %992 = vmatprep.subr.mxu0 0.0
  %993 = vmatpush1.msra.mxu0 %v931
  %994 = vmatprep.subr.mxu0 0.0
  %995 = vmatpush1.msra.mxu0 %v932
  %996 = vmatprep.subr.mxu0 0.0
  %997 = vmatpush1.msra.mxu0 %v933
  %998 = vmatprep.subr.mxu0 0.0
  %999 = vmatpush1.msra.mxu0 %v934
  %1000 = vmatprep.subr.mxu0 0.0
  %1001 = vmatpush1.msra.mxu0 %v935
  %1002 = vmatprep.subr.mxu0 0.0
  %1003 = vmatpush1.msra.mxu0 %v936
  %1004 = vmatprep.subr.mxu0 0.0
  %1005 = vmatpush1.msra.mxu0 %v937
  %1006 = vmatprep.subr.mxu0 0.0
  %1007 = vmatpush1.msra.mxu0 %v938
  %1008 = vmatprep.subr.mxu0 0.0
  %1009 = vmatpush1.msra.mxu0 %v939
  %1010 = vmatprep.subr.mxu0 0.0
  %1011 = vmatpush1.msra.mxu0 %v940
  %1012 = vmatprep.subr.mxu0 0.0
  %1013 = vmatpush1.msra.mxu0 %v941
  %1014 = vmatprep.subr.mxu0 0.0
  %1015 = vmatpush1.msra.mxu0 %v942
  %1016 = vmatprep.subr.mxu0 0.0
  %1017 = vmatpush1.msra.mxu0 %v943
  %1018 = vmatprep.subr.mxu0 0.0
  %1019 = vmatpush1.msra.mxu0 %v944
  %1020 = vmatprep.subr.mxu0 0.0
  %1021 = vmatpush1.msra.mxu0 %v945
  %1022 = vmatprep.subr.mxu0 0.0
  %1023 = vmatpush1.msra.mxu0 %v946
  %1024 = vmatprep.subr.mxu0 0.0
  %1025 = vmatpush1.msra.mxu0 %v947
  %1026 = vmatprep.subr.mxu0 0.0
  %1027 = vmatpush1.msra.mxu0 %v948
  %1028 = vmatprep.subr.mxu0 0.0
  %1029 = vmatpush1.msra.mxu0 %v949
  %1030 = vmatprep.mubr.f32.mxu0 %v794
  %1031 = vmatmul.mubr.f32.gmra.mrb[0].mxu0 %v692
  %v1032 = vpop.f32.mrb[0].mxu0
  %v1033 = vadd.f32 0.0, %v1032
  %v1034 = vpop.f32.mrb[0].mxu0
  %1035 = vmatprep.mubr.f32.mxu0 %v799
  %1036 = vmatmul.mubr.f32.gmra.mrb[0].mxu0 %v697
  %v1037 = vpop.f32.mrb[0].mxu0
  %v1038 = vadd.f32 0.0, %v1037
  %v1039 = vpop.f32.mrb[0].mxu0
  %1040 = vmatprep.mubr.f32.mxu0 %v804
  %1041 = vmatmul.mubr.f32.gmra.mrb[0].mxu0 %v702
  %v1042 = vpop.f32.mrb[0].mxu0
  %v1043 = vadd.f32 0.0, %v1042
  %v1044 = vpop.f32.mrb[0].mxu0
  %1045 = vmatprep.mubr.f32.mxu0 %v809
  %1046 = vmatmul.mubr.f32.gmra.mrb[0].mxu0 %v707
  %v1047 = vpop.f32.mrb[0].mxu0
  %v1048 = vadd.f32 0.0, %v1047
  %v1049 = vpop.f32.mrb[0].mxu0
  %1050 = vdwg.mxu0
  %1051 = vmatprep.subr.mxu0 0.0
  %1052 = vmatpush1.msra.mxu0 %v950
  %1053 = vmatprep.subr.mxu0 0.0
  %1054 = vmatpush1.msra.mxu0 %v951
  %1055 = vmatprep.subr.mxu0 0.0
  %1056 = vmatpush1.msra.mxu0 %v952
  %1057 = vmatprep.subr.mxu0 0.0
  %1058 = vmatpush1.msra.mxu0 %v953
  %1059 = vmatprep.subr.mxu0 0.0
  %1060 = vmatpush1.msra.mxu0 %v954
  %1061 = vmatprep.subr.mxu0 0.0
  %1062 = vmatpush1.msra.mxu0 %v955
  %1063 = vmatprep.subr.mxu0 0.0
  %1064 = vmatpush1.msra.mxu0 %v956
  %1065 = vmatprep.subr.mxu0 0.0
  %1066 = vmatpush1.msra.mxu0 %v957
  %1067 = vmatprep.subr.mxu0 0.0
  %1068 = vmatpush1.msra.mxu0 %v958
  %1069 = vmatprep.subr.mxu0 0.0
  %1070 = vmatpush1.msra.mxu0 %v959
  %1071 = vmatprep.subr.mxu0 0.0
  %1072 = vmatpush1.msra.mxu0 %v960
  %1073 = vmatprep.subr.mxu0 0.0
  %1074 = vmatpush1.msra.mxu0 %v961
  %1075 = vmatprep.subr.mxu0 0.0
  %1076 = vmatpush1.msra.mxu0 %v962
  %1077 = vmatprep.subr.mxu0 0.0
  %1078 = vmatpush1.msra.mxu0 %v963
  %1079 = vmatprep.subr.mxu0 0.0
  %1080 = vmatpush1.msra.mxu0 %v964
  %1081 = vmatprep.subr.mxu0 0.0
  %1082 = vmatpush1.msra.mxu0 %v965
  %1083 = vmatprep.subr.mxu0 0.0
  %1084 = vmatpush1.msra.mxu0 0.0
  %1085 = vmatprep.subr.mxu0 0.0
  %1086 = vmatpush1.msra.mxu0 0.0
  %1087 = vmatprep.subr.mxu0 0.0
  %1088 = vmatpush1.msra.mxu0 0.0
  %1089 = vmatprep.subr.mxu0 0.0
  %1090 = vmatpush1.msra.mxu0 0.0
  %1091 = vmatprep.subr.mxu0 0.0
  %1092 = vmatpush1.msra.mxu0 0.0
  %1093 = vmatprep.subr.mxu0 0.0
  %1094 = vmatpush1.msra.mxu0 0.0
  %1095 = vmatprep.subr.mxu0 0.0
  %1096 = vmatpush1.msra.mxu0 0.0
  %1097 = vmatprep.subr.mxu0 0.0
  %1098 = vmatpush1.msra.mxu0 0.0
  %1099 = vmatprep.subr.mxu0 0.0
  %1100 = vmatpush1.msra.mxu0 0.0
  %1101 = vmatprep.subr.mxu0 0.0
  %1102 = vmatpush1.msra.mxu0 0.0
  %1103 = vmatprep.subr.mxu0 0.0
  %1104 = vmatpush1.msra.mxu0 0.0
  %1105 = vmatprep.subr.mxu0 0.0
  %1106 = vmatpush1.msra.mxu0 0.0
  %1107 = vmatprep.subr.mxu0 0.0
  %1108 = vmatpush1.msra.mxu0 0.0
  %1109 = vmatprep.subr.mxu0 0.0
  %1110 = vmatpush1.msra.mxu0 0.0
  %1111 = vmatprep.subr.mxu0 0.0
  %1112 = vmatpush1.msra.mxu0 0.0
  %1113 = vmatprep.subr.mxu0 0.0
  %1114 = vmatpush1.msra.mxu0 0.0
  %1115 = vmatprep.mubr.f32.mxu0 0.0
  %1116 = vmatmul.mubr.f32.gmra.mrb[0].mxu0 %v896
  %v1117 = vpop.f32.mrb[0].mxu0
  %v1118 = vadd.f32 %v1033, %v1117
  %v1119 = vpop.f32.mrb[0].mxu0
  %1120 = vmatprep.mubr.f32.mxu0 0.0
  %1121 = vmatmul.mubr.f32.gmra.mrb[0].mxu0 %v901
  %v1122 = vpop.f32.mrb[0].mxu0
  %v1123 = vadd.f32 %v1038, %v1122
  %v1124 = vpop.f32.mrb[0].mxu0
  %1125 = vmatprep.mubr.f32.mxu0 0.0
  %1126 = vmatmul.mubr.f32.gmra.mrb[0].mxu0 %v906
  %v1127 = vpop.f32.mrb[0].mxu0
  %v1128 = vadd.f32 %v1043, %v1127
  %v1129 = vpop.f32.mrb[0].mxu0
  %1130 = vmatprep.mubr.f32.mxu0 0.0
  %1131 = vmatmul.mubr.f32.gmra.mrb[0].mxu0 %v911
  %v1132 = vpop.f32.mrb[0].mxu0
  %v1133 = vadd.f32 %v1048, %v1132
  %v1134 = vpop.f32.mrb[0].mxu0
  %1135 = vdwg.mxu0
  %v1136 = vadd.f32 %v914, %v1118
  %v1137 = vadd.f32 %v915, %v1123
  %v1138 = vadd.f32 %v916, %v1128
  %v1139 = vadd.f32 %v917, %v1133
  %v1140 = vmax.f32 %v1136, 0.0
  %v1141 = vmax.f32 %v1137, 0.0
  %v1142 = vmax.f32 %v1138, 0.0
  %v1143 = vmax.f32 %v1139, 0.0
  %v1144 = vld [vmem:[%s10] sm:$0xff]
  %v1145 = vld [vmem:[%s10 + $0x8] sm:$0xff]
  %v1146 = vld [vmem:[%s10 + $0x10] sm:$0xff]
  %v1147 = vld [vmem:[%s10 + $0x18] sm:$0xff]
  %v1148 = vld [vmem:[%s10 + $0x20] sm:$0xff]
  %v1149 = vld [vmem:[%s10 + $0x28] sm:$0xff]
  %v1150 = vld [vmem:[%s10 + $0x30] sm:$0xff]
  %v1152 = vsel %vm60, %v1144, 0
  %v1155 = vsel %vm60, %v1145, 0
  %v1158 = vsel %vm60, %v1146, 0
  %v1161 = vsel %vm60, %v1147, 0
  %v1164 = vsel %vm60, %v1148, 0
  %v1167 = vsel %vm60, %v1149, 0
  %v1170 = vsel %vm60, %v1150, 0
  %v1173 = vsel %vm67, %v1143, 0
  %1175 = vmatprep.subr.mxu0 0.0
  %1176 = vmatpush1.msra.mxu0 %v1140
  %1177 = vmatprep.subr.mxu0 0.0
  %1178 = vmatpush1.msra.mxu0 %v1141
  %1179 = vmatprep.subr.mxu0 0.0
  %1180 = vmatpush1.msra.mxu0 %v1142
  %1181 = vmatprep.subr.mxu0 0.0
  %1182 = vmatpush1.msra.mxu0 %v1173
  %1183 = vmatprep.subr.mxu0 0.0
  %1184 = vmatpush1.msra.mxu0 0.0
  %1185 = vmatprep.subr.mxu0 0.0
  %1186 = vmatpush1.msra.mxu0 0.0
  %1187 = vmatprep.subr.mxu0 0.0
  %1188 = vmatpush1.msra.mxu0 0.0
  %1189 = vmatprep.subr.mxu0 0.0
  %1190 = vmatpush1.msra.mxu0 0.0
  %1191 = vmatprep.subr.mxu0 0.0
  %1192 = vmatpush1.msra.mxu0 0.0
  %1193 = vmatprep.subr.mxu0 0.0
  %1194 = vmatpush1.msra.mxu0 0.0
  %1195 = vmatprep.subr.mxu0 0.0
  %1196 = vmatpush1.msra.mxu0 0.0
  %1197 = vmatprep.subr.mxu0 0.0
  %1198 = vmatpush1.msra.mxu0 0.0
  %1199 = vmatprep.subr.mxu0 0.0
  %1200 = vmatpush1.msra.mxu0 0.0
  %1201 = vmatprep.subr.mxu0 0.0
  %1202 = vmatpush1.msra.mxu0 0.0
  %1203 = vmatprep.subr.mxu0 0.0
  %1204 = vmatpush1.msra.mxu0 0.0
  %1205 = vmatprep.subr.mxu0 0.0
  %1206 = vmatpush1.msra.mxu0 0.0
  %1207 = vmatprep.subr.mxu0 0.0
  %1208 = vmatpush1.msra.mxu0 0.0
  %1209 = vmatprep.subr.mxu0 0.0
  %1210 = vmatpush1.msra.mxu0 0.0
  %1211 = vmatprep.subr.mxu0 0.0
  %1212 = vmatpush1.msra.mxu0 0.0
  %1213 = vmatprep.subr.mxu0 0.0
  %1214 = vmatpush1.msra.mxu0 0.0
  %1215 = vmatprep.subr.mxu0 0.0
  %1216 = vmatpush1.msra.mxu0 0.0
  %1217 = vmatprep.subr.mxu0 0.0
  %1218 = vmatpush1.msra.mxu0 0.0
  %1219 = vmatprep.subr.mxu0 0.0
  %1220 = vmatpush1.msra.mxu0 0.0
  %1221 = vmatprep.subr.mxu0 0.0
  %1222 = vmatpush1.msra.mxu0 0.0
  %1223 = vmatprep.subr.mxu0 0.0
  %1224 = vmatpush1.msra.mxu0 0.0
  %1225 = vmatprep.subr.mxu0 0.0
  %1226 = vmatpush1.msra.mxu0 0.0
  %1227 = vmatprep.subr.mxu0 0.0
  %1228 = vmatpush1.msra.mxu0 0.0
  %1229 = vmatprep.subr.mxu0 0.0
  %1230 = vmatpush1.msra.mxu0 0.0
  %1231 = vmatprep.subr.mxu0 0.0
  %1232 = vmatpush1.msra.mxu0 0.0
  %1233 = vmatprep.subr.mxu0 0.0
  %1234 = vmatpush1.msra.mxu0 0.0
  %1235 = vmatprep.subr.mxu0 0.0
  %1236 = vmatpush1.msra.mxu0 0.0
  %1237 = vmatprep.subr.mxu0 0.0
  %1238 = vmatpush1.msra.mxu0 0.0
  %1239 = vmatprep.mubr.f32.mxu0 0.0
  %1240 = vmatmul.mubr.f32.gmra.mrb[0].mxu0 %v1152
  %v1241 = vpop.f32.mrb[0].mxu0
  %v1242 = vadd.f32 0.0, %v1241
  %v1243 = vpop.f32.mrb[0].mxu0
  %1244 = vmatprep.mubr.f32.mxu0 0.0
  %1245 = vmatmul.mubr.f32.gmra.mrb[0].mxu0 %v1155
  %v1246 = vpop.f32.mrb[0].mxu0
  %v1247 = vadd.f32 0.0, %v1246
  %v1248 = vpop.f32.mrb[0].mxu0
  %1249 = vmatprep.mubr.f32.mxu0 0.0
  %1250 = vmatmul.mubr.f32.gmra.mrb[0].mxu0 %v1158
  %v1251 = vpop.f32.mrb[0].mxu0
  %v1252 = vadd.f32 0.0, %v1251
  %v1253 = vpop.f32.mrb[0].mxu0
  %1254 = vmatprep.mubr.f32.mxu0 0.0
  %1255 = vmatmul.mubr.f32.gmra.mrb[0].mxu0 %v1161
  %v1256 = vpop.f32.mrb[0].mxu0
  %v1257 = vadd.f32 0.0, %v1256
  %v1258 = vpop.f32.mrb[0].mxu0
  %1259 = vmatprep.mubr.f32.mxu0 0.0
  %1260 = vmatmul.mubr.f32.gmra.mrb[0].mxu0 %v1164
  %v1261 = vpop.f32.mrb[0].mxu0
  %v1262 = vadd.f32 0.0, %v1261
  %v1263 = vpop.f32.mrb[0].mxu0
  %1264 = vmatprep.mubr.f32.mxu0 0.0
  %1265 = vmatmul.mubr.f32.gmra.mrb[0].mxu0 %v1167
  %v1266 = vpop.f32.mrb[0].mxu0
  %v1267 = vadd.f32 0.0, %v1266
  %v1268 = vpop.f32.mrb[0].mxu0
  %1269 = vmatprep.mubr.f32.mxu0 0.0
  %1270 = vmatmul.mubr.f32.gmra.mrb[0].mxu0 %v1170
  %v1271 = vpop.f32.mrb[0].mxu0
  %v1272 = vadd.f32 0.0, %v1271
  %v1273 = vpop.f32.mrb[0].mxu0
  %1274 = vdwg.mxu0
  %s1275 = scalar_lea.vmem %s10, 56
  %v1276 = vld [vmem:[%s1275] sm:$0xff]
  %v1277 = vld [vmem:[%s1275 + $0x8] sm:$0xff]
  %v1278 = vld [vmem:[%s1275 + $0x10] sm:$0xff]
  %v1279 = vld [vmem:[%s1275 + $0x18] sm:$0xff]
  %v1280 = vld [vmem:[%s1275 + $0x20] sm:$0xff]
  %v1281 = vld [vmem:[%s1275 + $0x28] sm:$0xff]
  %v1282 = vld [vmem:[%s1275 + $0x30] sm:$0xff]
  %v1284 = vsel %vm60, %v1276, 0
  %v1287 = vsel %vm60, %v1277, 0
  %v1290 = vsel %vm60, %v1278, 0
  %v1293 = vsel %vm60, %v1279, 0
  %v1296 = vsel %vm60, %v1280, 0
  %v1299 = vsel %vm60, %v1281, 0
  %v1302 = vsel %vm60, %v1282, 0
  %1304 = vmatprep.subr.mxu0 0.0
  %1305 = vmatpush1.msra.mxu0 %v1140
  %1306 = vmatprep.subr.mxu0 0.0
  %1307 = vmatpush1.msra.mxu0 %v1141
  %1308 = vmatprep.subr.mxu0 0.0
  %1309 = vmatpush1.msra.mxu0 %v1142
  %1310 = vmatprep.subr.mxu0 0.0
  %1311 = vmatpush1.msra.mxu0 %v1173
  %1312 = vmatprep.subr.mxu0 0.0
  %1313 = vmatpush1.msra.mxu0 0.0
  %1314 = vmatprep.subr.mxu0 0.0
  %1315 = vmatpush1.msra.mxu0 0.0
  %1316 = vmatprep.subr.mxu0 0.0
  %1317 = vmatpush1.msra.mxu0 0.0
  %1318 = vmatprep.subr.mxu0 0.0
  %1319 = vmatpush1.msra.mxu0 0.0
  %1320 = vmatprep.subr.mxu0 0.0
  %1321 = vmatpush1.msra.mxu0 0.0
  %1322 = vmatprep.subr.mxu0 0.0
  %1323 = vmatpush1.msra.mxu0 0.0
  %1324 = vmatprep.subr.mxu0 0.0
  %1325 = vmatpush1.msra.mxu0 0.0
  %1326 = vmatprep.subr.mxu0 0.0
  %1327 = vmatpush1.msra.mxu0 0.0
  %1328 = vmatprep.subr.mxu0 0.0
  %1329 = vmatpush1.msra.mxu0 0.0
  %1330 = vmatprep.subr.mxu0 0.0
  %1331 = vmatpush1.msra.mxu0 0.0
  %1332 = vmatprep.subr.mxu0 0.0
  %1333 = vmatpush1.msra.mxu0 0.0
  %1334 = vmatprep.subr.mxu0 0.0
  %1335 = vmatpush1.msra.mxu0 0.0
  %1336 = vmatprep.subr.mxu0 0.0
  %1337 = vmatpush1.msra.mxu0 0.0
  %1338 = vmatprep.subr.mxu0 0.0
  %1339 = vmatpush1.msra.mxu0 0.0
  %1340 = vmatprep.subr.mxu0 0.0
  %1341 = vmatpush1.msra.mxu0 0.0
  %1342 = vmatprep.subr.mxu0 0.0
  %1343 = vmatpush1.msra.mxu0 0.0
  %1344 = vmatprep.subr.mxu0 0.0
  %1345 = vmatpush1.msra.mxu0 0.0
  %1346 = vmatprep.subr.mxu0 0.0
  %1347 = vmatpush1.msra.mxu0 0.0
  %1348 = vmatprep.subr.mxu0 0.0
  %1349 = vmatpush1.msra.mxu0 0.0
  %1350 = vmatprep.subr.mxu0 0.0
  %1351 = vmatpush1.msra.mxu0 0.0
  %1352 = vmatprep.subr.mxu0 0.0
  %1353 = vmatpush1.msra.mxu0 0.0
  %1354 = vmatprep.subr.mxu0 0.0
  %1355 = vmatpush1.msra.mxu0 0.0
  %1356 = vmatprep.subr.mxu0 0.0
  %1357 = vmatpush1.msra.mxu0 0.0
  %1358 = vmatprep.subr.mxu0 0.0
  %1359 = vmatpush1.msra.mxu0 0.0
  %1360 = vmatprep.subr.mxu0 0.0
  %1361 = vmatpush1.msra.mxu0 0.0
  %1362 = vmatprep.subr.mxu0 0.0
  %1363 = vmatpush1.msra.mxu0 0.0
  %1364 = vmatprep.subr.mxu0 0.0
  %1365 = vmatpush1.msra.mxu0 0.0
  %1366 = vmatprep.subr.mxu0 0.0
  %1367 = vmatpush1.msra.mxu0 0.0
  %1368 = vmatprep.mubr.f32.mxu0 0.0
  %1369 = vmatmul.mubr.f32.gmra.mrb[0].mxu0 %v1284
  %v1370 = vpop.f32.mrb[0].mxu0
  %v1371 = vadd.f32 0.0, %v1370
  %v1372 = vpop.f32.mrb[0].mxu0
  %1373 = vmatprep.mubr.f32.mxu0 0.0
  %1374 = vmatmul.mubr.f32.gmra.mrb[0].mxu0 %v1287
  %v1375 = vpop.f32.mrb[0].mxu0
  %v1376 = vadd.f32 0.0, %v1375
  %v1377 = vpop.f32.mrb[0].mxu0
  %1378 = vmatprep.mubr.f32.mxu0 0.0
  %1379 = vmatmul.mubr.f32.gmra.mrb[0].mxu0 %v1290
  %v1380 = vpop.f32.mrb[0].mxu0
  %v1381 = vadd.f32 0.0, %v1380
  %v1382 = vpop.f32.mrb[0].mxu0
  %1383 = vmatprep.mubr.f32.mxu0 0.0
  %1384 = vmatmul.mubr.f32.gmra.mrb[0].mxu0 %v1293
  %v1385 = vpop.f32.mrb[0].mxu0
  %v1386 = vadd.f32 0.0, %v1385
  %v1387 = vpop.f32.mrb[0].mxu0
  %1388 = vmatprep.mubr.f32.mxu0 0.0
  %1389 = vmatmul.mubr.f32.gmra.mrb[0].mxu0 %v1296
  %v1390 = vpop.f32.mrb[0].mxu0
  %v1391 = vadd.f32 0.0, %v1390
  %v1392 = vpop.f32.mrb[0].mxu0
  %1393 = vmatprep.mubr.f32.mxu0 0.0
  %1394 = vmatmul.mubr.f32.gmra.mrb[0].mxu0 %v1299
  %v1395 = vpop.f32.mrb[0].mxu0
  %v1396 = vadd.f32 0.0, %v1395
  %v1397 = vpop.f32.mrb[0].mxu0
  %1398 = vmatprep.mubr.f32.mxu0 0.0
  %1399 = vmatmul.mubr.f32.gmra.mrb[0].mxu0 %v1302
  %v1400 = vpop.f32.mrb[0].mxu0
  %v1401 = vadd.f32 0.0, %v1400
  %v1402 = vpop.f32.mrb[0].mxu0
  %1403 = vdwg.mxu0
  %s1404 = scalar_lea.vmem %s10, 112
  %v1405 = vld [vmem:[%s1404] sm:$0xff]
  %v1406 = vld [vmem:[%s1404 + $0x8] sm:$0xff]
  %v1407 = vld [vmem:[%s1404 + $0x10] sm:$0xff]
  %v1408 = vld [vmem:[%s1404 + $0x18] sm:$0xff]
  %v1409 = vld [vmem:[%s1404 + $0x20] sm:$0xff]
  %v1410 = vld [vmem:[%s1404 + $0x28] sm:$0xff]
  %v1411 = vld [vmem:[%s1404 + $0x30] sm:$0xff]
  %v1413 = vsel %vm60, %v1405, 0
  %v1416 = vsel %vm60, %v1406, 0
  %v1419 = vsel %vm60, %v1407, 0
  %v1422 = vsel %vm60, %v1408, 0
  %v1425 = vsel %vm60, %v1409, 0
  %v1428 = vsel %vm60, %v1410, 0
  %v1431 = vsel %vm60, %v1411, 0
  %1433 = vmatprep.subr.mxu0 0.0
  %1434 = vmatpush1.msra.mxu0 %v1140
  %1435 = vmatprep.subr.mxu0 0.0
  %1436 = vmatpush1.msra.mxu0 %v1141
  %1437 = vmatprep.subr.mxu0 0.0
  %1438 = vmatpush1.msra.mxu0 %v1142
  %1439 = vmatprep.subr.mxu0 0.0
  %1440 = vmatpush1.msra.mxu0 %v1173
  %1441 = vmatprep.subr.mxu0 0.0
  %1442 = vmatpush1.msra.mxu0 0.0
  %1443 = vmatprep.subr.mxu0 0.0
  %1444 = vmatpush1.msra.mxu0 0.0
  %1445 = vmatprep.subr.mxu0 0.0
  %1446 = vmatpush1.msra.mxu0 0.0
  %1447 = vmatprep.subr.mxu0 0.0
  %1448 = vmatpush1.msra.mxu0 0.0
  %1449 = vmatprep.subr.mxu0 0.0
  %1450 = vmatpush1.msra.mxu0 0.0
  %1451 = vmatprep.subr.mxu0 0.0
  %1452 = vmatpush1.msra.mxu0 0.0
  %1453 = vmatprep.subr.mxu0 0.0
  %1454 = vmatpush1.msra.mxu0 0.0
  %1455 = vmatprep.subr.mxu0 0.0
  %1456 = vmatpush1.msra.mxu0 0.0
  %1457 = vmatprep.subr.mxu0 0.0
  %1458 = vmatpush1.msra.mxu0 0.0
  %1459 = vmatprep.subr.mxu0 0.0
  %1460 = vmatpush1.msra.mxu0 0.0
  %1461 = vmatprep.subr.mxu0 0.0
  %1462 = vmatpush1.msra.mxu0 0.0
  %1463 = vmatprep.subr.mxu0 0.0
  %1464 = vmatpush1.msra.mxu0 0.0
  %1465 = vmatprep.subr.mxu0 0.0
  %1466 = vmatpush1.msra.mxu0 0.0
  %1467 = vmatprep.subr.mxu0 0.0
  %1468 = vmatpush1.msra.mxu0 0.0
  %1469 = vmatprep.subr.mxu0 0.0
  %1470 = vmatpush1.msra.mxu0 0.0
  %1471 = vmatprep.subr.mxu0 0.0
  %1472 = vmatpush1.msra.mxu0 0.0
  %1473 = vmatprep.subr.mxu0 0.0
  %1474 = vmatpush1.msra.mxu0 0.0
  %1475 = vmatprep.subr.mxu0 0.0
  %1476 = vmatpush1.msra.mxu0 0.0
  %1477 = vmatprep.subr.mxu0 0.0
  %1478 = vmatpush1.msra.mxu0 0.0
  %1479 = vmatprep.subr.mxu0 0.0
  %1480 = vmatpush1.msra.mxu0 0.0
  %1481 = vmatprep.subr.mxu0 0.0
  %1482 = vmatpush1.msra.mxu0 0.0
  %1483 = vmatprep.subr.mxu0 0.0
  %1484 = vmatpush1.msra.mxu0 0.0
  %1485 = vmatprep.subr.mxu0 0.0
  %1486 = vmatpush1.msra.mxu0 0.0
  %1487 = vmatprep.subr.mxu0 0.0
  %1488 = vmatpush1.msra.mxu0 0.0
  %1489 = vmatprep.subr.mxu0 0.0
  %1490 = vmatpush1.msra.mxu0 0.0
  %1491 = vmatprep.subr.mxu0 0.0
  %1492 = vmatpush1.msra.mxu0 0.0
  %1493 = vmatprep.subr.mxu0 0.0
  %1494 = vmatpush1.msra.mxu0 0.0
  %1495 = vmatprep.subr.mxu0 0.0
  %1496 = vmatpush1.msra.mxu0 0.0
  %1497 = vmatprep.mubr.f32.mxu0 0.0
  %1498 = vmatmul.mubr.f32.gmra.mrb[0].mxu0 %v1413
  %v1499 = vpop.f32.mrb[0].mxu0
  %v1500 = vadd.f32 0.0, %v1499
  %v1501 = vpop.f32.mrb[0].mxu0
  %1502 = vmatprep.mubr.f32.mxu0 0.0
  %1503 = vmatmul.mubr.f32.gmra.mrb[0].mxu0 %v1416
  %v1504 = vpop.f32.mrb[0].mxu0
  %v1505 = vadd.f32 0.0, %v1504
  %v1506 = vpop.f32.mrb[0].mxu0
  %1507 = vmatprep.mubr.f32.mxu0 0.0
  %1508 = vmatmul.mubr.f32.gmra.mrb[0].mxu0 %v1419
  %v1509 = vpop.f32.mrb[0].mxu0
  %v1510 = vadd.f32 0.0, %v1509
  %v1511 = vpop.f32.mrb[0].mxu0
  %1512 = vmatprep.mubr.f32.mxu0 0.0
  %1513 = vmatmul.mubr.f32.gmra.mrb[0].mxu0 %v1422
  %v1514 = vpop.f32.mrb[0].mxu0
  %v1515 = vadd.f32 0.0, %v1514
  %v1516 = vpop.f32.mrb[0].mxu0
  %1517 = vmatprep.mubr.f32.mxu0 0.0
  %1518 = vmatmul.mubr.f32.gmra.mrb[0].mxu0 %v1425
  %v1519 = vpop.f32.mrb[0].mxu0
  %v1520 = vadd.f32 0.0, %v1519
  %v1521 = vpop.f32.mrb[0].mxu0
  %1522 = vmatprep.mubr.f32.mxu0 0.0
  %1523 = vmatmul.mubr.f32.gmra.mrb[0].mxu0 %v1428
  %v1524 = vpop.f32.mrb[0].mxu0
  %v1525 = vadd.f32 0.0, %v1524
  %v1526 = vpop.f32.mrb[0].mxu0
  %1527 = vmatprep.mubr.f32.mxu0 0.0
  %1528 = vmatmul.mubr.f32.gmra.mrb[0].mxu0 %v1431
  %v1529 = vpop.f32.mrb[0].mxu0
  %v1530 = vadd.f32 0.0, %v1529
  %v1531 = vpop.f32.mrb[0].mxu0
  %1532 = vdwg.mxu0
  %v1533 = vld [vmem:[%s12] sm:$0xff]
  %v1534 = vld [vmem:[%s12 + $0x8] sm:$0xff]
  %v1535 = vld [vmem:[%s12 + $0x10] sm:$0xff]
  %v1536 = vld [vmem:[%s12 + $0x18] sm:$0xff]
  %v1537 = vld [vmem:[%s12 + $0x20] sm:$0xff]
  %v1538 = vld [vmem:[%s12 + $0x28] sm:$0xff]
  %v1539 = vld [vmem:[%s12 + $0x30] sm:$0xff]
  %v1540 = vld [vmem:[%s12 + $0x38] sm:$0xff]
  %v1541 = vld [vmem:[%s12 + $0x40] sm:$0xff]
  %v1542 = vld [vmem:[%s12 + $0x48] sm:$0xff]
  %v1543 = vld [vmem:[%s12 + $0x50] sm:$0xff]
  %v1544 = vld [vmem:[%s12 + $0x58] sm:$0xff]
  %v1545 = vld [vmem:[%s12 + $0x60] sm:$0xff]
  %v1546 = vld [vmem:[%s12 + $0x68] sm:$0xff]
  %v1547 = vld [vmem:[%s11] sm:$0xff]
  %v1548 = vld [vmem:[%s11 + $0x8] sm:$0xff]
  %v1549 = vld [vmem:[%s11 + $0x10] sm:$0xff]
  %v1550 = vld [vmem:[%s11 + $0x18] sm:$0xff]
  %v1551 = vld [vmem:[%s11 + $0x20] sm:$0xff]
  %v1552 = vld [vmem:[%s11 + $0x28] sm:$0xff]
  %v1553 = vld [vmem:[%s11 + $0x30] sm:$0xff]
  %v1554 = vld [vmem:[%s11 + $0x38] sm:$0xff]
  %v1555 = vld [vmem:[%s11 + $0x40] sm:$0xff]
  %v1556 = vld [vmem:[%s11 + $0x48] sm:$0xff]
  %v1557 = vld [vmem:[%s11 + $0x50] sm:$0xff]
  %v1558 = vld [vmem:[%s11 + $0x58] sm:$0xff]
  %v1559 = vld [vmem:[%s11 + $0x60] sm:$0xff]
  %v1560 = vld [vmem:[%s11 + $0x68] sm:$0xff]
  %v1561 = vld [vmem:[%s11 + $0x70] sm:$0xff]
  %v1562 = vld [vmem:[%s11 + $0x78] sm:$0xff]
  %v1563 = vld [vmem:[%s11 + $0x80] sm:$0xff]
  %v1564 = vld [vmem:[%s11 + $0x88] sm:$0xff]
  %v1565 = vld [vmem:[%s11 + $0x90] sm:$0xff]
  %v1566 = vld [vmem:[%s11 + $0x98] sm:$0xff]
  %v1567 = vld [vmem:[%s11 + $0xa0] sm:$0xff]
  %v1568 = vld [vmem:[%s11 + $0xa8] sm:$0xff]
  %v1569 = vld [vmem:[%s11 + $0xb0] sm:$0xff]
  %v1570 = vld [vmem:[%s11 + $0xb8] sm:$0xff]
  %v1571 = vld [vmem:[%s11 + $0xc0] sm:$0xff]
  %v1572 = vld [vmem:[%s11 + $0xc8] sm:$0xff]
  %v1573 = vld [vmem:[%s11 + $0xd0] sm:$0xff]
  %v1574 = vld [vmem:[%s11 + $0xd8] sm:$0xff]
  %v1575 = vld [vmem:[%s11 + $0xe0] sm:$0xff]
  %v1576 = vld [vmem:[%s11 + $0xe8] sm:$0xff]
  %v1577 = vld [vmem:[%s11 + $0xf0] sm:$0xff]
  %v1578 = vld [vmem:[%s11 + $0xf8] sm:$0xff]
  %v1579 = vld [vmem:[%s11 + $0x100] sm:$0xff]
  %v1580 = vld [vmem:[%s11 + $0x108] sm:$0xff]
  %v1581 = vld [vmem:[%s11 + $0x110] sm:$0xff]
  %v1582 = vld [vmem:[%s11 + $0x118] sm:$0xff]
  %v1583 = vld [vmem:[%s11 + $0x120] sm:$0xff]
  %v1584 = vld [vmem:[%s11 + $0x128] sm:$0xff]
  %v1585 = vld [vmem:[%s11 + $0x130] sm:$0xff]
  %v1586 = vld [vmem:[%s11 + $0x138] sm:$0xff]
  %v1587 = vld [vmem:[%s11 + $0x140] sm:$0xff]
  %v1588 = vld [vmem:[%s11 + $0x148] sm:$0xff]
  %v1589 = vld [vmem:[%s11 + $0x150] sm:$0xff]
  %v1590 = vld [vmem:[%s11 + $0x158] sm:$0xff]
  %v1591 = vld [vmem:[%s11 + $0x160] sm:$0xff]
  %v1592 = vld [vmem:[%s11 + $0x168] sm:$0xff]
  %v1593 = vld [vmem:[%s11 + $0x170] sm:$0xff]
  %v1594 = vld [vmem:[%s11 + $0x178] sm:$0xff]
  %v1595 = vld [vmem:[%s11 + $0x180] sm:$0xff]
  %v1596 = vld [vmem:[%s11 + $0x188] sm:$0xff]
  %v1597 = vld [vmem:[%s11 + $0x190] sm:$0xff]
  %v1598 = vld [vmem:[%s11 + $0x198] sm:$0xff]
  %v1599 = vld [vmem:[%s11 + $0x1a0] sm:$0xff]
  %v1600 = vld [vmem:[%s11 + $0x1a8] sm:$0xff]
  %v1601 = vld [vmem:[%s11 + $0x1b0] sm:$0xff]
  %v1602 = vld [vmem:[%s11 + $0x1b8] sm:$0xff]
  %v1603 = vld [vmem:[%s11 + $0x1c0] sm:$0xff]
  %v1604 = vld [vmem:[%s11 + $0x1c8] sm:$0xff]
  %v1605 = vld [vmem:[%s11 + $0x1d0] sm:$0xff]
  %v1606 = vld [vmem:[%s11 + $0x1d8] sm:$0xff]
  %v1607 = vld [vmem:[%s11 + $0x1e0] sm:$0xff]
  %v1608 = vld [vmem:[%s11 + $0x1e8] sm:$0xff]
  %v1609 = vld [vmem:[%s11 + $0x1f0] sm:$0xff]
  %v1610 = vld [vmem:[%s11 + $0x1f8] sm:$0xff]
  %v1611 = vld [vmem:[%s11 + $0x200] sm:$0xff]
  %v1612 = vld [vmem:[%s11 + $0x208] sm:$0xff]
  %v1613 = vld [vmem:[%s11 + $0x210] sm:$0xff]
  %v1614 = vld [vmem:[%s11 + $0x218] sm:$0xff]
  %v1615 = vld [vmem:[%s11 + $0x220] sm:$0xff]
  %v1616 = vld [vmem:[%s11 + $0x228] sm:$0xff]
  %v1617 = vld [vmem:[%s11 + $0x230] sm:$0xff]
  %v1618 = vld [vmem:[%s11 + $0x238] sm:$0xff]
  %v1619 = vld [vmem:[%s11 + $0x240] sm:$0xff]
  %v1620 = vld [vmem:[%s11 + $0x248] sm:$0xff]
  %v1621 = vld [vmem:[%s11 + $0x250] sm:$0xff]
  %v1622 = vld [vmem:[%s11 + $0x258] sm:$0xff]
  %v1623 = vld [vmem:[%s11 + $0x260] sm:$0xff]
  %v1624 = vld [vmem:[%s11 + $0x268] sm:$0xff]
  %v1625 = vld [vmem:[%s11 + $0x270] sm:$0xff]
  %v1626 = vld [vmem:[%s11 + $0x278] sm:$0xff]
  %v1627 = vld [vmem:[%s11 + $0x280] sm:$0xff]
  %v1628 = vld [vmem:[%s11 + $0x288] sm:$0xff]
  %v1629 = vld [vmem:[%s11 + $0x290] sm:$0xff]
  %v1630 = vld [vmem:[%s11 + $0x298] sm:$0xff]
  %v1631 = vld [vmem:[%s11 + $0x2a0] sm:$0xff]
  %v1632 = vld [vmem:[%s11 + $0x2a8] sm:$0xff]
  %v1633 = vld [vmem:[%s11 + $0x2b0] sm:$0xff]
  %v1634 = vld [vmem:[%s11 + $0x2b8] sm:$0xff]
  %v1635 = vld [vmem:[%s11 + $0x2c0] sm:$0xff]
  %v1636 = vld [vmem:[%s11 + $0x2c8] sm:$0xff]
  %v1637 = vld [vmem:[%s11 + $0x2d0] sm:$0xff]
  %v1638 = vld [vmem:[%s11 + $0x2d8] sm:$0xff]
  %v1639 = vld [vmem:[%s11 + $0x2e0] sm:$0xff]
  %v1640 = vld [vmem:[%s11 + $0x2e8] sm:$0xff]
  %v1641 = vld [vmem:[%s11 + $0x2f0] sm:$0xff]
  %v1642 = vld [vmem:[%s11 + $0x2f8] sm:$0xff]
  %1643 = vmatprep.subr.mxu0 %v1548
  %1644 = vmatpush1.msra.mxu0 %v1547
  %1645 = vmatprep.subr.mxu0 %v1550
  %1646 = vmatpush1.msra.mxu0 %v1549
  %1647 = vmatprep.subr.mxu0 %v1552
  %1648 = vmatpush1.msra.mxu0 %v1551
  %1649 = vmatprep.subr.mxu0 %v1554
  %1650 = vmatpush1.msra.mxu0 %v1553
  %1651 = vmatprep.subr.mxu0 %v1556
  %1652 = vmatpush1.msra.mxu0 %v1555
  %1653 = vmatprep.subr.mxu0 %v1558
  %1654 = vmatpush1.msra.mxu0 %v1557
  %1655 = vmatprep.subr.mxu0 %v1560
  %1656 = vmatpush1.msra.mxu0 %v1559
  %1657 = vmatprep.subr.mxu0 %v1562
  %1658 = vmatpush1.msra.mxu0 %v1561
  %1659 = vmatprep.subr.mxu0 %v1564
  %1660 = vmatpush1.msra.mxu0 %v1563
  %1661 = vmatprep.subr.mxu0 %v1566
  %1662 = vmatpush1.msra.mxu0 %v1565
  %1663 = vmatprep.subr.mxu0 %v1568
  %1664 = vmatpush1.msra.mxu0 %v1567
  %1665 = vmatprep.subr.mxu0 %v1570
  %1666 = vmatpush1.msra.mxu0 %v1569
  %1667 = vmatprep.subr.mxu0 %v1572
  %1668 = vmatpush1.msra.mxu0 %v1571
  %1669 = vmatprep.subr.mxu0 %v1574
  %1670 = vmatpush1.msra.mxu0 %v1573
  %1671 = vmatprep.subr.mxu0 %v1576
  %1672 = vmatpush1.msra.mxu0 %v1575
  %1673 = vmatprep.subr.mxu0 %v1578
  %1674 = vmatpush1.msra.mxu0 %v1577
  %1675 = vmatprep.subr.mxu0 %v1580
  %1676 = vmatpush1.msra.mxu0 %v1579
  %1677 = vmatprep.subr.mxu0 %v1582
  %1678 = vmatpush1.msra.mxu0 %v1581
  %1679 = vmatprep.subr.mxu0 %v1584
  %1680 = vmatpush1.msra.mxu0 %v1583
  %1681 = vmatprep.subr.mxu0 %v1586
  %1682 = vmatpush1.msra.mxu0 %v1585
  %1683 = vmatprep.subr.mxu0 %v1588
  %1684 = vmatpush1.msra.mxu0 %v1587
  %1685 = vmatprep.subr.mxu0 %v1590
  %1686 = vmatpush1.msra.mxu0 %v1589
  %1687 = vmatprep.subr.mxu0 %v1592
  %1688 = vmatpush1.msra.mxu0 %v1591
  %1689 = vmatprep.subr.mxu0 %v1594
  %1690 = vmatpush1.msra.mxu0 %v1593
  %1691 = vmatprep.subr.mxu0 %v1596
  %1692 = vmatpush1.msra.mxu0 %v1595
  %1693 = vmatprep.subr.mxu0 %v1598
  %1694 = vmatpush1.msra.mxu0 %v1597
  %1695 = vmatprep.subr.mxu0 %v1600
  %1696 = vmatpush1.msra.mxu0 %v1599
  %1697 = vmatprep.subr.mxu0 %v1602
  %1698 = vmatpush1.msra.mxu0 %v1601
  %1699 = vmatprep.subr.mxu0 %v1604
  %1700 = vmatpush1.msra.mxu0 %v1603
  %1701 = vmatprep.subr.mxu0 %v1606
  %1702 = vmatpush1.msra.mxu0 %v1605
  %1703 = vmatprep.subr.mxu0 %v1608
  %1704 = vmatpush1.msra.mxu0 %v1607
  %1705 = vmatprep.subr.mxu0 %v1610
  %1706 = vmatpush1.msra.mxu0 %v1609
  %1707 = vmatprep.mubr.f32.mxu0 %v1371
  %1708 = vmatmul.mubr.f32.gmra.mrb[0].mxu0 %v1242
  %v1709 = vpop.f32.mrb[0].mxu0
  %v1710 = vadd.f32 0.0, %v1709
  %v1711 = vpop.f32.mrb[0].mxu0
  %v1712 = vadd.f32 0.0, %v1711
  %1713 = vmatprep.mubr.f32.mxu0 %v1376
  %1714 = vmatmul.mubr.f32.gmra.mrb[0].mxu0 %v1247
  %v1715 = vpop.f32.mrb[0].mxu0
  %v1716 = vadd.f32 0.0, %v1715
  %v1717 = vpop.f32.mrb[0].mxu0
  %v1718 = vadd.f32 0.0, %v1717
  %1719 = vmatprep.mubr.f32.mxu0 %v1381
  %1720 = vmatmul.mubr.f32.gmra.mrb[0].mxu0 %v1252
  %v1721 = vpop.f32.mrb[0].mxu0
  %v1722 = vadd.f32 0.0, %v1721
  %v1723 = vpop.f32.mrb[0].mxu0
  %v1724 = vadd.f32 0.0, %v1723
  %1725 = vmatprep.mubr.f32.mxu0 %v1386
  %1726 = vmatmul.mubr.f32.gmra.mrb[0].mxu0 %v1257
  %v1727 = vpop.f32.mrb[0].mxu0
  %v1728 = vadd.f32 0.0, %v1727
  %v1729 = vpop.f32.mrb[0].mxu0
  %v1730 = vadd.f32 0.0, %v1729
  %1731 = vmatprep.mubr.f32.mxu0 %v1391
  %1732 = vmatmul.mubr.f32.gmra.mrb[0].mxu0 %v1262
  %v1733 = vpop.f32.mrb[0].mxu0
  %v1734 = vadd.f32 0.0, %v1733
  %v1735 = vpop.f32.mrb[0].mxu0
  %v1736 = vadd.f32 0.0, %v1735
  %1737 = vmatprep.mubr.f32.mxu0 %v1396
  %1738 = vmatmul.mubr.f32.gmra.mrb[0].mxu0 %v1267
  %v1739 = vpop.f32.mrb[0].mxu0
  %v1740 = vadd.f32 0.0, %v1739
  %v1741 = vpop.f32.mrb[0].mxu0
  %v1742 = vadd.f32 0.0, %v1741
  %1743 = vmatprep.mubr.f32.mxu0 %v1401
  %1744 = vmatmul.mubr.f32.gmra.mrb[0].mxu0 %v1272
  %v1745 = vpop.f32.mrb[0].mxu0
  %v1746 = vadd.f32 0.0, %v1745
  %v1747 = vpop.f32.mrb[0].mxu0
  %v1748 = vadd.f32 0.0, %v1747
  %1749 = vdwg.mxu0
  %1750 = vmatprep.subr.mxu0 %v1612
  %1751 = vmatpush1.msra.mxu0 %v1611
  %1752 = vmatprep.subr.mxu0 %v1614
  %1753 = vmatpush1.msra.mxu0 %v1613
  %1754 = vmatprep.subr.mxu0 %v1616
  %1755 = vmatpush1.msra.mxu0 %v1615
  %1756 = vmatprep.subr.mxu0 %v1618
  %1757 = vmatpush1.msra.mxu0 %v1617
  %1758 = vmatprep.subr.mxu0 %v1620
  %1759 = vmatpush1.msra.mxu0 %v1619
  %1760 = vmatprep.subr.mxu0 %v1622
  %1761 = vmatpush1.msra.mxu0 %v1621
  %1762 = vmatprep.subr.mxu0 %v1624
  %1763 = vmatpush1.msra.mxu0 %v1623
  %1764 = vmatprep.subr.mxu0 %v1626
  %1765 = vmatpush1.msra.mxu0 %v1625
  %1766 = vmatprep.subr.mxu0 %v1628
  %1767 = vmatpush1.msra.mxu0 %v1627
  %1768 = vmatprep.subr.mxu0 %v1630
  %1769 = vmatpush1.msra.mxu0 %v1629
  %1770 = vmatprep.subr.mxu0 %v1632
  %1771 = vmatpush1.msra.mxu0 %v1631
  %1772 = vmatprep.subr.mxu0 %v1634
  %1773 = vmatpush1.msra.mxu0 %v1633
  %1774 = vmatprep.subr.mxu0 %v1636
  %1775 = vmatpush1.msra.mxu0 %v1635
  %1776 = vmatprep.subr.mxu0 %v1638
  %1777 = vmatpush1.msra.mxu0 %v1637
  %1778 = vmatprep.subr.mxu0 %v1640
  %1779 = vmatpush1.msra.mxu0 %v1639
  %1780 = vmatprep.subr.mxu0 %v1642
  %1781 = vmatpush1.msra.mxu0 %v1641
  %1782 = vmatprep.subr.mxu0 0.0
  %1783 = vmatpush1.msra.mxu0 0.0
  %1784 = vmatprep.subr.mxu0 0.0
  %1785 = vmatpush1.msra.mxu0 0.0
  %1786 = vmatprep.subr.mxu0 0.0
  %1787 = vmatpush1.msra.mxu0 0.0
  %1788 = vmatprep.subr.mxu0 0.0
  %1789 = vmatpush1.msra.mxu0 0.0
  %1790 = vmatprep.subr.mxu0 0.0
  %1791 = vmatpush1.msra.mxu0 0.0
  %1792 = vmatprep.subr.mxu0 0.0
  %1793 = vmatpush1.msra.mxu0 0.0
  %1794 = vmatprep.subr.mxu0 0.0
  %1795 = vmatpush1.msra.mxu0 0.0
  %1796 = vmatprep.subr.mxu0 0.0
  %1797 = vmatpush1.msra.mxu0 0.0
  %1798 = vmatprep.subr.mxu0 0.0
  %1799 = vmatpush1.msra.mxu0 0.0
  %1800 = vmatprep.subr.mxu0 0.0
  %1801 = vmatpush1.msra.mxu0 0.0
  %1802 = vmatprep.subr.mxu0 0.0
  %1803 = vmatpush1.msra.mxu0 0.0
  %1804 = vmatprep.subr.mxu0 0.0
  %1805 = vmatpush1.msra.mxu0 0.0
  %1806 = vmatprep.subr.mxu0 0.0
  %1807 = vmatpush1.msra.mxu0 0.0
  %1808 = vmatprep.subr.mxu0 0.0
  %1809 = vmatpush1.msra.mxu0 0.0
  %1810 = vmatprep.subr.mxu0 0.0
  %1811 = vmatpush1.msra.mxu0 0.0
  %1812 = vmatprep.subr.mxu0 0.0
  %1813 = vmatpush1.msra.mxu0 0.0
  %1814 = vmatprep.mubr.f32.mxu0 0.0
  %1815 = vmatmul.mubr.f32.gmra.mrb[0].mxu0 %v1500
  %v1816 = vpop.f32.mrb[0].mxu0
  %v1817 = vadd.f32 %v1710, %v1816
  %v1818 = vpop.f32.mrb[0].mxu0
  %v1819 = vadd.f32 %v1712, %v1818
  %1820 = vmatprep.mubr.f32.mxu0 0.0
  %1821 = vmatmul.mubr.f32.gmra.mrb[0].mxu0 %v1505
  %v1822 = vpop.f32.mrb[0].mxu0
  %v1823 = vadd.f32 %v1716, %v1822
  %v1824 = vpop.f32.mrb[0].mxu0
  %v1825 = vadd.f32 %v1718, %v1824
  %1826 = vmatprep.mubr.f32.mxu0 0.0
  %1827 = vmatmul.mubr.f32.gmra.mrb[0].mxu0 %v1510
  %v1828 = vpop.f32.mrb[0].mxu0
  %v1829 = vadd.f32 %v1722, %v1828
  %v1830 = vpop.f32.mrb[0].mxu0
  %v1831 = vadd.f32 %v1724, %v1830
  %1832 = vmatprep.mubr.f32.mxu0 0.0
  %1833 = vmatmul.mubr.f32.gmra.mrb[0].mxu0 %v1515
  %v1834 = vpop.f32.mrb[0].mxu0
  %v1835 = vadd.f32 %v1728, %v1834
  %v1836 = vpop.f32.mrb[0].mxu0
  %v1837 = vadd.f32 %v1730, %v1836
  %1838 = vmatprep.mubr.f32.mxu0 0.0
  %1839 = vmatmul.mubr.f32.gmra.mrb[0].mxu0 %v1520
  %v1840 = vpop.f32.mrb[0].mxu0
  %v1841 = vadd.f32 %v1734, %v1840
  %v1842 = vpop.f32.mrb[0].mxu0
  %v1843 = vadd.f32 %v1736, %v1842
  %1844 = vmatprep.mubr.f32.mxu0 0.0
  %1845 = vmatmul.mubr.f32.gmra.mrb[0].mxu0 %v1525
  %v1846 = vpop.f32.mrb[0].mxu0
  %v1847 = vadd.f32 %v1740, %v1846
  %v1848 = vpop.f32.mrb[0].mxu0
  %v1849 = vadd.f32 %v1742, %v1848
  %1850 = vmatprep.mubr.f32.mxu0 0.0
  %1851 = vmatmul.mubr.f32.gmra.mrb[0].mxu0 %v1530
  %v1852 = vpop.f32.mrb[0].mxu0
  %v1853 = vadd.f32 %v1746, %v1852
  %v1854 = vpop.f32.mrb[0].mxu0
  %v1855 = vadd.f32 %v1748, %v1854
  %1856 = vdwg.mxu0
  %v1857 = vadd.f32 %v1533, %v1817
  %v1858 = vadd.f32 %v1534, %v1819
  %v1859 = vadd.f32 %v1535, %v1823
  %v1860 = vadd.f32 %v1536, %v1825
  %v1861 = vadd.f32 %v1537, %v1829
  %v1862 = vadd.f32 %v1538, %v1831
  %v1863 = vadd.f32 %v1539, %v1835
  %v1864 = vadd.f32 %v1540, %v1837
  %v1865 = vadd.f32 %v1541, %v1841
  %v1866 = vadd.f32 %v1542, %v1843
  %v1867 = vadd.f32 %v1543, %v1847
  %v1868 = vadd.f32 %v1544, %v1849
  %v1869 = vadd.f32 %v1545, %v1853
  %v1870 = vadd.f32 %v1546, %v1855
  %1878 = vrot.lane.b32.xlu0 %v1857, 100
  %v1879 = vpop.permute.xlu0 %1878
  %1880 = vrot.lane.b32.xlu0 %v1859, 100
  %v1881 = vpop.permute.xlu0 %1880
  %1882 = vrot.lane.b32.xlu0 %v1861, 100
  %v1883 = vpop.permute.xlu0 %1882
  %1884 = vrot.lane.b32.xlu0 %v1863, 100
  %v1885 = vpop.permute.xlu0 %1884
  %1886 = vrot.lane.b32.xlu0 %v1865, 100
  %v1887 = vpop.permute.xlu0 %1886
  %1888 = vrot.lane.b32.xlu0 %v1867, 100
  %v1889 = vpop.permute.xlu0 %1888
  %1890 = vrot.lane.b32.xlu0 %v1869, 100
  %v1891 = vpop.permute.xlu0 %1890
  %v1899 = vmax.f32 %v1857, %v1879
  %v1900 = vmax.f32 %v1859, %v1881
  %v1901 = vmax.f32 %v1861, %v1883
  %v1902 = vmax.f32 %v1863, %v1885
  %v1903 = vmax.f32 %v1865, %v1887
  %v1904 = vmax.f32 %v1867, %v1889
  %v1905 = vmax.f32 %v1869, %v1891
  %1906 = vrot.lane.b32.xlu0 %v1857, 72
  %v1907 = vpop.permute.xlu0 %1906
  %1908 = vrot.lane.b32.xlu0 %v1859, 72
  %v1909 = vpop.permute.xlu0 %1908
  %1910 = vrot.lane.b32.xlu0 %v1861, 72
  %v1911 = vpop.permute.xlu0 %1910
  %1912 = vrot.lane.b32.xlu0 %v1863, 72
  %v1913 = vpop.permute.xlu0 %1912
  %1914 = vrot.lane.b32.xlu0 %v1865, 72
  %v1915 = vpop.permute.xlu0 %1914
  %1916 = vrot.lane.b32.xlu0 %v1867, 72
  %v1917 = vpop.permute.xlu0 %1916
  %1918 = vrot.lane.b32.xlu0 %v1869, 72
  %v1919 = vpop.permute.xlu0 %1918
  %v1927 = vmax.f32 %v1899, %v1907
  %v1928 = vmax.f32 %v1900, %v1909
  %v1929 = vmax.f32 %v1901, %v1911
  %v1930 = vmax.f32 %v1902, %v1913
  %v1931 = vmax.f32 %v1903, %v1915
  %v1932 = vmax.f32 %v1904, %v1917
  %v1933 = vmax.f32 %v1905, %v1919
  %1934 = vrot.lane.b32.xlu0 %v1857, 44
  %v1935 = vpop.permute.xlu0 %1934
  %1936 = vrot.lane.b32.xlu0 %v1859, 44
  %v1937 = vpop.permute.xlu0 %1936
  %1938 = vrot.lane.b32.xlu0 %v1861, 44
  %v1939 = vpop.permute.xlu0 %1938
  %1940 = vrot.lane.b32.xlu0 %v1863, 44
  %v1941 = vpop.permute.xlu0 %1940
  %1942 = vrot.lane.b32.xlu0 %v1865, 44
  %v1943 = vpop.permute.xlu0 %1942
  %1944 = vrot.lane.b32.xlu0 %v1867, 44
  %v1945 = vpop.permute.xlu0 %1944
  %1946 = vrot.lane.b32.xlu0 %v1869, 44
  %v1947 = vpop.permute.xlu0 %1946
  %v1955 = vmax.f32 %v1927, %v1935
  %v1956 = vmax.f32 %v1928, %v1937
  %v1957 = vmax.f32 %v1929, %v1939
  %v1958 = vmax.f32 %v1930, %v1941
  %v1959 = vmax.f32 %v1931, %v1943
  %v1960 = vmax.f32 %v1932, %v1945
  %v1961 = vmax.f32 %v1933, %v1947
  %1969 = vrot.lane.b32.xlu0 %v1857, 16
  %v1970 = vpop.permute.xlu0 %1969
  %1971 = vrot.lane.b32.xlu0 %v1858, 16
  %v1972 = vpop.permute.xlu0 %1971
  %1973 = vrot.lane.b32.xlu0 %v1859, 16
  %v1974 = vpop.permute.xlu0 %1973
  %1975 = vrot.lane.b32.xlu0 %v1860, 16
  %v1976 = vpop.permute.xlu0 %1975
  %1977 = vrot.lane.b32.xlu0 %v1861, 16
  %v1978 = vpop.permute.xlu0 %1977
  %1979 = vrot.lane.b32.xlu0 %v1862, 16
  %v1980 = vpop.permute.xlu0 %1979
  %1981 = vrot.lane.b32.xlu0 %v1863, 16
  %v1982 = vpop.permute.xlu0 %1981
  %1983 = vrot.lane.b32.xlu0 %v1864, 16
  %v1984 = vpop.permute.xlu0 %1983
  %1985 = vrot.lane.b32.xlu0 %v1865, 16
  %v1986 = vpop.permute.xlu0 %1985
  %1987 = vrot.lane.b32.xlu0 %v1866, 16
  %v1988 = vpop.permute.xlu0 %1987
  %1989 = vrot.lane.b32.xlu0 %v1867, 16
  %v1990 = vpop.permute.xlu0 %1989
  %1991 = vrot.lane.b32.xlu0 %v1868, 16
  %v1992 = vpop.permute.xlu0 %1991
  %1993 = vrot.lane.b32.xlu0 %v1869, 16
  %v1994 = vpop.permute.xlu0 %1993
  %1995 = vrot.lane.b32.xlu0 %v1870, 16
  %v1996 = vpop.permute.xlu0 %1995
  %vm1997 = vcmask 130048
  %v1998 = vsel %vm1997, %v1970, %v1972
  %v1999 = vsel %vm1997, %v1974, %v1976
  %v2000 = vsel %vm1997, %v1978, %v1980
  %v2001 = vsel %vm1997, %v1982, %v1984
  %v2002 = vsel %vm1997, %v1986, %v1988
  %v2003 = vsel %vm1997, %v1990, %v1992
  %v2004 = vsel %vm1997, %v1994, %v1996
  %v2012 = vmax.f32 %v1955, %v1998
  %v2013 = vmax.f32 %v1956, %v1999
  %v2014 = vmax.f32 %v1957, %v2000
  %v2015 = vmax.f32 %v1958, %v2001
  %v2016 = vmax.f32 %v1959, %v2002
  %v2017 = vmax.f32 %v1960, %v2003
  %v2018 = vmax.f32 %v1961, %v2004
  %v2019 = vld [vmem:[%s13] sm:$0xff]
  %v2020 = vld [vmem:[%s13 + $0x8] sm:$0xff]
  %v2021 = vld [vmem:[%s13 + $0x10] sm:$0xff]
  %v2022 = vld [vmem:[%s13 + $0x18] sm:$0xff]
  %v2023 = vld [vmem:[%s13 + $0x20] sm:$0xff]
  %v2024 = vld [vmem:[%s13 + $0x28] sm:$0xff]
  %v2025 = vld [vmem:[%s13 + $0x30] sm:$0xf]
  %v2026 = vld [vmem:[%s13 + $0x38] sm:$0xf]
  %v2028 = vsel %vm60, %v2012, 0
  %v2031 = vsel %vm60, %v2013, 0
  %v2034 = vsel %vm60, %v2014, 0
  %v2037 = vsel %vm60, %v2015, 0
  %v2040 = vsel %vm60, %v2016, 0
  %v2043 = vsel %vm60, %v2017, 0
  %v2046 = vsel %vm60, %v2018, 0
  %v2049 = vsel %vm67, %v2025, 0
  %v2052 = vsel %vm67, %v2026, 0
  %2054 = vmatprep.subr.mxu0 %v2020
  %2055 = vmatpush1.msra.mxu0 %v2019
  %2056 = vmatprep.subr.mxu0 %v2022
  %2057 = vmatpush1.msra.mxu0 %v2021
  %2058 = vmatprep.subr.mxu0 %v2024
  %2059 = vmatpush1.msra.mxu0 %v2023
  %2060 = vmatprep.subr.mxu0 %v2052
  %2061 = vmatpush1.msra.mxu0 %v2049
  %2062 = vmatprep.subr.mxu0 0.0
  %2063 = vmatpush1.msra.mxu0 0.0
  %2064 = vmatprep.subr.mxu0 0.0
  %2065 = vmatpush1.msra.mxu0 0.0
  %2066 = vmatprep.subr.mxu0 0.0
  %2067 = vmatpush1.msra.mxu0 0.0
  %2068 = vmatprep.subr.mxu0 0.0
  %2069 = vmatpush1.msra.mxu0 0.0
  %2070 = vmatprep.subr.mxu0 0.0
  %2071 = vmatpush1.msra.mxu0 0.0
  %2072 = vmatprep.subr.mxu0 0.0
  %2073 = vmatpush1.msra.mxu0 0.0
  %2074 = vmatprep.subr.mxu0 0.0
  %2075 = vmatpush1.msra.mxu0 0.0
  %2076 = vmatprep.subr.mxu0 0.0
  %2077 = vmatpush1.msra.mxu0 0.0
  %2078 = vmatprep.subr.mxu0 0.0
  %2079 = vmatpush1.msra.mxu0 0.0
  %2080 = vmatprep.subr.mxu0 0.0
  %2081 = vmatpush1.msra.mxu0 0.0
  %2082 = vmatprep.subr.mxu0 0.0
  %2083 = vmatpush1.msra.mxu0 0.0
  %2084 = vmatprep.subr.mxu0 0.0
  %2085 = vmatpush1.msra.mxu0 0.0
  %2086 = vmatprep.subr.mxu0 0.0
  %2087 = vmatpush1.msra.mxu0 0.0
  %2088 = vmatprep.subr.mxu0 0.0
  %2089 = vmatpush1.msra.mxu0 0.0
  %2090 = vmatprep.subr.mxu0 0.0
  %2091 = vmatpush1.msra.mxu0 0.0
  %2092 = vmatprep.subr.mxu0 0.0
  %2093 = vmatpush1.msra.mxu0 0.0
  %2094 = vmatprep.subr.mxu0 0.0
  %2095 = vmatpush1.msra.mxu0 0.0
  %2096 = vmatprep.subr.mxu0 0.0
  %2097 = vmatpush1.msra.mxu0 0.0
  %2098 = vmatprep.subr.mxu0 0.0
  %2099 = vmatpush1.msra.mxu0 0.0
  %2100 = vmatprep.subr.mxu0 0.0
  %2101 = vmatpush1.msra.mxu0 0.0
  %2102 = vmatprep.subr.mxu0 0.0
  %2103 = vmatpush1.msra.mxu0 0.0
  %2104 = vmatprep.subr.mxu0 0.0
  %2105 = vmatpush1.msra.mxu0 0.0
  %2106 = vmatprep.subr.mxu0 0.0
  %2107 = vmatpush1.msra.mxu0 0.0
  %2108 = vmatprep.subr.mxu0 0.0
  %2109 = vmatpush1.msra.mxu0 0.0
  %2110 = vmatprep.subr.mxu0 0.0
  %2111 = vmatpush1.msra.mxu0 0.0
  %2112 = vmatprep.subr.mxu0 0.0
  %2113 = vmatpush1.msra.mxu0 0.0
  %2114 = vmatprep.subr.mxu0 0.0
  %2115 = vmatpush1.msra.mxu0 0.0
  %2116 = vmatprep.subr.mxu0 0.0
  %2117 = vmatpush1.msra.mxu0 0.0
  %2118 = vmatprep.mubr.f32.mxu0 0.0
  %2119 = vmatmul.mubr.f32.gmra.mrb[0].mxu0 %v2028
  %v2120 = vpop.f32.mrb[0].mxu0
  %v2121 = vadd.f32 0.0, %v2120
  %v2122 = vpop.f32.mrb[0].mxu0
  %v2123 = vadd.f32 0.0, %v2122
  %2124 = vmatprep.mubr.f32.mxu0 0.0
  %2125 = vmatmul.mubr.f32.gmra.mrb[0].mxu0 %v2031
  %v2126 = vpop.f32.mrb[0].mxu0
  %v2127 = vadd.f32 0.0, %v2126
  %v2128 = vpop.f32.mrb[0].mxu0
  %v2129 = vadd.f32 0.0, %v2128
  %2130 = vmatprep.mubr.f32.mxu0 0.0
  %2131 = vmatmul.mubr.f32.gmra.mrb[0].mxu0 %v2034
  %v2132 = vpop.f32.mrb[0].mxu0
  %v2133 = vadd.f32 0.0, %v2132
  %v2134 = vpop.f32.mrb[0].mxu0
  %v2135 = vadd.f32 0.0, %v2134
  %2136 = vmatprep.mubr.f32.mxu0 0.0
  %2137 = vmatmul.mubr.f32.gmra.mrb[0].mxu0 %v2037
  %v2138 = vpop.f32.mrb[0].mxu0
  %v2139 = vadd.f32 0.0, %v2138
  %v2140 = vpop.f32.mrb[0].mxu0
  %v2141 = vadd.f32 0.0, %v2140
  %2142 = vmatprep.mubr.f32.mxu0 0.0
  %2143 = vmatmul.mubr.f32.gmra.mrb[0].mxu0 %v2040
  %v2144 = vpop.f32.mrb[0].mxu0
  %v2145 = vadd.f32 0.0, %v2144
  %v2146 = vpop.f32.mrb[0].mxu0
  %v2147 = vadd.f32 0.0, %v2146
  %2148 = vmatprep.mubr.f32.mxu0 0.0
  %2149 = vmatmul.mubr.f32.gmra.mrb[0].mxu0 %v2043
  %v2150 = vpop.f32.mrb[0].mxu0
  %v2151 = vadd.f32 0.0, %v2150
  %v2152 = vpop.f32.mrb[0].mxu0
  %v2153 = vadd.f32 0.0, %v2152
  %2154 = vmatprep.mubr.f32.mxu0 0.0
  %2155 = vmatmul.mubr.f32.gmra.mrb[0].mxu0 %v2046
  %v2156 = vpop.f32.mrb[0].mxu0
  %v2157 = vadd.f32 0.0, %v2156
  %v2158 = vpop.f32.mrb[0].mxu0
  %v2159 = vadd.f32 0.0, %v2158
  %2160 = vdwg.mxu0
  %v2161 = vsub.f32 %v1857, %v2121
  %v2162 = vsub.f32 %v1858, %v2123
  %v2163 = vsub.f32 %v1859, %v2127
  %v2164 = vsub.f32 %v1860, %v2129
  %v2165 = vsub.f32 %v1861, %v2133
  %v2166 = vsub.f32 %v1862, %v2135
  %v2167 = vsub.f32 %v1863, %v2139
  %v2168 = vsub.f32 %v1864, %v2141
  %v2169 = vsub.f32 %v1865, %v2145
  %v2170 = vsub.f32 %v1866, %v2147
  %v2171 = vsub.f32 %v1867, %v2151
  %v2172 = vsub.f32 %v1868, %v2153
  %v2173 = vsub.f32 %v1869, %v2157
  %v2174 = vsub.f32 %v1870, %v2159
  %v2175 = vmul.f32 %v2161, 1.442695
  %v2176 = vpow.pop %v2175
  %v2177 = vmul.f32 %v2162, 1.442695
  %v2178 = vpow.pop %v2177
  %v2179 = vmul.f32 %v2163, 1.442695
  %v2180 = vpow.pop %v2179
  %v2181 = vmul.f32 %v2164, 1.442695
  %v2182 = vpow.pop %v2181
  %v2183 = vmul.f32 %v2165, 1.442695
  %v2184 = vpow.pop %v2183
  %v2185 = vmul.f32 %v2166, 1.442695
  %v2186 = vpow.pop %v2185
  %v2187 = vmul.f32 %v2167, 1.442695
  %v2188 = vpow.pop %v2187
  %v2189 = vmul.f32 %v2168, 1.442695
  %v2190 = vpow.pop %v2189
  %v2191 = vmul.f32 %v2169, 1.442695
  %v2192 = vpow.pop %v2191
  %v2193 = vmul.f32 %v2170, 1.442695
  %v2194 = vpow.pop %v2193
  %v2195 = vmul.f32 %v2171, 1.442695
  %v2196 = vpow.pop %v2195
  %v2197 = vmul.f32 %v2172, 1.442695
  %v2198 = vpow.pop %v2197
  %v2199 = vmul.f32 %v2173, 1.442695
  %v2200 = vpow.pop %v2199
  %v2201 = vmul.f32 %v2174, 1.442695
  %v2202 = vpow.pop %v2201
  %v2203 = vld [vmem:[%s14] sm:$0xff]
  %v2204 = vld [vmem:[%s14 + $0x8] sm:$0xff]
  %v2205 = vld [vmem:[%s14 + $0x10] sm:$0xff]
  %v2206 = vld [vmem:[%s14 + $0x18] sm:$0xff]
  %v2207 = vld [vmem:[%s14 + $0x20] sm:$0xff]
  %v2208 = vld [vmem:[%s14 + $0x28] sm:$0xff]
  %v2209 = vld [vmem:[%s14 + $0x30] sm:$0xff]
  %v2210 = vld [vmem:[%s14 + $0x38] sm:$0xff]
  %v2211 = vld [vmem:[%s14 + $0x40] sm:$0xff]
  %v2212 = vld [vmem:[%s14 + $0x48] sm:$0xff]
  %v2213 = vld [vmem:[%s14 + $0x50] sm:$0xff]
  %v2214 = vld [vmem:[%s14 + $0x58] sm:$0xff]
  %v2215 = vld [vmem:[%s14 + $0x60] sm:$0xff]
  %v2216 = vld [vmem:[%s14 + $0x68] sm:$0xff]
  %v2217 = vld [vmem:[%s14 + $0x70] sm:$0xff]
  %v2218 = vld [vmem:[%s14 + $0x78] sm:$0xff]
  %v2219 = vld [vmem:[%s14 + $0x80] sm:$0xff]
  %v2220 = vld [vmem:[%s14 + $0x88] sm:$0xf]
  %vm2221 = vcmask 97280
  %v2223 = vsel %vm2221, %v2178, 0
  %v2226 = vsel %vm2221, %v2182, 0
  %v2229 = vsel %vm2221, %v2186, 0
  %v2232 = vsel %vm2221, %v2190, 0
  %v2235 = vsel %vm2221, %v2194, 0
  %v2238 = vsel %vm2221, %v2198, 0
  %v2241 = vsel %vm2221, %v2202, 0
  %v2244 = vsel %vm67, %v2220, 0
  %2246 = vmatprep.subr.mxu0 0.0
  %2247 = vmatpush1.msra.mxu0 %v2203
  %2248 = vmatprep.subr.mxu0 0.0
  %2249 = vmatpush1.msra.mxu0 %v2204
  %2250 = vmatprep.subr.mxu0 0.0
  %2251 = vmatpush1.msra.mxu0 %v2205
  %2252 = vmatprep.subr.mxu0 0.0
  %2253 = vmatpush1.msra.mxu0 %v2206
  %2254 = vmatprep.subr.mxu0 0.0
  %2255 = vmatpush1.msra.mxu0 %v2207
  %2256 = vmatprep.subr.mxu0 0.0
  %2257 = vmatpush1.msra.mxu0 %v2208
  %2258 = vmatprep.subr.mxu0 0.0
  %2259 = vmatpush1.msra.mxu0 %v2209
  %2260 = vmatprep.subr.mxu0 0.0
  %2261 = vmatpush1.msra.mxu0 %v2210
  %2262 = vmatprep.subr.mxu0 0.0
  %2263 = vmatpush1.msra.mxu0 %v2211
  %2264 = vmatprep.subr.mxu0 0.0
  %2265 = vmatpush1.msra.mxu0 %v2212
  %2266 = vmatprep.subr.mxu0 0.0
  %2267 = vmatpush1.msra.mxu0 %v2213
  %2268 = vmatprep.subr.mxu0 0.0
  %2269 = vmatpush1.msra.mxu0 %v2214
  %2270 = vmatprep.subr.mxu0 0.0
  %2271 = vmatpush1.msra.mxu0 %v2215
  %2272 = vmatprep.subr.mxu0 0.0
  %2273 = vmatpush1.msra.mxu0 %v2216
  %2274 = vmatprep.subr.mxu0 0.0
  %2275 = vmatpush1.msra.mxu0 %v2217
  %2276 = vmatprep.subr.mxu0 0.0
  %2277 = vmatpush1.msra.mxu0 %v2218
  %2278 = vmatprep.subr.mxu0 0.0
  %2279 = vmatpush1.msra.mxu0 %v2219
  %2280 = vmatprep.subr.mxu0 0.0
  %2281 = vmatpush1.msra.mxu0 %v2244
  %2282 = vmatprep.subr.mxu0 0.0
  %2283 = vmatpush1.msra.mxu0 0.0
  %2284 = vmatprep.subr.mxu0 0.0
  %2285 = vmatpush1.msra.mxu0 0.0
  %2286 = vmatprep.subr.mxu0 0.0
  %2287 = vmatpush1.msra.mxu0 0.0
  %2288 = vmatprep.subr.mxu0 0.0
  %2289 = vmatpush1.msra.mxu0 0.0
  %2290 = vmatprep.subr.mxu0 0.0
  %2291 = vmatpush1.msra.mxu0 0.0
  %2292 = vmatprep.subr.mxu0 0.0
  %2293 = vmatpush1.msra.mxu0 0.0
  %2294 = vmatprep.subr.mxu0 0.0
  %2295 = vmatpush1.msra.mxu0 0.0
  %2296 = vmatprep.subr.mxu0 0.0
  %2297 = vmatpush1.msra.mxu0 0.0
  %2298 = vmatprep.subr.mxu0 0.0
  %2299 = vmatpush1.msra.mxu0 0.0
  %2300 = vmatprep.subr.mxu0 0.0
  %2301 = vmatpush1.msra.mxu0 0.0
  %2302 = vmatprep.subr.mxu0 0.0
  %2303 = vmatpush1.msra.mxu0 0.0
  %2304 = vmatprep.subr.mxu0 0.0
  %2305 = vmatpush1.msra.mxu0 0.0
  %2306 = vmatprep.subr.mxu0 0.0
  %2307 = vmatpush1.msra.mxu0 0.0
  %2308 = vmatprep.subr.mxu0 0.0
  %2309 = vmatpush1.msra.mxu0 0.0
  %2310 = vmatprep.mubr.f32.mxu0 %v2223
  %2311 = vmatmul.mubr.f32.gmra.mrb[0].mxu0 %v2176
  %v2312 = vpop.f32.mrb[0].mxu0
  %v2313 = vadd.f32 0.0, %v2312
  %v2314 = vpop.f32.mrb[0].mxu0
  %2315 = vmatprep.mubr.f32.mxu0 %v2226
  %2316 = vmatmul.mubr.f32.gmra.mrb[0].mxu0 %v2180
  %v2317 = vpop.f32.mrb[0].mxu0
  %v2318 = vadd.f32 0.0, %v2317
  %v2319 = vpop.f32.mrb[0].mxu0
  %2320 = vmatprep.mubr.f32.mxu0 %v2229
  %2321 = vmatmul.mubr.f32.gmra.mrb[0].mxu0 %v2184
  %v2322 = vpop.f32.mrb[0].mxu0
  %v2323 = vadd.f32 0.0, %v2322
  %v2324 = vpop.f32.mrb[0].mxu0
  %2325 = vmatprep.mubr.f32.mxu0 %v2232
  %2326 = vmatmul.mubr.f32.gmra.mrb[0].mxu0 %v2188
  %v2327 = vpop.f32.mrb[0].mxu0
  %v2328 = vadd.f32 0.0, %v2327
  %v2329 = vpop.f32.mrb[0].mxu0
  %2330 = vmatprep.mubr.f32.mxu0 %v2235
  %2331 = vmatmul.mubr.f32.gmra.mrb[0].mxu0 %v2192
  %v2332 = vpop.f32.mrb[0].mxu0
  %v2333 = vadd.f32 0.0, %v2332
  %v2334 = vpop.f32.mrb[0].mxu0
  %2335 = vmatprep.mubr.f32.mxu0 %v2238
  %2336 = vmatmul.mubr.f32.gmra.mrb[0].mxu0 %v2196
  %v2337 = vpop.f32.mrb[0].mxu0
  %v2338 = vadd.f32 0.0, %v2337
  %v2339 = vpop.f32.mrb[0].mxu0
  %2340 = vmatprep.mubr.f32.mxu0 %v2241
  %2341 = vmatmul.mubr.f32.gmra.mrb[0].mxu0 %v2200
  %v2342 = vpop.f32.mrb[0].mxu0
  %v2343 = vadd.f32 0.0, %v2342
  %v2344 = vpop.f32.mrb[0].mxu0
  %2345 = vdwg.mxu0
  %v2346 = vrcp.pop %v2313
  %v2347 = vrcp.pop %v2318
  %v2348 = vrcp.pop %v2323
  %v2349 = vrcp.pop %v2328
  %v2350 = vrcp.pop %v2333
  %v2351 = vrcp.pop %v2338
  %v2352 = vrcp.pop %v2343
  %v2353 = vmul.f32 %v2313, %v2346
  %v2354 = vmul.f32 %v2318, %v2347
  %v2355 = vmul.f32 %v2323, %v2348
  %v2356 = vmul.f32 %v2328, %v2349
  %v2357 = vmul.f32 %v2333, %v2350
  %v2358 = vmul.f32 %v2338, %v2351
  %v2359 = vmul.f32 %v2343, %v2352
  %v2360 = vsub.f32 2.0, %v2353
  %v2361 = vsub.f32 2.0, %v2354
  %v2362 = vsub.f32 2.0, %v2355
  %v2363 = vsub.f32 2.0, %v2356
  %v2364 = vsub.f32 2.0, %v2357
  %v2365 = vsub.f32 2.0, %v2358
  %v2366 = vsub.f32 2.0, %v2359
  %v2367 = vmul.f32 %v2346, %v2360
  %v2368 = vmul.f32 %v2347, %v2361
  %v2369 = vmul.f32 %v2348, %v2362
  %v2370 = vmul.f32 %v2349, %v2363
  %v2371 = vmul.f32 %v2350, %v2364
  %v2372 = vmul.f32 %v2351, %v2365
  %v2373 = vmul.f32 %v2352, %v2366
  %v2375 = vsel %vm60, %v2367, 0
  %v2378 = vsel %vm60, %v2368, 0
  %v2381 = vsel %vm60, %v2369, 0
  %v2384 = vsel %vm60, %v2370, 0
  %v2387 = vsel %vm60, %v2371, 0
  %v2390 = vsel %vm60, %v2372, 0
  %v2393 = vsel %vm60, %v2373, 0
  %2395 = vmatprep.subr.mxu0 %v2020
  %2396 = vmatpush1.msra.mxu0 %v2019
  %2397 = vmatprep.subr.mxu0 %v2022
  %2398 = vmatpush1.msra.mxu0 %v2021
  %2399 = vmatprep.subr.mxu0 %v2024
  %2400 = vmatpush1.msra.mxu0 %v2023
  %2401 = vmatprep.subr.mxu0 %v2052
  %2402 = vmatpush1.msra.mxu0 %v2049
  %2403 = vmatprep.subr.mxu0 0.0
  %2404 = vmatpush1.msra.mxu0 0.0
  %2405 = vmatprep.subr.mxu0 0.0
  %2406 = vmatpush1.msra.mxu0 0.0
  %2407 = vmatprep.subr.mxu0 0.0
  %2408 = vmatpush1.msra.mxu0 0.0
  %2409 = vmatprep.subr.mxu0 0.0
  %2410 = vmatpush1.msra.mxu0 0.0
  %2411 = vmatprep.subr.mxu0 0.0
  %2412 = vmatpush1.msra.mxu0 0.0
  %2413 = vmatprep.subr.mxu0 0.0
  %2414 = vmatpush1.msra.mxu0 0.0
  %2415 = vmatprep.subr.mxu0 0.0
  %2416 = vmatpush1.msra.mxu0 0.0
  %2417 = vmatprep.subr.mxu0 0.0
  %2418 = vmatpush1.msra.mxu0 0.0
  %2419 = vmatprep.subr.mxu0 0.0
  %2420 = vmatpush1.msra.mxu0 0.0
  %2421 = vmatprep.subr.mxu0 0.0
  %2422 = vmatpush1.msra.mxu0 0.0
  %2423 = vmatprep.subr.mxu0 0.0
  %2424 = vmatpush1.msra.mxu0 0.0
  %2425 = vmatprep.subr.mxu0 0.0
  %2426 = vmatpush1.msra.mxu0 0.0
  %2427 = vmatprep.subr.mxu0 0.0
  %2428 = vmatpush1.msra.mxu0 0.0
  %2429 = vmatprep.subr.mxu0 0.0
  %2430 = vmatpush1.msra.mxu0 0.0
  %2431 = vmatprep.subr.mxu0 0.0
  %2432 = vmatpush1.msra.mxu0 0.0
  %2433 = vmatprep.subr.mxu0 0.0
  %2434 = vmatpush1.msra.mxu0 0.0
  %2435 = vmatprep.subr.mxu0 0.0
  %2436 = vmatpush1.msra.mxu0 0.0
  %2437 = vmatprep.subr.mxu0 0.0
  %2438 = vmatpush1.msra.mxu0 0.0
  %2439 = vmatprep.subr.mxu0 0.0
  %2440 = vmatpush1.msra.mxu0 0.0
  %2441 = vmatprep.subr.mxu0 0.0
  %2442 = vmatpush1.msra.mxu0 0.0
  %2443 = vmatprep.subr.mxu0 0.0
  %2444 = vmatpush1.msra.mxu0 0.0
  %2445 = vmatprep.subr.mxu0 0.0
  %2446 = vmatpush1.msra.mxu0 0.0
  %2447 = vmatprep.subr.mxu0 0.0
  %2448 = vmatpush1.msra.mxu0 0.0
  %2449 = vmatprep.subr.mxu0 0.0
  %2450 = vmatpush1.msra.mxu0 0.0
  %2451 = vmatprep.subr.mxu0 0.0
  %2452 = vmatpush1.msra.mxu0 0.0
  %2453 = vmatprep.subr.mxu0 0.0
  %2454 = vmatpush1.msra.mxu0 0.0
  %2455 = vmatprep.subr.mxu0 0.0
  %2456 = vmatpush1.msra.mxu0 0.0
  %2457 = vmatprep.subr.mxu0 0.0
  %2458 = vmatpush1.msra.mxu0 0.0
  %2459 = vmatprep.mubr.f32.mxu0 0.0
  %2460 = vmatmul.mubr.f32.gmra.mrb[0].mxu0 %v2375
  %v2461 = vpop.f32.mrb[0].mxu0
  %v2462 = vadd.f32 0.0, %v2461
  %v2463 = vpop.f32.mrb[0].mxu0
  %v2464 = vadd.f32 0.0, %v2463
  %2465 = vmatprep.mubr.f32.mxu0 0.0
  %2466 = vmatmul.mubr.f32.gmra.mrb[0].mxu0 %v2378
  %v2467 = vpop.f32.mrb[0].mxu0
  %v2468 = vadd.f32 0.0, %v2467
  %v2469 = vpop.f32.mrb[0].mxu0
  %v2470 = vadd.f32 0.0, %v2469
  %2471 = vmatprep.mubr.f32.mxu0 0.0
  %2472 = vmatmul.mubr.f32.gmra.mrb[0].mxu0 %v2381
  %v2473 = vpop.f32.mrb[0].mxu0
  %v2474 = vadd.f32 0.0, %v2473
  %v2475 = vpop.f32.mrb[0].mxu0
  %v2476 = vadd.f32 0.0, %v2475
  %2477 = vmatprep.mubr.f32.mxu0 0.0
  %2478 = vmatmul.mubr.f32.gmra.mrb[0].mxu0 %v2384
  %v2479 = vpop.f32.mrb[0].mxu0
  %v2480 = vadd.f32 0.0, %v2479
  %v2481 = vpop.f32.mrb[0].mxu0
  %v2482 = vadd.f32 0.0, %v2481
  %2483 = vmatprep.mubr.f32.mxu0 0.0
  %2484 = vmatmul.mubr.f32.gmra.mrb[0].mxu0 %v2387
  %v2485 = vpop.f32.mrb[0].mxu0
  %v2486 = vadd.f32 0.0, %v2485
  %v2487 = vpop.f32.mrb[0].mxu0
  %v2488 = vadd.f32 0.0, %v2487
  %2489 = vmatprep.mubr.f32.mxu0 0.0
  %2490 = vmatmul.mubr.f32.gmra.mrb[0].mxu0 %v2390
  %v2491 = vpop.f32.mrb[0].mxu0
  %v2492 = vadd.f32 0.0, %v2491
  %v2493 = vpop.f32.mrb[0].mxu0
  %v2494 = vadd.f32 0.0, %v2493
  %2495 = vmatprep.mubr.f32.mxu0 0.0
  %2496 = vmatmul.mubr.f32.gmra.mrb[0].mxu0 %v2393
  %v2497 = vpop.f32.mrb[0].mxu0
  %v2498 = vadd.f32 0.0, %v2497
  %v2499 = vpop.f32.mrb[0].mxu0
  %v2500 = vadd.f32 0.0, %v2499
  %2501 = vdwg.mxu0
  %v2502 = vmul.f32 %v2176, %v2462
  %v2503 = vmul.f32 %v2178, %v2464
  %v2504 = vmul.f32 %v2180, %v2468
  %v2505 = vmul.f32 %v2182, %v2470
  %v2506 = vmul.f32 %v2184, %v2474
  %v2507 = vmul.f32 %v2186, %v2476
  %v2508 = vmul.f32 %v2188, %v2480
  %v2509 = vmul.f32 %v2190, %v2482
  %v2510 = vmul.f32 %v2192, %v2486
  %v2511 = vmul.f32 %v2194, %v2488
  %v2512 = vmul.f32 %v2196, %v2492
  %v2513 = vmul.f32 %v2198, %v2494
  %v2514 = vmul.f32 %v2200, %v2498
  %v2515 = vmul.f32 %v2202, %v2500
  %2516 = vst [vmem:[%s15] sm:$0xff] %v2502
  %2517 = vst.msk [vmem:[%s15 + $0x8] sm:$0xff] %vm2221, %v2503
  %2518 = vst [vmem:[%s15 + $0x10] sm:$0xff] %v2504
  %2519 = vst.msk [vmem:[%s15 + $0x18] sm:$0xff] %vm2221, %v2505
  %2520 = vst [vmem:[%s15 + $0x20] sm:$0xff] %v2506
  %2521 = vst.msk [vmem:[%s15 + $0x28] sm:$0xff] %vm2221, %v2507
  %2522 = vst [vmem:[%s15 + $0x30] sm:$0xff] %v2508
  %2523 = vst.msk [vmem:[%s15 + $0x38] sm:$0xff] %vm2221, %v2509
  %2524 = vst [vmem:[%s15 + $0x40] sm:$0xff] %v2510
  %2525 = vst.msk [vmem:[%s15 + $0x48] sm:$0xff] %vm2221, %v2511
  %2526 = vst [vmem:[%s15 + $0x50] sm:$0xff] %v2512
  %2527 = vst.msk [vmem:[%s15 + $0x58] sm:$0xff] %vm2221, %v2513
  %2528 = vst [vmem:[%s15 + $0x60] sm:$0xff] %v2514
  %2529 = vst.msk [vmem:[%s15 + $0x68] sm:$0xff] %vm2221, %v2515
  %v2530 = vld [vmem:[%s1] sm:$0xff]
  %v2531 = vld [vmem:[%s1 + $0x8] sm:$0xff]
  %v2532 = vld [vmem:[%s1 + $0x10] sm:$0xff]
  %v2533 = vld [vmem:[%s1 + $0x18] sm:$0xff]
  %v2534 = vld [vmem:[%s1 + $0x20] sm:$0xff]
  %v2535 = vld [vmem:[%s1 + $0x28] sm:$0xff]
  %v2536 = vld [vmem:[%s1 + $0x30] sm:$0xff]
  %vm2537 = vcmp.ge.f32.partialorder %v2530, %v2502
  %vm2538 = vcmp.ge.f32.partialorder %v2531, %v2504
  %vm2539 = vcmp.ge.f32.partialorder %v2532, %v2506
  %vm2540 = vcmp.ge.f32.partialorder %v2533, %v2508
  %vm2541 = vcmp.ge.f32.partialorder %v2534, %v2510
  %vm2542 = vcmp.ge.f32.partialorder %v2535, %v2512
  %vm2543 = vcmp.ge.f32.partialorder %v2536, %v2514
  %v2544 = vsel %vm2537, 1.0, 0.0
  %v2545 = vsel %vm2538, 1.0, 0.0
  %v2546 = vsel %vm2539, 1.0, 0.0
  %v2547 = vsel %vm2540, 1.0, 0.0
  %v2548 = vsel %vm2541, 1.0, 0.0
  %v2549 = vsel %vm2542, 1.0, 0.0
  %v2550 = vsel %vm2543, 1.0, 0.0
  %2558 = vrot.lane.b32.xlu0 %v2502, 100
  %v2559 = vpop.permute.xlu0 %2558
  %2560 = vrot.lane.b32.xlu0 %v2504, 100
  %v2561 = vpop.permute.xlu0 %2560
  %2562 = vrot.lane.b32.xlu0 %v2506, 100
  %v2563 = vpop.permute.xlu0 %2562
  %2564 = vrot.lane.b32.xlu0 %v2508, 100
  %v2565 = vpop.permute.xlu0 %2564
  %2566 = vrot.lane.b32.xlu0 %v2510, 100
  %v2567 = vpop.permute.xlu0 %2566
  %2568 = vrot.lane.b32.xlu0 %v2512, 100
  %v2569 = vpop.permute.xlu0 %2568
  %2570 = vrot.lane.b32.xlu0 %v2514, 100
  %v2571 = vpop.permute.xlu0 %2570
  %v2579 = vadd.f32 %v2502, %v2559
  %v2580 = vadd.f32 %v2504, %v2561
  %v2581 = vadd.f32 %v2506, %v2563
  %v2582 = vadd.f32 %v2508, %v2565
  %v2583 = vadd.f32 %v2510, %v2567
  %v2584 = vadd.f32 %v2512, %v2569
  %v2585 = vadd.f32 %v2514, %v2571
  %vm2586 = vcmp.ge.f32.partialorder %v2530, %v2579
  %vm2587 = vcmp.ge.f32.partialorder %v2531, %v2580
  %vm2588 = vcmp.ge.f32.partialorder %v2532, %v2581
  %vm2589 = vcmp.ge.f32.partialorder %v2533, %v2582
  %vm2590 = vcmp.ge.f32.partialorder %v2534, %v2583
  %vm2591 = vcmp.ge.f32.partialorder %v2535, %v2584
  %vm2592 = vcmp.ge.f32.partialorder %v2536, %v2585
  %v2593 = vsel %vm2586, 1.0, 0.0
  %v2594 = vsel %vm2587, 1.0, 0.0
  %v2595 = vsel %vm2588, 1.0, 0.0
  %v2596 = vsel %vm2589, 1.0, 0.0
  %v2597 = vsel %vm2590, 1.0, 0.0
  %v2598 = vsel %vm2591, 1.0, 0.0
  %v2599 = vsel %vm2592, 1.0, 0.0
  %v2600 = vadd.f32 %v2544, %v2593
  %v2601 = vadd.f32 %v2545, %v2594
  %v2602 = vadd.f32 %v2546, %v2595
  %v2603 = vadd.f32 %v2547, %v2596
  %v2604 = vadd.f32 %v2548, %v2597
  %v2605 = vadd.f32 %v2549, %v2598
  %v2606 = vadd.f32 %v2550, %v2599
  %2607 = vrot.lane.b32.xlu0 %v2502, 72
  %v2608 = vpop.permute.xlu0 %2607
  %2609 = vrot.lane.b32.xlu0 %v2504, 72
  %v2610 = vpop.permute.xlu0 %2609
  %2611 = vrot.lane.b32.xlu0 %v2506, 72
  %v2612 = vpop.permute.xlu0 %2611
  %2613 = vrot.lane.b32.xlu0 %v2508, 72
  %v2614 = vpop.permute.xlu0 %2613
  %2615 = vrot.lane.b32.xlu0 %v2510, 72
  %v2616 = vpop.permute.xlu0 %2615
  %2617 = vrot.lane.b32.xlu0 %v2512, 72
  %v2618 = vpop.permute.xlu0 %2617
  %2619 = vrot.lane.b32.xlu0 %v2514, 72
  %v2620 = vpop.permute.xlu0 %2619
  %v2628 = vadd.f32 %v2579, %v2608
  %v2629 = vadd.f32 %v2580, %v2610
  %v2630 = vadd.f32 %v2581, %v2612
  %v2631 = vadd.f32 %v2582, %v2614
  %v2632 = vadd.f32 %v2583, %v2616
  %v2633 = vadd.f32 %v2584, %v2618
  %v2634 = vadd.f32 %v2585, %v2620
  %vm2635 = vcmp.ge.f32.partialorder %v2530, %v2628
  %vm2636 = vcmp.ge.f32.partialorder %v2531, %v2629
  %vm2637 = vcmp.ge.f32.partialorder %v2532, %v2630
  %vm2638 = vcmp.ge.f32.partialorder %v2533, %v2631
  %vm2639 = vcmp.ge.f32.partialorder %v2534, %v2632
  %vm2640 = vcmp.ge.f32.partialorder %v2535, %v2633
  %vm2641 = vcmp.ge.f32.partialorder %v2536, %v2634
  %v2642 = vsel %vm2635, 1.0, 0.0
  %v2643 = vsel %vm2636, 1.0, 0.0
  %v2644 = vsel %vm2637, 1.0, 0.0
  %v2645 = vsel %vm2638, 1.0, 0.0
  %v2646 = vsel %vm2639, 1.0, 0.0
  %v2647 = vsel %vm2640, 1.0, 0.0
  %v2648 = vsel %vm2641, 1.0, 0.0
  %v2649 = vadd.f32 %v2600, %v2642
  %v2650 = vadd.f32 %v2601, %v2643
  %v2651 = vadd.f32 %v2602, %v2644
  %v2652 = vadd.f32 %v2603, %v2645
  %v2653 = vadd.f32 %v2604, %v2646
  %v2654 = vadd.f32 %v2605, %v2647
  %v2655 = vadd.f32 %v2606, %v2648
  %2656 = vrot.lane.b32.xlu0 %v2502, 44
  %v2657 = vpop.permute.xlu0 %2656
  %2658 = vrot.lane.b32.xlu0 %v2504, 44
  %v2659 = vpop.permute.xlu0 %2658
  %2660 = vrot.lane.b32.xlu0 %v2506, 44
  %v2661 = vpop.permute.xlu0 %2660
  %2662 = vrot.lane.b32.xlu0 %v2508, 44
  %v2663 = vpop.permute.xlu0 %2662
  %2664 = vrot.lane.b32.xlu0 %v2510, 44
  %v2665 = vpop.permute.xlu0 %2664
  %2666 = vrot.lane.b32.xlu0 %v2512, 44
  %v2667 = vpop.permute.xlu0 %2666
  %2668 = vrot.lane.b32.xlu0 %v2514, 44
  %v2669 = vpop.permute.xlu0 %2668
  %v2677 = vadd.f32 %v2628, %v2657
  %v2678 = vadd.f32 %v2629, %v2659
  %v2679 = vadd.f32 %v2630, %v2661
  %v2680 = vadd.f32 %v2631, %v2663
  %v2681 = vadd.f32 %v2632, %v2665
  %v2682 = vadd.f32 %v2633, %v2667
  %v2683 = vadd.f32 %v2634, %v2669
  %vm2684 = vcmp.ge.f32.partialorder %v2530, %v2677
  %vm2685 = vcmp.ge.f32.partialorder %v2531, %v2678
  %vm2686 = vcmp.ge.f32.partialorder %v2532, %v2679
  %vm2687 = vcmp.ge.f32.partialorder %v2533, %v2680
  %vm2688 = vcmp.ge.f32.partialorder %v2534, %v2681
  %vm2689 = vcmp.ge.f32.partialorder %v2535, %v2682
  %vm2690 = vcmp.ge.f32.partialorder %v2536, %v2683
  %v2691 = vsel %vm2684, 1.0, 0.0
  %v2692 = vsel %vm2685, 1.0, 0.0
  %v2693 = vsel %vm2686, 1.0, 0.0
  %v2694 = vsel %vm2687, 1.0, 0.0
  %v2695 = vsel %vm2688, 1.0, 0.0
  %v2696 = vsel %vm2689, 1.0, 0.0
  %v2697 = vsel %vm2690, 1.0, 0.0
  %v2698 = vadd.f32 %v2649, %v2691
  %v2699 = vadd.f32 %v2650, %v2692
  %v2700 = vadd.f32 %v2651, %v2693
  %v2701 = vadd.f32 %v2652, %v2694
  %v2702 = vadd.f32 %v2653, %v2695
  %v2703 = vadd.f32 %v2654, %v2696
  %v2704 = vadd.f32 %v2655, %v2697
  %v2705 = vrcp.pop 5.0
  %v2706 = vmul.f32 %v2698, %v2705
  %v2707 = vmul.f32 %v2699, %v2705
  %v2708 = vmul.f32 %v2700, %v2705
  %v2709 = vmul.f32 %v2701, %v2705
  %v2710 = vmul.f32 %v2702, %v2705
  %v2711 = vmul.f32 %v2703, %v2705
  %v2712 = vmul.f32 %v2704, %v2705
  %v2713 = vadd.f32 %v2706, 0.1
  %v2714 = vadd.f32 %v2707, 0.1
  %v2715 = vadd.f32 %v2708, 0.1
  %v2716 = vadd.f32 %v2709, 0.1
  %v2717 = vadd.f32 %v2710, 0.1
  %v2718 = vadd.f32 %v2711, 0.1
  %v2719 = vadd.f32 %v2712, 0.1
  %2720 = vst.msk [vmem:[%s16] sm:$0xff] %vm60, %v2713
  %2721 = vst.msk [vmem:[%s16 + $0x8] sm:$0xff] %vm60, %v2714
  %2722 = vst.msk [vmem:[%s16 + $0x10] sm:$0xff] %vm60, %v2715
  %2723 = vst.msk [vmem:[%s16 + $0x18] sm:$0xff] %vm60, %v2716
  %2724 = vst.msk [vmem:[%s16 + $0x20] sm:$0xff] %vm60, %v2717
  %2725 = vst.msk [vmem:[%s16 + $0x28] sm:$0xff] %vm60, %v2718
  %2726 = vst.msk [vmem:[%s16 + $0x30] sm:$0xff] %vm60, %v2719
  // Predicated region
  $region62: #{decoder_forward.1} parent=0 // pred_check
    _
  $region63: #{decoder_forward.1} parent=0 // pred_check_branch
    %2728 = sbr.rel (0) target = $region65
  $region64: #{decoder_forward.1} parent=0 // pred_region
    _
  $region65: #{decoder_forward.1} parent=0 // pred_fallthru
    _
  // Predicated region
  $region66: #{decoder_forward.1} parent=0 // pred_check
    _
  $region67: #{decoder_forward.1} parent=0 // pred_check_branch
    %2730 = sbr.rel (0) target = $region69
  $region68: #{decoder_forward.1} parent=0 // pred_region
    _
  $region69: #{decoder_forward.1} parent=0 // pred_fallthru
    _
  // Predicated region
  $region70: #{decoder_forward.1} parent=0 // pred_check
    _
  $region71: #{decoder_forward.1} parent=0 // pred_check_branch
    %2732 = sbr.rel (0) target = $region73
  $region72: #{decoder_forward.1} parent=0 // pred_region
    _
  $region73: #{decoder_forward.1} parent=0 // pred_fallthru
    _
  // Predicated region
  $region74: #{decoder_forward.1} parent=0 // pred_check
    _
  $region75: #{decoder_forward.1} parent=0 // pred_check_branch
    %2734 = sbr.rel (0) target = $region77
  $region76: #{decoder_forward.1} parent=0 // pred_region
    _
  $region77: #{decoder_forward.1} parent=0 // pred_fallthru
    _

</llo_original>
